<compile_context>
chip_gen: v5e
topology: v5e:2x2
jax: 0.10.0
libtpu: 0.0.40
codegen_flags: <defaults>
</compile_context>

<pallas_src>
import functools

import jax
import jax.numpy as jnp
import numpy as np
from jax.experimental import pallas as pl
from jax.experimental.pallas import tpu as pltpu

LANES = 128
VMEM_LIMIT = 32 * 1024 * 1024


def _round_up(n, m):
    return (n + m - 1) // m * m


# ----------------------------------------------------------------------------
# Pallas kernels
# ----------------------------------------------------------------------------
def _conv_relu_pool_kernel(p_ref, w_ref, b_ref, o_ref, *, nimg, r):
    """im2col-patches @ W + bias, ReLU, fused 2x2 max-pool, for `nimg` images.

    Patch rows are ordered (image, pool_tap, ph, pw): per image, rows
    [g*r:(g+1)*r] hold the conv output for pool-window tap g at every pooled
    position, so pooling is an elementwise max over 4 tile-aligned row blocks.
    Matmul operands are bf16; bias/ReLU/pool epilogue runs in f32.
    """
    y = jnp.dot(p_ref[...], w_ref[...], preferred_element_type=jnp.float32)
    y = jnp.maximum(y + b_ref[...], 0.0)                       # (nimg*4r, C) f32
    for b in range(nimg):
        base = b * 4 * r
        o_ref[b * r:(b + 1) * r, :] = jnp.maximum(
            jnp.maximum(y[base:base + r], y[base + r:base + 2 * r]),
            jnp.maximum(y[base + 2 * r:base + 3 * r], y[base + 3 * r:base + 4 * r]),
        ).astype(o_ref.dtype)


def _head_kernel(p_ref, w3_ref, b3_ref, w1_ref, b1_ref, w2_ref, b2_ref,
                 w4_ref, b4_ref, o_ref, *, s3):
    """conv3 + ReLU + fc1 + ReLU + fc2 + ReLU + fc3 for one batch block.

    p_ref is (s3, bh, K3): spatial-position-major, batch rows inside.  fc1 is
    applied as s3 per-spatial (128, 128) weight blocks summed together, which
    reproduces torch's NCHW reshape(-1, 32) -> Linear(32, 128) without any
    transpose.  conv3's output channels are zero-padded to 128 lanes.
    """
    z = b1_ref[...]                                            # (1, 128) f32
    for s in range(s3):
        y = jnp.dot(p_ref[s], w3_ref[...], preferred_element_type=jnp.float32)
        y = jnp.maximum(y + b3_ref[...], 0.0)                  # conv3 + ReLU
        z = z + jnp.dot(y.astype(jnp.bfloat16), w1_ref[s],
                        preferred_element_type=jnp.float32)    # fc1 partial
    z = jnp.maximum(z, 0.0)                                    # (bh, 128)
    z = jnp.maximum(
        jnp.dot(z.astype(jnp.bfloat16), w2_ref[...],
                preferred_element_type=jnp.float32) + b2_ref[...], 0.0)
    # TODO(synk): Dropout2d is identity in eval mode; training-mode stochastic
    # channel dropout is intentionally not modeled here.
    o_ref[...] = (jnp.dot(z.astype(jnp.bfloat16), w4_ref[...],
                          preferred_element_type=jnp.float32)
                  + b4_ref[...]).astype(o_ref.dtype)


# ----------------------------------------------------------------------------
# im2col glue (plain XLA; each patch tensor materializes exactly once)
# ----------------------------------------------------------------------------
def _im2col_pool_grouped(x, k=5, stride=2, pad=2):
    """Channels-last im2col grouped by pool-window parity.

    Returns (patches, hp, wp) with patches (n, 4, hp*wp, kp): group g=(a,b)
    holds the patches of conv outputs (2*ph+a, 2*pw+b), so the following 2x2
    max-pool is an elementwise max over the 4 groups.  The contraction dim is
    padded to a lane multiple with zero columns inside the same concatenate
    (no separate pad pass, no parity transpose copy).
    """
    n, h, w, c = x.shape
    xp = jnp.pad(x, ((0, 0), (pad, pad), (pad, pad), (0, 0)))
    ho = (h + 2 * pad - k) // stride + 1
    wo = (w + 2 * pad - k) // stride + 1
    hp, wp = ho // 2, wo // 2
    kp = _round_up(k * k * c, LANES)
    groups = []
    for a in range(2):
        for b in range(2):
            taps = [
                xp[:, kh + stride * a: kh + stride * a + 2 * stride * (hp - 1) + 1: 2 * stride,
                    kw + stride * b: kw + stride * b + 2 * stride * (wp - 1) + 1: 2 * stride, :]
                for kh in range(k) for kw in range(k)
            ]
            if kp > k * k * c:
                taps.append(jnp.zeros((n, hp, wp, kp - k * k * c), x.dtype))
            groups.append(jnp.concatenate(taps, axis=-1).reshape(n, 1, hp * wp, kp))
    return jnp.concatenate(groups, axis=1), hp, wp


def _im2col(x, k=5, stride=2, pad=2):
    """Plain channels-last im2col (no pooling); K padded to a lane multiple."""
    n, h, w, c = x.shape
    xp = jnp.pad(x, ((0, 0), (pad, pad), (pad, pad), (0, 0)))
    ho = (h + 2 * pad - k) // stride + 1
    wo = (w + 2 * pad - k) // stride + 1
    kp = _round_up(k * k * c, LANES)
    taps = [xp[:, kh: kh + stride * (ho - 1) + 1: stride,
               kw: kw + stride * (wo - 1) + 1: stride, :]
            for kh in range(k) for kw in range(k)]
    if kp > k * k * c:
        taps.append(jnp.zeros((n, ho, wo, kp - k * k * c), x.dtype))
    return jnp.concatenate(taps, axis=-1)                      # (n, ho, wo, kp)


# ----------------------------------------------------------------------------
# Wrappers
# ----------------------------------------------------------------------------
def _images_per_step(n):
    # 4-8 images/step amortizes per-step overhead and raises the matmul M;
    # keep >=2 grid steps so both v7x TensorCores get work.
    if n >= 16:
        return 8
    if n >= 8:
        return 4
    if n >= 4:
        return 2
    return 1


def conv_relu_pool(patches, w_mat, b_row):
    """Fused conv(+bias,+ReLU)+2x2 maxpool.  patches: (n, 4, r, kp) bf16."""
    n, _, r, kp = patches.shape
    c = w_mat.shape[1]
    nb = _images_per_step(n)
    n_pad = _round_up(n, nb)
    if n_pad != n:
        patches = jnp.pad(patches, ((0, n_pad - n), (0, 0), (0, 0), (0, 0)))
    p2d = patches.reshape(n_pad * 4 * r, kp)                   # free reshape

    out = pl.pallas_call(
        functools.partial(_conv_relu_pool_kernel, nimg=nb, r=r),
        out_shape=jax.ShapeDtypeStruct((n_pad * r, c), jnp.bfloat16),
        grid=(n_pad // nb,),
        in_specs=[
            pl.BlockSpec((nb * 4 * r, kp), lambda i: (i, 0)),
            pl.BlockSpec((kp, c), lambda i: (0, 0)),
            pl.BlockSpec((1, c), lambda i: (0, 0)),
        ],
        out_specs=pl.BlockSpec((nb * r, c), lambda i: (i, 0)),
        compiler_params=pltpu.CompilerParams(
            dimension_semantics=("parallel",),
            vmem_limit_bytes=VMEM_LIMIT),
    )(p2d, w_mat, b_row)
    return out.reshape(n_pad, r, c)[:n]                        # (n, r, C)


def head(p3, q, *, bh, s3):
    """conv3 + the whole FC chain, blocked over the batch."""
    _, nbp, k3 = p3.shape

    def full(a):
        zeros = (0,) * a.ndim
        return pl.BlockSpec(a.shape, lambda i, z=zeros: z)

    return pl.pallas_call(
        functools.partial(_head_kernel, s3=s3),
        out_shape=jax.ShapeDtypeStruct((nbp, LANES), jnp.float32),
        grid=(nbp // bh,),
        in_specs=[
            pl.BlockSpec((s3, bh, k3), lambda i: (0, i, 0)),
            full(q["w3m"]), full(q["b3r"]),
            full(q["fw1m"]), full(q["fb1r"]),
            full(q["fw2m"]), full(q["fb2r"]),
            full(q["fw3m"]), full(q["fb3r"]),
        ],
        out_specs=pl.BlockSpec((bh, LANES), lambda i: (i, 0)),
        compiler_params=pltpu.CompilerParams(
            dimension_semantics=("parallel",),
            vmem_limit_bytes=VMEM_LIMIT),
    )(p3, q["w3m"], q["b3r"], q["fw1m"], q["fb1r"],
      q["fw2m"], q["fb2r"], q["fw3m"], q["fb3r"])


# ----------------------------------------------------------------------------
# Parameters (torch layout) and one-time matmul-ready preparation
# ----------------------------------------------------------------------------
def init_params(key):
    ks = jax.random.split(key, 6)
    p = {}
    p["w1"] = jax.random.normal(ks[0], (16, 3, 5, 5), jnp.float32) / np.sqrt(5 * 5 * 3)
    p["b1"] = jnp.zeros((16,), jnp.float32)
    p["w2"] = jax.random.normal(ks[1], (64, 16, 5, 5), jnp.float32) / np.sqrt(5 * 5 * 16)
    p["b2"] = jnp.zeros((64,), jnp.float32)
    p["w3"] = jax.random.normal(ks[2], (8, 64, 5, 5), jnp.float32) / np.sqrt(5 * 5 * 64)
    p["b3"] = jnp.zeros((8,), jnp.float32)
    p["fw1"] = jax.random.normal(ks[3], (128, 32), jnp.float32) / np.sqrt(32)
    p["fb1"] = jnp.zeros((128,), jnp.float32)
    p["fw2"] = jax.random.normal(ks[4], (256, 128), jnp.float32) / np.sqrt(128)
    p["fb2"] = jnp.zeros((256,), jnp.float32)
    p["fw3"] = jax.random.normal(ks[5], (2, 256), jnp.float32) / np.sqrt(256)
    p["fb3"] = jnp.zeros((2,), jnp.float32)
    return p


def prepare_params(p):
    """Reshape / reorder / pad / cast all weights once (hoisted out of forward)."""

    def conv_w_mat(w, cout_pad=None):
        cout, cin, kh, kw = w.shape
        wm = jnp.transpose(w, (2, 3, 1, 0)).reshape(kh * kw * cin, cout)
        kp = _round_up(wm.shape[0], LANES)
        if kp > wm.shape[0]:
            wm = jnp.pad(wm, ((0, kp - wm.shape[0]), (0, 0)))
        if cout_pad is not None and cout_pad > cout:
            wm = jnp.pad(wm, ((0, 0), (0, cout_pad - cout)))
        return wm.astype(jnp.bfloat16)

    q = {}
    # conv1: K = 25*3 = 75 -> 128; real 16 output channels.
    q["w1m"] = conv_w_mat(p["w1"])                                  # (128, 16)
    q["b1r"] = p["b1"].reshape(1, -1).astype(jnp.float32)
    # conv2: K = 25*16 = 400 -> 512; real 64 output channels.
    q["w2m"] = conv_w_mat(p["w2"])                                  # (512, 64)
    q["b2r"] = p["b2"].reshape(1, -1).astype(jnp.float32)
    # conv3: K = 25*64 = 1600 -> 1664; output channels padded 8 -> 128 lanes.
    q["w3m"] = conv_w_mat(p["w3"], cout_pad=LANES)                  # (1664, 128)
    q["b3r"] = jnp.pad(p["b3"], (0, LANES - p["b3"].shape[0])).reshape(1, -1).astype(jnp.float32)
    # fc1 as 4 per-spatial (128, 128) blocks: row c of block s is torch row
    # c*4+s of fc_1.weight.T (NCHW reshape(-1,32) order); rows >= 8 are zero.
    c3, s3 = 8, 4
    fw1t = p["fw1"].T                                               # (32, 128)
    w1blk = jnp.zeros((s3, LANES, LANES), jnp.float32)
    for s in range(s3):
        w1blk = w1blk.at[s, :c3, :].set(fw1t[jnp.arange(c3) * s3 + s])
    q["fw1m"] = w1blk.astype(jnp.bfloat16)                          # (4, 128, 128)
    q["fb1r"] = p["fb1"].reshape(1, -1).astype(jnp.float32)
    q["fw2m"] = p["fw2"].T.astype(jnp.bfloat16)                     # (128, 256)
    q["fb2r"] = p["fb2"].reshape(1, -1).astype(jnp.float32)
    # fc3 padded to 128 output lanes for an unmasked lane-dense store.
    q["fw3m"] = jnp.pad(p["fw3"].T, ((0, 0), (0, LANES - p["fw3"].shape[0]))).astype(jnp.bfloat16)
    q["fb3r"] = jnp.pad(p["fb3"], (0, LANES - p["fb3"].shape[0])).reshape(1, -1).astype(jnp.float32)
    return q


# ----------------------------------------------------------------------------
# Forward
# ----------------------------------------------------------------------------
@jax.jit
def forward(x, q):
    n = x.shape[0]
    xh = jnp.transpose(x, (0, 2, 3, 1)).astype(jnp.bfloat16)       # NCHW->NHWC, bf16

    p1, hp1, wp1 = _im2col_pool_grouped(xh)                        # (n, 4, 256, 128)
    a1 = conv_relu_pool(p1, q["w1m"], q["b1r"])                    # (n, 256, 16)
    a1 = a1.reshape(n, hp1, wp1, a1.shape[-1])                     # (n, 16, 16, 16)

    p2, hp2, wp2 = _im2col_pool_grouped(a1)                        # (n, 4, 16, 512)
    a2 = conv_relu_pool(p2, q["w2m"], q["b2r"])                    # (n, 16, 64)
    a2 = a2.reshape(n, hp2, wp2, a2.shape[-1])                     # (n, 4, 4, 64)

    p3 = _im2col(a2)                                               # (n, 2, 2, 1664)
    s3 = p3.shape[1] * p3.shape[2]                                 # 4 spatial positions
    nbp = _round_up(n, 16)                                         # bf16-tile-aligned batch
    bh = min(nbp, 256)                                             # batch rows per head step
    nbp = _round_up(nbp, bh)
    p3 = p3.reshape(n, s3, -1).transpose(1, 0, 2)                  # rows (spatial, batch)
    p3 = jnp.pad(p3, ((0, 0), (0, nbp - n), (0, 0)))               # (4, nbp, 1664)

    out = head(p3, q, bh=bh, s3=s3)                                # (nbp, 128) f32
    return out[:n, :2]


# Pure-JAX f32 reference for a correctness sanity check.
def ref_forward(x, p):
    def conv(x, w, b):
        y = jax.lax.conv_general_dilated(
            x, w, (2, 2), ((2, 2), (2, 2)),
            dimension_numbers=("NCHW", "OIHW", "NCHW"))
        return jax.nn.relu(y + b[None, :, None, None])

    def pool(x):
        return jax.lax.reduce_window(x, -jnp.inf, jax.lax.max,
                                     (1, 1, 2, 2), (1, 1, 2, 2), "VALID")

    z = pool(conv(x, p["w1"], p["b1"]))
    z = pool(conv(z, p["w2"], p["b2"]))
    z = conv(z, p["w3"], p["b3"])
    z = z.reshape(-1, 32)
    z = jax.nn.relu(z @ p["fw1"].T + p["fb1"])
    z = jax.nn.relu(z @ p["fw2"].T + p["fb2"])
    return z @ p["fw3"].T + p["fb3"]


if __name__ == "__main__":
    key = jax.random.PRNGKey(0)
    k_x, k_p = jax.random.split(key)
    # H = W = 64 so conv3 output is (N, 8, 2, 2) -> reshape(-1, 32) gives (N, 32).
    x = jax.random.normal(k_x, (2, 3, 64, 64), jnp.float32)
    params = init_params(k_p)
    q = prepare_params(params)

    out = jax.block_until_ready(forward(x, q))
    ref = jax.block_until_ready(ref_forward(x, params))

    assert out.shape == (2, 2), out.shape
    # bf16 matmul operands vs an f32 reference: loose-but-meaningful tolerance.
    np.testing.assert_allclose(np.asarray(out), np.asarray(ref), rtol=5e-2, atol=5e-2)
    print("KERNEL_OK")
</pallas_src>

<mosaic_0001>
module attributes {stable_mosaic.version = 11 : i64} {
  func.func @_conv_relu_pool_kernel(%arg0: i32, %arg1: memref<1024x128xbf16, #tpu.memory_space<vmem>>, %arg2: memref<128x16xbf16, #tpu.memory_space<vmem>>, %arg3: memref<1x16xf32, #tpu.memory_space<vmem>>, %arg4: memref<256x16xbf16, #tpu.memory_space<vmem>>) attributes {dimension_semantics = [#tpu.dimension_semantics<parallel>], iteration_bounds = array<i64: 2>, scalar_prefetch = 0 : i64, scratch_operands = 0 : i64, tpu.core_type = #tpu.core_type<tc>, window_params = [{transform_indices = @transform_0, window_bounds = array<i64: 1024, 128>}, {pipeline_mode = #tpu.pipeline_mode<synchronous>, transform_indices = @transform_1, window_bounds = array<i64: 128, 16>}, {pipeline_mode = #tpu.pipeline_mode<synchronous>, transform_indices = @transform_2, window_bounds = array<i64: 1, 16>}, {transform_indices = @transform_3, window_bounds = array<i64: 256, 16>}]} {
    %c0 = arith.constant 0 : index
    %c0_0 = arith.constant 0 : index
    %0 = vector.load %arg1[%c0, %c0_0] : memref<1024x128xbf16, #tpu.memory_space<vmem>>, vector<1024x128xbf16>
    %c0_1 = arith.constant 0 : index
    %c0_2 = arith.constant 0 : index
    %1 = vector.load %arg2[%c0_1, %c0_2] : memref<128x16xbf16, #tpu.memory_space<vmem>>, vector<128x16xbf16>
    %cst = arith.constant dense<0.000000e+00> : vector<1024x16xf32>
    %2 = tpu.matmul %0, %1, %cst {dimension_numbers = #tpu.dot_dimension_numbers<[1], [0], [0], [1], [0, 0, 1, 1], [], []>} : vector<1024x128xbf16>, vector<128x16xbf16>, vector<1024x16xf32> -> vector<1024x16xf32>
    %c0_3 = arith.constant 0 : index
    %c0_4 = arith.constant 0 : index
    %3 = vector.load %arg3[%c0_3, %c0_4] : memref<1x16xf32, #tpu.memory_space<vmem>>, vector<1x16xf32>
    %4 = vector.broadcast %3 : vector<1x16xf32> to vector<1024x16xf32>
    %5 = arith.addf %2, %4 : vector<1024x16xf32>
    %cst_5 = arith.constant 0.000000e+00 : f32
    %6 = vector.broadcast %cst_5 : f32 to vector<1024x16xf32>
    %7 = arith.maximumf %5, %6 : vector<1024x16xf32>
    %8 = vector.extract_strided_slice %7 {offsets = [0, 0], sizes = [256, 16], strides = [1, 1]} : vector<1024x16xf32> to vector<256x16xf32>
    %9 = vector.extract_strided_slice %7 {offsets = [256, 0], sizes = [256, 16], strides = [1, 1]} : vector<1024x16xf32> to vector<256x16xf32>
    %10 = arith.maximumf %8, %9 : vector<256x16xf32>
    %11 = vector.extract_strided_slice %7 {offsets = [512, 0], sizes = [256, 16], strides = [1, 1]} : vector<1024x16xf32> to vector<256x16xf32>
    %12 = vector.extract_strided_slice %7 {offsets = [768, 0], sizes = [256, 16], strides = [1, 1]} : vector<1024x16xf32> to vector<256x16xf32>
    %13 = arith.maximumf %11, %12 : vector<256x16xf32>
    %14 = arith.maximumf %10, %13 : vector<256x16xf32>
    %15 = arith.truncf %14 : vector<256x16xf32> to vector<256x16xbf16>
    %c0_6 = arith.constant 0 : index
    %c0_7 = arith.constant 0 : index
    %16 = vector.load %arg4[%c0_6, %c0_7] : memref<256x16xbf16, #tpu.memory_space<vmem>>, vector<256x16xbf16>
    tpu.vector_store %arg4[%c0_6, %c0_7], %15 {strides = array<i32>} : memref<256x16xbf16, #tpu.memory_space<vmem>>, vector<256x16xbf16>,
    return
  }
  func.func @transform_0(%arg0: i32) -> (i32, i32) {
    %c0_i32 = arith.constant 0 : i32
    %c0_i32_0 = arith.constant 0 : i32
    return %arg0, %c0_i32 : i32, i32
  }
  func.func @transform_1(%arg0: i32) -> (i32, i32) {
    %c0_i32 = arith.constant 0 : i32
    %c0_i32_0 = arith.constant 0 : i32
    %c0_i32_1 = arith.constant 0 : i32
    return %c0_i32, %c0_i32_0 : i32, i32
  }
  func.func @transform_2(%arg0: i32) -> (i32, i32) {
    %c0_i32 = arith.constant 0 : i32
    %c0_i32_0 = arith.constant 0 : i32
    %c0_i32_1 = arith.constant 0 : i32
    return %c0_i32, %c0_i32_0 : i32, i32
  }
  func.func @transform_3(%arg0: i32) -> (i32, i32) {
    %c0_i32 = arith.constant 0 : i32
    %c0_i32_0 = arith.constant 0 : i32
    return %arg0, %c0_i32 : i32, i32
  }
}

module attributes {stable_mosaic.version = 11 : i64} {
  func.func @_conv_relu_pool_kernel(%arg0: i32, %arg1: memref<64x512xbf16, #tpu.memory_space<vmem>>, %arg2: memref<512x64xbf16, #tpu.memory_space<vmem>>, %arg3: memref<1x64xf32, #tpu.memory_space<vmem>>, %arg4: memref<16x64xbf16, #tpu.memory_space<vmem>>) attributes {dimension_semantics = [#tpu.dimension_semantics<parallel>], iteration_bounds = array<i64: 2>, scalar_prefetch = 0 : i64, scratch_operands = 0 : i64, tpu.core_type = #tpu.core_type<tc>, window_params = [{transform_indices = @transform_0, window_bounds = array<i64: 64, 512>}, {pipeline_mode = #tpu.pipeline_mode<synchronous>, transform_indices = @transform_1, window_bounds = array<i64: 512, 64>}, {pipeline_mode = #tpu.pipeline_mode<synchronous>, transform_indices = @transform_2, window_bounds = array<i64: 1, 64>}, {transform_indices = @transform_3, window_bounds = array<i64: 16, 64>}]} {
    %c0 = arith.constant 0 : index
    %c0_0 = arith.constant 0 : index
    %0 = vector.load %arg1[%c0, %c0_0] : memref<64x512xbf16, #tpu.memory_space<vmem>>, vector<64x512xbf16>
    %c0_1 = arith.constant 0 : index
    %c0_2 = arith.constant 0 : index
    %1 = vector.load %arg2[%c0_1, %c0_2] : memref<512x64xbf16, #tpu.memory_space<vmem>>, vector<512x64xbf16>
    %cst = arith.constant dense<0.000000e+00> : vector<64x64xf32>
    %2 = tpu.matmul %0, %1, %cst {dimension_numbers = #tpu.dot_dimension_numbers<[1], [0], [0], [1], [0, 0, 1, 1], [], []>} : vector<64x512xbf16>, vector<512x64xbf16>, vector<64x64xf32> -> vector<64x64xf32>
    %c0_3 = arith.constant 0 : index
    %c0_4 = arith.constant 0 : index
    %3 = vector.load %arg3[%c0_3, %c0_4] : memref<1x64xf32, #tpu.memory_space<vmem>>, vector<1x64xf32>
    %4 = vector.broadcast %3 : vector<1x64xf32> to vector<64x64xf32>
    %5 = arith.addf %2, %4 : vector<64x64xf32>
    %cst_5 = arith.constant 0.000000e+00 : f32
    %6 = vector.broadcast %cst_5 : f32 to vector<64x64xf32>
    %7 = arith.maximumf %5, %6 : vector<64x64xf32>
    %8 = vector.extract_strided_slice %7 {offsets = [0, 0], sizes = [16, 64], strides = [1, 1]} : vector<64x64xf32> to vector<16x64xf32>
    %9 = vector.extract_strided_slice %7 {offsets = [16, 0], sizes = [16, 64], strides = [1, 1]} : vector<64x64xf32> to vector<16x64xf32>
    %10 = arith.maximumf %8, %9 : vector<16x64xf32>
    %11 = vector.extract_strided_slice %7 {offsets = [32, 0], sizes = [16, 64], strides = [1, 1]} : vector<64x64xf32> to vector<16x64xf32>
    %12 = vector.extract_strided_slice %7 {offsets = [48, 0], sizes = [16, 64], strides = [1, 1]} : vector<64x64xf32> to vector<16x64xf32>
    %13 = arith.maximumf %11, %12 : vector<16x64xf32>
    %14 = arith.maximumf %10, %13 : vector<16x64xf32>
    %15 = arith.truncf %14 : vector<16x64xf32> to vector<16x64xbf16>
    %c0_6 = arith.constant 0 : index
    %c0_7 = arith.constant 0 : index
    %16 = vector.load %arg4[%c0_6, %c0_7] : memref<16x64xbf16, #tpu.memory_space<vmem>>, vector<16x64xbf16>
    tpu.vector_store %arg4[%c0_6, %c0_7], %15 {strides = array<i32>} : memref<16x64xbf16, #tpu.memory_space<vmem>>, vector<16x64xbf16>,
    return
  }
  func.func @transform_0(%arg0: i32) -> (i32, i32) {
    %c0_i32 = arith.constant 0 : i32
    %c0_i32_0 = arith.constant 0 : i32
    return %arg0, %c0_i32 : i32, i32
  }
  func.func @transform_1(%arg0: i32) -> (i32, i32) {
    %c0_i32 = arith.constant 0 : i32
    %c0_i32_0 = arith.constant 0 : i32
    %c0_i32_1 = arith.constant 0 : i32
    return %c0_i32, %c0_i32_0 : i32, i32
  }
  func.func @transform_2(%arg0: i32) -> (i32, i32) {
    %c0_i32 = arith.constant 0 : i32
    %c0_i32_0 = arith.constant 0 : i32
    %c0_i32_1 = arith.constant 0 : i32
    return %c0_i32, %c0_i32_0 : i32, i32
  }
  func.func @transform_3(%arg0: i32) -> (i32, i32) {
    %c0_i32 = arith.constant 0 : i32
    %c0_i32_0 = arith.constant 0 : i32
    return %arg0, %c0_i32 : i32, i32
  }
}

module attributes {stable_mosaic.version = 11 : i64} {
  func.func @_head_kernel(%arg0: i32, %arg1: memref<4x16x1664xbf16, #tpu.memory_space<vmem>>, %arg2: memref<1664x128xbf16, #tpu.memory_space<vmem>>, %arg3: memref<1x128xf32, #tpu.memory_space<vmem>>, %arg4: memref<4x128x128xbf16, #tpu.memory_space<vmem>>, %arg5: memref<1x128xf32, #tpu.memory_space<vmem>>, %arg6: memref<128x256xbf16, #tpu.memory_space<vmem>>, %arg7: memref<1x256xf32, #tpu.memory_space<vmem>>, %arg8: memref<256x128xbf16, #tpu.memory_space<vmem>>, %arg9: memref<1x128xf32, #tpu.memory_space<vmem>>, %arg10: memref<16x128xf32, #tpu.memory_space<vmem>>) attributes {dimension_semantics = [#tpu.dimension_semantics<parallel>], iteration_bounds = array<i64: 1>, scalar_prefetch = 0 : i64, scratch_operands = 0 : i64, tpu.core_type = #tpu.core_type<tc>, window_params = [{transform_indices = @transform_0, window_bounds = array<i64: 4, 16, 1664>}, {pipeline_mode = #tpu.pipeline_mode<synchronous>, transform_indices = @transform_1, window_bounds = array<i64: 1664, 128>}, {pipeline_mode = #tpu.pipeline_mode<synchronous>, transform_indices = @transform_2, window_bounds = array<i64: 1, 128>}, {pipeline_mode = #tpu.pipeline_mode<synchronous>, transform_indices = @transform_3, window_bounds = array<i64: 4, 128, 128>}, {pipeline_mode = #tpu.pipeline_mode<synchronous>, transform_indices = @transform_4, window_bounds = array<i64: 1, 128>}, {pipeline_mode = #tpu.pipeline_mode<synchronous>, transform_indices = @transform_5, window_bounds = array<i64: 128, 256>}, {pipeline_mode = #tpu.pipeline_mode<synchronous>, transform_indices = @transform_6, window_bounds = array<i64: 1, 256>}, {pipeline_mode = #tpu.pipeline_mode<synchronous>, transform_indices = @transform_7, window_bounds = array<i64: 256, 128>}, {pipeline_mode = #tpu.pipeline_mode<synchronous>, transform_indices = @transform_8, window_bounds = array<i64: 1, 128>}, {transform_indices = @transform_9, window_bounds = array<i64: 16, 128>}]} {
    %c0 = arith.constant 0 : index
    %c0_0 = arith.constant 0 : index
    %0 = vector.load %arg5[%c0, %c0_0] : memref<1x128xf32, #tpu.memory_space<vmem>>, vector<1x128xf32>
    %c0_1 = arith.constant 0 : index
    %c0_2 = arith.constant 0 : index
    %c0_3 = arith.constant 0 : index
    %1 = vector.load %arg1[%c0_1, %c0_2, %c0_3] : memref<4x16x1664xbf16, #tpu.memory_space<vmem>>, vector<1x16x1664xbf16>
    %2 = vector.shape_cast %1 : vector<1x16x1664xbf16> to vector<16x1664xbf16>
    %c0_4 = arith.constant 0 : index
    %c0_5 = arith.constant 0 : index
    %3 = vector.load %arg2[%c0_4, %c0_5] : memref<1664x128xbf16, #tpu.memory_space<vmem>>, vector<1664x128xbf16>
    %cst = arith.constant dense<0.000000e+00> : vector<16x128xf32>
    %4 = tpu.matmul %2, %3, %cst {dimension_numbers = #tpu.dot_dimension_numbers<[1], [0], [0], [1], [0, 0, 1, 1], [], []>} : vector<16x1664xbf16>, vector<1664x128xbf16>, vector<16x128xf32> -> vector<16x128xf32>
    %c0_6 = arith.constant 0 : index
    %c0_7 = arith.constant 0 : index
    %5 = vector.load %arg3[%c0_6, %c0_7] : memref<1x128xf32, #tpu.memory_space<vmem>>, vector<1x128xf32>
    %6 = vector.broadcast %5 : vector<1x128xf32> to vector<16x128xf32>
    %7 = arith.addf %4, %6 : vector<16x128xf32>
    %cst_8 = arith.constant 0.000000e+00 : f32
    %8 = vector.broadcast %cst_8 : f32 to vector<16x128xf32>
    %9 = arith.maximumf %7, %8 : vector<16x128xf32>
    %10 = arith.truncf %9 : vector<16x128xf32> to vector<16x128xbf16>
    %c0_9 = arith.constant 0 : index
    %c0_10 = arith.constant 0 : index
    %c0_11 = arith.constant 0 : index
    %11 = vector.load %arg4[%c0_9, %c0_10, %c0_11] : memref<4x128x128xbf16, #tpu.memory_space<vmem>>, vector<1x128x128xbf16>
    %12 = vector.shape_cast %11 : vector<1x128x128xbf16> to vector<128x128xbf16>
    %cst_12 = arith.constant dense<0.000000e+00> : vector<16x128xf32>
    %13 = tpu.matmul %10, %12, %cst_12 {dimension_numbers = #tpu.dot_dimension_numbers<[1], [0], [0], [1], [0, 0, 1, 1], [], []>} : vector<16x128xbf16>, vector<128x128xbf16>, vector<16x128xf32> -> vector<16x128xf32>
    %14 = vector.broadcast %0 : vector<1x128xf32> to vector<16x128xf32>
    %15 = arith.addf %14, %13 : vector<16x128xf32>
    %c1 = arith.constant 1 : index
    %c0_13 = arith.constant 0 : index
    %c0_14 = arith.constant 0 : index
    %16 = vector.load %arg1[%c1, %c0_13, %c0_14] : memref<4x16x1664xbf16, #tpu.memory_space<vmem>>, vector<1x16x1664xbf16>
    %17 = vector.shape_cast %16 : vector<1x16x1664xbf16> to vector<16x1664xbf16>
    %c0_15 = arith.constant 0 : index
    %c0_16 = arith.constant 0 : index
    %18 = vector.load %arg2[%c0_15, %c0_16] : memref<1664x128xbf16, #tpu.memory_space<vmem>>, vector<1664x128xbf16>
    %cst_17 = arith.constant dense<0.000000e+00> : vector<16x128xf32>
    %19 = tpu.matmul %17, %18, %cst_17 {dimension_numbers = #tpu.dot_dimension_numbers<[1], [0], [0], [1], [0, 0, 1, 1], [], []>} : vector<16x1664xbf16>, vector<1664x128xbf16>, vector<16x128xf32> -> vector<16x128xf32>
    %c0_18 = arith.constant 0 : index
    %c0_19 = arith.constant 0 : index
    %20 = vector.load %arg3[%c0_18, %c0_19] : memref<1x128xf32, #tpu.memory_space<vmem>>, vector<1x128xf32>
    %21 = vector.broadcast %20 : vector<1x128xf32> to vector<16x128xf32>
    %22 = arith.addf %19, %21 : vector<16x128xf32>
    %cst_20 = arith.constant 0.000000e+00 : f32
    %23 = vector.broadcast %cst_20 : f32 to vector<16x128xf32>
    %24 = arith.maximumf %22, %23 : vector<16x128xf32>
    %25 = arith.truncf %24 : vector<16x128xf32> to vector<16x128xbf16>
    %c1_21 = arith.constant 1 : index
    %c0_22 = arith.constant 0 : index
    %c0_23 = arith.constant 0 : index
    %26 = vector.load %arg4[%c1_21, %c0_22, %c0_23] : memref<4x128x128xbf16, #tpu.memory_space<vmem>>, vector<1x128x128xbf16>
    %27 = vector.shape_cast %26 : vector<1x128x128xbf16> to vector<128x128xbf16>
    %cst_24 = arith.constant dense<0.000000e+00> : vector<16x128xf32>
    %28 = tpu.matmul %25, %27, %cst_24 {dimension_numbers = #tpu.dot_dimension_numbers<[1], [0], [0], [1], [0, 0, 1, 1], [], []>} : vector<16x128xbf16>, vector<128x128xbf16>, vector<16x128xf32> -> vector<16x128xf32>
    %29 = arith.addf %15, %28 : vector<16x128xf32>
    %c2 = arith.constant 2 : index
    %c0_25 = arith.constant 0 : index
    %c0_26 = arith.constant 0 : index
    %30 = vector.load %arg1[%c2, %c0_25, %c0_26] : memref<4x16x1664xbf16, #tpu.memory_space<vmem>>, vector<1x16x1664xbf16>
    %31 = vector.shape_cast %30 : vector<1x16x1664xbf16> to vector<16x1664xbf16>
    %c0_27 = arith.constant 0 : index
    %c0_28 = arith.constant 0 : index
    %32 = vector.load %arg2[%c0_27, %c0_28] : memref<1664x128xbf16, #tpu.memory_space<vmem>>, vector<1664x128xbf16>
    %cst_29 = arith.constant dense<0.000000e+00> : vector<16x128xf32>
    %33 = tpu.matmul %31, %32, %cst_29 {dimension_numbers = #tpu.dot_dimension_numbers<[1], [0], [0], [1], [0, 0, 1, 1], [], []>} : vector<16x1664xbf16>, vector<1664x128xbf16>, vector<16x128xf32> -> vector<16x128xf32>
    %c0_30 = arith.constant 0 : index
    %c0_31 = arith.constant 0 : index
    %34 = vector.load %arg3[%c0_30, %c0_31] : memref<1x128xf32, #tpu.memory_space<vmem>>, vector<1x128xf32>
    %35 = vector.broadcast %34 : vector<1x128xf32> to vector<16x128xf32>
    %36 = arith.addf %33, %35 : vector<16x128xf32>
    %cst_32 = arith.constant 0.000000e+00 : f32
    %37 = vector.broadcast %cst_32 : f32 to vector<16x128xf32>
    %38 = arith.maximumf %36, %37 : vector<16x128xf32>
    %39 = arith.truncf %38 : vector<16x128xf32> to vector<16x128xbf16>
    %c2_33 = arith.constant 2 : index
    %c0_34 = arith.constant 0 : index
    %c0_35 = arith.constant 0 : index
    %40 = vector.load %arg4[%c2_33, %c0_34, %c0_35] : memref<4x128x128xbf16, #tpu.memory_space<vmem>>, vector<1x128x128xbf16>
    %41 = vector.shape_cast %40 : vector<1x128x128xbf16> to vector<128x128xbf16>
    %cst_36 = arith.constant dense<0.000000e+00> : vector<16x128xf32>
    %42 = tpu.matmul %39, %41, %cst_36 {dimension_numbers = #tpu.dot_dimension_numbers<[1], [0], [0], [1], [0, 0, 1, 1], [], []>} : vector<16x128xbf16>, vector<128x128xbf16>, vector<16x128xf32> -> vector<16x128xf32>
    %43 = arith.addf %29, %42 : vector<16x128xf32>
    %c3 = arith.constant 3 : index
    %c0_37 = arith.constant 0 : index
    %c0_38 = arith.constant 0 : index
    %44 = vector.load %arg1[%c3, %c0_37, %c0_38] : memref<4x16x1664xbf16, #tpu.memory_space<vmem>>, vector<1x16x1664xbf16>
    %45 = vector.shape_cast %44 : vector<1x16x1664xbf16> to vector<16x1664xbf16>
    %c0_39 = arith.constant 0 : index
    %c0_40 = arith.constant 0 : index
    %46 = vector.load %arg2[%c0_39, %c0_40] : memref<1664x128xbf16, #tpu.memory_space<vmem>>, vector<1664x128xbf16>
    %cst_41 = arith.constant dense<0.000000e+00> : vector<16x128xf32>
    %47 = tpu.matmul %45, %46, %cst_41 {dimension_numbers = #tpu.dot_dimension_numbers<[1], [0], [0], [1], [0, 0, 1, 1], [], []>} : vector<16x1664xbf16>, vector<1664x128xbf16>, vector<16x128xf32> -> vector<16x128xf32>
    %c0_42 = arith.constant 0 : index
    %c0_43 = arith.constant 0 : index
    %48 = vector.load %arg3[%c0_42, %c0_43] : memref<1x128xf32, #tpu.memory_space<vmem>>, vector<1x128xf32>
    %49 = vector.broadcast %48 : vector<1x128xf32> to vector<16x128xf32>
    %50 = arith.addf %47, %49 : vector<16x128xf32>
    %cst_44 = arith.constant 0.000000e+00 : f32
    %51 = vector.broadcast %cst_44 : f32 to vector<16x128xf32>
    %52 = arith.maximumf %50, %51 : vector<16x128xf32>
    %53 = arith.truncf %52 : vector<16x128xf32> to vector<16x128xbf16>
    %c3_45 = arith.constant 3 : index
    %c0_46 = arith.constant 0 : index
    %c0_47 = arith.constant 0 : index
    %54 = vector.load %arg4[%c3_45, %c0_46, %c0_47] : memref<4x128x128xbf16, #tpu.memory_space<vmem>>, vector<1x128x128xbf16>
    %55 = vector.shape_cast %54 : vector<1x128x128xbf16> to vector<128x128xbf16>
    %cst_48 = arith.constant dense<0.000000e+00> : vector<16x128xf32>
    %56 = tpu.matmul %53, %55, %cst_48 {dimension_numbers = #tpu.dot_dimension_numbers<[1], [0], [0], [1], [0, 0, 1, 1], [], []>} : vector<16x128xbf16>, vector<128x128xbf16>, vector<16x128xf32> -> vector<16x128xf32>
    %57 = arith.addf %43, %56 : vector<16x128xf32>
    %cst_49 = arith.constant 0.000000e+00 : f32
    %58 = vector.broadcast %cst_49 : f32 to vector<16x128xf32>
    %59 = arith.maximumf %57, %58 : vector<16x128xf32>
    %60 = arith.truncf %59 : vector<16x128xf32> to vector<16x128xbf16>
    %c0_50 = arith.constant 0 : index
    %c0_51 = arith.constant 0 : index
    %61 = vector.load %arg6[%c0_50, %c0_51] : memref<128x256xbf16, #tpu.memory_space<vmem>>, vector<128x256xbf16>
    %cst_52 = arith.constant dense<0.000000e+00> : vector<16x256xf32>
    %62 = tpu.matmul %60, %61, %cst_52 {dimension_numbers = #tpu.dot_dimension_numbers<[1], [0], [0], [1], [0, 0, 1, 1], [], []>} : vector<16x128xbf16>, vector<128x256xbf16>, vector<16x256xf32> -> vector<16x256xf32>
    %c0_53 = arith.constant 0 : index
    %c0_54 = arith.constant 0 : index
    %63 = vector.load %arg7[%c0_53, %c0_54] : memref<1x256xf32, #tpu.memory_space<vmem>>, vector<1x256xf32>
    %64 = vector.broadcast %63 : vector<1x256xf32> to vector<16x256xf32>
    %65 = arith.addf %62, %64 : vector<16x256xf32>
    %cst_55 = arith.constant 0.000000e+00 : f32
    %66 = vector.broadcast %cst_55 : f32 to vector<16x256xf32>
    %67 = arith.maximumf %65, %66 : vector<16x256xf32>
    %68 = arith.truncf %67 : vector<16x256xf32> to vector<16x256xbf16>
    %c0_56 = arith.constant 0 : index
    %c0_57 = arith.constant 0 : index
    %69 = vector.load %arg8[%c0_56, %c0_57] : memref<256x128xbf16, #tpu.memory_space<vmem>>, vector<256x128xbf16>
    %cst_58 = arith.constant dense<0.000000e+00> : vector<16x128xf32>
    %70 = tpu.matmul %68, %69, %cst_58 {dimension_numbers = #tpu.dot_dimension_numbers<[1], [0], [0], [1], [0, 0, 1, 1], [], []>} : vector<16x256xbf16>, vector<256x128xbf16>, vector<16x128xf32> -> vector<16x128xf32>
    %c0_59 = arith.constant 0 : index
    %c0_60 = arith.constant 0 : index
    %71 = vector.load %arg9[%c0_59, %c0_60] : memref<1x128xf32, #tpu.memory_space<vmem>>, vector<1x128xf32>
    %72 = vector.broadcast %71 : vector<1x128xf32> to vector<16x128xf32>
    %73 = arith.addf %70, %72 : vector<16x128xf32>
    %c0_61 = arith.constant 0 : index
    %c0_62 = arith.constant 0 : index
    %74 = vector.load %arg10[%c0_61, %c0_62] : memref<16x128xf32, #tpu.memory_space<vmem>>, vector<16x128xf32>
    tpu.vector_store %arg10[%c0_61, %c0_62], %73 {strides = array<i32>} : memref<16x128xf32, #tpu.memory_space<vmem>>, vector<16x128xf32>,
    return
  }
  func.func @transform_0(%arg0: i32) -> (i32, i32, i32) {
    %c0_i32 = arith.constant 0 : i32
    %c0_i32_0 = arith.constant 0 : i32
    %c0_i32_1 = arith.constant 0 : i32
    return %c0_i32, %arg0, %c0_i32_0 : i32, i32, i32
  }
  func.func @transform_1(%arg0: i32) -> (i32, i32) {
    %c0_i32 = arith.constant 0 : i32
    %c0_i32_0 = arith.constant 0 : i32
    %c0_i32_1 = arith.constant 0 : i32
    return %c0_i32, %c0_i32_0 : i32, i32
  }
  func.func @transform_2(%arg0: i32) -> (i32, i32) {
    %c0_i32 = arith.constant 0 : i32
    %c0_i32_0 = arith.constant 0 : i32
    %c0_i32_1 = arith.constant 0 : i32
    return %c0_i32, %c0_i32_0 : i32, i32
  }
  func.func @transform_3(%arg0: i32) -> (i32, i32, i32) {
    %c0_i32 = arith.constant 0 : i32
    %c0_i32_0 = arith.constant 0 : i32
    %c0_i32_1 = arith.constant 0 : i32
    %c0_i32_2 = arith.constant 0 : i32
    return %c0_i32, %c0_i32_0, %c0_i32_1 : i32, i32, i32
  }
  func.func @transform_4(%arg0: i32) -> (i32, i32) {
    %c0_i32 = arith.constant 0 : i32
    %c0_i32_0 = arith.constant 0 : i32
    %c0_i32_1 = arith.constant 0 : i32
    return %c0_i32, %c0_i32_0 : i32, i32
  }
  func.func @transform_5(%arg0: i32) -> (i32, i32) {
    %c0_i32 = arith.constant 0 : i32
    %c0_i32_0 = arith.constant 0 : i32
    %c0_i32_1 = arith.constant 0 : i32
    return %c0_i32, %c0_i32_0 : i32, i32
  }
  func.func @transform_6(%arg0: i32) -> (i32, i32) {
    %c0_i32 = arith.constant 0 : i32
    %c0_i32_0 = arith.constant 0 : i32
    %c0_i32_1 = arith.constant 0 : i32
    return %c0_i32, %c0_i32_0 : i32, i32
  }
  func.func @transform_7(%arg0: i32) -> (i32, i32) {
    %c0_i32 = arith.constant 0 : i32
    %c0_i32_0 = arith.constant 0 : i32
    %c0_i32_1 = arith.constant 0 : i32
    return %c0_i32, %c0_i32_0 : i32, i32
  }
  func.func @transform_8(%arg0: i32) -> (i32, i32) {
    %c0_i32 = arith.constant 0 : i32
    %c0_i32_0 = arith.constant 0 : i32
    %c0_i32_1 = arith.constant 0 : i32
    return %c0_i32, %c0_i32_0 : i32, i32
  }
  func.func @transform_9(%arg0: i32) -> (i32, i32) {
    %c0_i32 = arith.constant 0 : i32
    %c0_i32_0 = arith.constant 0 : i32
    return %arg0, %c0_i32 : i32, i32
  }
}

</mosaic_0001>

<llo_original>
// kernel: forward.3
$region0: #{forward.3}
  #allocation0 [shape = 'u32[]', space=smem, size = 0x4, offset = 0x4, fixed_abs, tag = 'smem constant byte address 0x4 - core index']
  #allocation1 [shape = 'u32[72,128]{1,0:T(1,128)}', space=vmem, size = 0x9000, scoped, tag = 'internal scratch']
  %s0 = inlined_call_operand.vmem [shape: bf16[2048,128], index: 0, kind: input, shape index: {}]
  %s1 = inlined_call_operand.vmem [shape: bf16[128,16], index: 1, kind: input, shape index: {}]
  %s2 = inlined_call_operand.vmem [shape: f32[1,16], index: 2, kind: input, shape index: {}]
  %s3 = inlined_call_operand.vmem [shape: bf16[512,16], index: 3, kind: output, shape index: {}]
  %s4 = sld [smem:[#allocation0]]
  $region45: #{forward.3} parent=0
    _
  %s6 = ssub.s32 1, %s4
  %s7 = scalar_select 0, %s6, %s4
  loop: start=0, step=1, limit=4
  $region2: #{forward.3} parent=0 // loop_pre_header
    _
  $region3: #{forward.3} parent=0 // loop_header
    %s9 = sphi 0, %s13
    %p10 = scmp.ge.s32.totalorder %s9, 4
    %s19 = sphi 0, %s21
    %s22 = sphi 0, %s19
    %s23 = sphi 0, %s22
    %s39 = sphi 0, %s23
    %s43 = sphi 0, %s43
    %s45 = sphi 0, %s43
    %s46 = sphi 0, %s45
    %s60 = sphi 0, %s46
    %s64 = sphi 0, %s64
    %s66 = sphi 0, %s64
    %s67 = sphi 0, %s66
    %s81 = sphi 0, %s67
    %s87 = sphi 0, %s89
    %s90 = sphi 0, %s87
    %s91 = sphi 0, %s90
    %s107 = sphi 0, %s91
  $region4: #{forward.3} parent=0 // loop_header_branch
    %12 = sbr.rel (%p10) target = $region8
  $region5: #{forward.3} parent=0 // loop_body
    %s14 = ssub.s32 %s9, 1
    %s15 = ssub.s32 %s9, 2
    %s16 = sadd.s32 %s9, 1
    %s17 = ssub.s32 %s9, %s16
    %p18 = scmp.eq.s32.totalorder %s17, 0
    %s20 = sadd.s32 %s19, 1
    %s21 = scalar_select %p18, %s19, %s20
    %p24 = pneg %p18
    %p25 = scmp.eq.s32.totalorder %s9, 1
    %p26 = por %p24, %p25
    %p27 = scmp.ne.s32.totalorder %s19, %s22
    %p28 = scmp.eq.s32.totalorder %s9, 0
    %p29 = por %p27, %p28
    %p30 = scmp.ne.s32.totalorder %s19, %s22
    %p31 = scmp.eq.s32.totalorder %s14, 1
    %p32 = por %p30, %p31
    %p33 = scmp.ne.s32.totalorder %s22, %s23
    %p34 = scmp.eq.s32.totalorder %s14, 0
    %p35 = por %p33, %p34
    %p36 = scmp.ne.s32.totalorder %s22, %s23
    %p37 = scmp.eq.s32.totalorder %s15, 1
    %p38 = por %p36, %p37
    %p40 = scmp.ne.s32.totalorder %s23, %s39
    %p41 = scmp.eq.s32.totalorder %s15, 0
    %p42 = por %p40, %p41
    %s44 = sadd.s32 %s43, 1
    %p47 = scmp.eq.s32.totalorder %s9, 1
    %p48 = scmp.ne.s32.totalorder %s43, %s45
    %p49 = scmp.eq.s32.totalorder %s9, 0
    %p50 = por %p48, %p49
    %p51 = scmp.ne.s32.totalorder %s43, %s45
    %p52 = scmp.eq.s32.totalorder %s14, 1
    %p53 = por %p51, %p52
    %p54 = scmp.ne.s32.totalorder %s45, %s46
    %p55 = scmp.eq.s32.totalorder %s14, 0
    %p56 = por %p54, %p55
    %p57 = scmp.ne.s32.totalorder %s45, %s46
    %p58 = scmp.eq.s32.totalorder %s15, 1
    %p59 = por %p57, %p58
    %p61 = scmp.ne.s32.totalorder %s46, %s60
    %p62 = scmp.eq.s32.totalorder %s15, 0
    %p63 = por %p61, %p62
    %s65 = sadd.s32 %s64, 1
    %p68 = scmp.eq.s32.totalorder %s9, 1
    %p69 = scmp.ne.s32.totalorder %s64, %s66
    %p70 = scmp.eq.s32.totalorder %s9, 0
    %p71 = por %p69, %p70
    %p72 = scmp.ne.s32.totalorder %s64, %s66
    %p73 = scmp.eq.s32.totalorder %s14, 1
    %p74 = por %p72, %p73
    %p75 = scmp.ne.s32.totalorder %s66, %s67
    %p76 = scmp.eq.s32.totalorder %s14, 0
    %p77 = por %p75, %p76
    %p78 = scmp.ne.s32.totalorder %s66, %s67
    %p79 = scmp.eq.s32.totalorder %s15, 1
    %p80 = por %p78, %p79
    %p82 = scmp.ne.s32.totalorder %s67, %s81
    %p83 = scmp.eq.s32.totalorder %s15, 0
    %p84 = por %p82, %p83
    %s85 = ssub.s32 %s9, %s16
    %p86 = scmp.eq.s32.totalorder %s85, 0
    %s88 = sadd.s32 %s87, 1
    %s89 = scalar_select %p86, %s87, %s88
    %p92 = pneg %p86
    %p93 = scmp.eq.s32.totalorder %s9, 1
    %p94 = por %p92, %p93
    %p95 = scmp.ne.s32.totalorder %s87, %s90
    %p96 = scmp.eq.s32.totalorder %s9, 0
    %p97 = por %p95, %p96
    %p98 = scmp.ne.s32.totalorder %s87, %s90
    %p99 = scmp.eq.s32.totalorder %s14, 1
    %p100 = por %p98, %p99
    %p101 = scmp.ne.s32.totalorder %s90, %s91
    %p102 = scmp.eq.s32.totalorder %s14, 0
    %p103 = por %p101, %p102
    %p104 = scmp.ne.s32.totalorder %s90, %s91
    %p105 = scmp.eq.s32.totalorder %s15, 1
    %p106 = por %p104, %p105
    %p108 = scmp.ne.s32.totalorder %s91, %s107
    %p109 = scmp.eq.s32.totalorder %s15, 0
    %p110 = por %p108, %p109
    %p111 = scmp.le.s32.totalorder 1, %s9
    %p112 = scmp.lt.s32.totalorder %s9, 3
    %p113 = pnand %p111, %p112
    %p114 = pneg %p113
    // Predicated region
    $region9: #{forward.3} parent=5 // pred_check
      _
    $region10: #{forward.3} parent=5 // pred_check_branch
      %116 = sbr.rel (%p113) target = $region12
    $region11: #{forward.3} parent=5 // pred_region
      %s117 = ssub.s32 %s9, 1
      // Predicated region
      $region13: #{forward.3} parent=11 // pred_check
        %p118 = pneg %p56
      $region14: #{forward.3} parent=11 // pred_check_branch
        %120 = sbr.rel (%p118) target = $region16
      $region15: #{forward.3} parent=11 // pred_region
        _
      $region16: #{forward.3} parent=11 // pred_fallthru
        _
      // Predicated region
      $region17: #{forward.3} parent=11 // pred_check
        %p121 = pneg %p77
      $region18: #{forward.3} parent=11 // pred_check_branch
        %123 = sbr.rel (%p121) target = $region20
      $region19: #{forward.3} parent=11 // pred_region
        _
      $region20: #{forward.3} parent=11 // pred_fallthru
        _
    $region12: #{forward.3} parent=5 // pred_fallthru
      _
    %p124 = scmp.lt.s32.totalorder %s9, 2
    // Predicated region
    $region21: #{forward.3} parent=5 // pred_check
      %p125 = pneg %p124
    $region22: #{forward.3} parent=5 // pred_check_branch
      %127 = sbr.rel (%p125) target = $region24
    $region23: #{forward.3} parent=5 // pred_region
      // Predicated region
      $region25: #{forward.3} parent=23 // pred_check
        %p128 = pneg %p29
      $region26: #{forward.3} parent=23 // pred_check_branch
        %130 = sbr.rel (%p128) target = $region28
      $region27: #{forward.3} parent=23 // pred_region
        %s131 = smul.u32 128, %s9
        %p132 = scmp.lt.s32.totalorder %s131, 255
        %s133 = scalar_select %p132, %s131, 255
        %s134 = smul.addr %s133, 4
        %s135 = scalar_lea.vmem %s0, %s134
        %s136 = smul.u32 128, %s9
      $region28: #{forward.3} parent=23 // pred_fallthru
        _
    $region24: #{forward.3} parent=5 // pred_fallthru
      _
    %p137 = scmp.le.s32.totalorder 1, %s9
    %p138 = scmp.lt.s32.totalorder %s9, 3
    %p139 = pnand %p137, %p138
    %p140 = pneg %p139
    // Predicated region
    $region29: #{forward.3} parent=5 // pred_check
      _
    $region30: #{forward.3} parent=5 // pred_check_branch
      %142 = sbr.rel (%p139) target = $region32
    $region31: #{forward.3} parent=5 // pred_region
      %s143 = ssub.s32 %s9, 1
      %s144 = smul.u32 128, %s14
      %p145 = scmp.lt.s32.totalorder %s144, 255
      %s146 = scalar_select %p145, %s144, 255
      %s147 = smul.addr %s146, 4
      %s148 = scalar_lea.vmem %s0, %s147
      %p149 = pneg %p35
      %p150 = pneg %p32
      %p151 = pneg %p56
      %p152 = pneg %p53
      %p153 = pneg %p77
      %p154 = pneg %p74
      %p155 = pneg %p103
      %p156 = pneg %p100
      %s157 = smul.u32 32, %s14
      %p158 = scmp.lt.s32.totalorder %s157, 63
      %s159 = scalar_select %p158, %s157, 63
      %s160 = smul.addr %s159, 4
      %s161 = scalar_lea.vmem %s3, %s160
      %s162 = smul.u32 128, %s14
      %p163 = scmp.lt.s32.totalorder %s162, 255
      %s164 = scalar_select %p163, %s162, 255
      %s165 = smul.addr %s164, 4
      %s166 = scalar_lea.vmem %s0, %s165
      %s167 = smul.u32 128, %s14
      %s168 = smul.u32 32, %s14
      %p169 = scmp.lt.s32.totalorder %s168, 63
      %s170 = scalar_select %p169, %s168, 63
      %s171 = smul.addr %s170, 4
      %s172 = scalar_lea.vmem %s3, %s171
      %s173 = smul.u32 32, %s14
      %v174 = vld [vmem:[%s166] sm:$0xf]
      %v175 = vld [vmem:[%s166 + $0x4] sm:$0xf]
      %v176 = vld [vmem:[%s166 + $0x8] sm:$0xf]
      %v177 = vld [vmem:[%s166 + $0xc] sm:$0xf]
      %v178 = vld [vmem:[%s166 + $0x10] sm:$0xf]
      %v179 = vld [vmem:[%s166 + $0x14] sm:$0xf]
      %v180 = vld [vmem:[%s166 + $0x18] sm:$0xf]
      %v181 = vld [vmem:[%s166 + $0x1c] sm:$0xf]
      %v182 = vld [vmem:[%s166 + $0x20] sm:$0xf]
      %v183 = vld [vmem:[%s166 + $0x24] sm:$0xf]
      %v184 = vld [vmem:[%s166 + $0x28] sm:$0xf]
      %v185 = vld [vmem:[%s166 + $0x2c] sm:$0xf]
      %v186 = vld [vmem:[%s166 + $0x30] sm:$0xf]
      %v187 = vld [vmem:[%s166 + $0x34] sm:$0xf]
      %v188 = vld [vmem:[%s166 + $0x38] sm:$0xf]
      %v189 = vld [vmem:[%s166 + $0x3c] sm:$0xf]
      %v190 = vld [vmem:[%s166 + $0x40] sm:$0xf]
      %v191 = vld [vmem:[%s166 + $0x44] sm:$0xf]
      %v192 = vld [vmem:[%s166 + $0x48] sm:$0xf]
      %v193 = vld [vmem:[%s166 + $0x4c] sm:$0xf]
      %v194 = vld [vmem:[%s166 + $0x50] sm:$0xf]
      %v195 = vld [vmem:[%s166 + $0x54] sm:$0xf]
      %v196 = vld [vmem:[%s166 + $0x58] sm:$0xf]
      %v197 = vld [vmem:[%s166 + $0x5c] sm:$0xf]
      %v198 = vld [vmem:[%s166 + $0x60] sm:$0xf]
      %v199 = vld [vmem:[%s166 + $0x64] sm:$0xf]
      %v200 = vld [vmem:[%s166 + $0x68] sm:$0xf]
      %v201 = vld [vmem:[%s166 + $0x6c] sm:$0xf]
      %v202 = vld [vmem:[%s166 + $0x70] sm:$0xf]
      %v203 = vld [vmem:[%s166 + $0x74] sm:$0xf]
      %v204 = vld [vmem:[%s166 + $0x78] sm:$0xf]
      %v205 = vld [vmem:[%s166 + $0x7c] sm:$0xf]
      %v206 = vld [vmem:[%s166 + $0x80] sm:$0xf]
      %v207 = vld [vmem:[%s166 + $0x84] sm:$0xf]
      %v208 = vld [vmem:[%s166 + $0x88] sm:$0xf]
      %v209 = vld [vmem:[%s166 + $0x8c] sm:$0xf]
      %v210 = vld [vmem:[%s166 + $0x90] sm:$0xf]
      %v211 = vld [vmem:[%s166 + $0x94] sm:$0xf]
      %v212 = vld [vmem:[%s166 + $0x98] sm:$0xf]
      %v213 = vld [vmem:[%s166 + $0x9c] sm:$0xf]
      %v214 = vld [vmem:[%s166 + $0xa0] sm:$0xf]
      %v215 = vld [vmem:[%s166 + $0xa4] sm:$0xf]
      %v216 = vld [vmem:[%s166 + $0xa8] sm:$0xf]
      %v217 = vld [vmem:[%s166 + $0xac] sm:$0xf]
      %v218 = vld [vmem:[%s166 + $0xb0] sm:$0xf]
      %v219 = vld [vmem:[%s166 + $0xb4] sm:$0xf]
      %v220 = vld [vmem:[%s166 + $0xb8] sm:$0xf]
      %v221 = vld [vmem:[%s166 + $0xbc] sm:$0xf]
      %v222 = vld [vmem:[%s166 + $0xc0] sm:$0xf]
      %v223 = vld [vmem:[%s166 + $0xc4] sm:$0xf]
      %v224 = vld [vmem:[%s166 + $0xc8] sm:$0xf]
      %v225 = vld [vmem:[%s166 + $0xcc] sm:$0xf]
      %v226 = vld [vmem:[%s166 + $0xd0] sm:$0xf]
      %v227 = vld [vmem:[%s166 + $0xd4] sm:$0xf]
      %v228 = vld [vmem:[%s166 + $0xd8] sm:$0xf]
      %v229 = vld [vmem:[%s166 + $0xdc] sm:$0xf]
      %v230 = vld [vmem:[%s166 + $0xe0] sm:$0xf]
      %v231 = vld [vmem:[%s166 + $0xe4] sm:$0xf]
      %v232 = vld [vmem:[%s166 + $0xe8] sm:$0xf]
      %v233 = vld [vmem:[%s166 + $0xec] sm:$0xf]
      %v234 = vld [vmem:[%s166 + $0xf0] sm:$0xf]
      %v235 = vld [vmem:[%s166 + $0xf4] sm:$0xf]
      %v236 = vld [vmem:[%s166 + $0xf8] sm:$0xf]
      %v237 = vld [vmem:[%s166 + $0xfc] sm:$0xf]
      %v238 = vld [vmem:[%s166 + $0x100] sm:$0xf]
      %v239 = vld [vmem:[%s166 + $0x104] sm:$0xf]
      %v240 = vld [vmem:[%s166 + $0x108] sm:$0xf]
      %v241 = vld [vmem:[%s166 + $0x10c] sm:$0xf]
      %v242 = vld [vmem:[%s166 + $0x110] sm:$0xf]
      %v243 = vld [vmem:[%s166 + $0x114] sm:$0xf]
      %v244 = vld [vmem:[%s166 + $0x118] sm:$0xf]
      %v245 = vld [vmem:[%s166 + $0x11c] sm:$0xf]
      %v246 = vld [vmem:[%s166 + $0x120] sm:$0xf]
      %v247 = vld [vmem:[%s166 + $0x124] sm:$0xf]
      %v248 = vld [vmem:[%s166 + $0x128] sm:$0xf]
      %v249 = vld [vmem:[%s166 + $0x12c] sm:$0xf]
      %v250 = vld [vmem:[%s166 + $0x130] sm:$0xf]
      %v251 = vld [vmem:[%s166 + $0x134] sm:$0xf]
      %v252 = vld [vmem:[%s166 + $0x138] sm:$0xf]
      %v253 = vld [vmem:[%s166 + $0x13c] sm:$0xf]
      %v254 = vld [vmem:[%s166 + $0x140] sm:$0xf]
      %v255 = vld [vmem:[%s166 + $0x144] sm:$0xf]
      %v256 = vld [vmem:[%s166 + $0x148] sm:$0xf]
      %v257 = vld [vmem:[%s166 + $0x14c] sm:$0xf]
      %v258 = vld [vmem:[%s166 + $0x150] sm:$0xf]
      %v259 = vld [vmem:[%s166 + $0x154] sm:$0xf]
      %v260 = vld [vmem:[%s166 + $0x158] sm:$0xf]
      %v261 = vld [vmem:[%s166 + $0x15c] sm:$0xf]
      %v262 = vld [vmem:[%s166 + $0x160] sm:$0xf]
      %v263 = vld [vmem:[%s166 + $0x164] sm:$0xf]
      %v264 = vld [vmem:[%s166 + $0x168] sm:$0xf]
      %v265 = vld [vmem:[%s166 + $0x16c] sm:$0xf]
      %v266 = vld [vmem:[%s166 + $0x170] sm:$0xf]
      %v267 = vld [vmem:[%s166 + $0x174] sm:$0xf]
      %v268 = vld [vmem:[%s166 + $0x178] sm:$0xf]
      %v269 = vld [vmem:[%s166 + $0x17c] sm:$0xf]
      %v270 = vld [vmem:[%s166 + $0x180] sm:$0xf]
      %v271 = vld [vmem:[%s166 + $0x184] sm:$0xf]
      %v272 = vld [vmem:[%s166 + $0x188] sm:$0xf]
      %v273 = vld [vmem:[%s166 + $0x18c] sm:$0xf]
      %v274 = vld [vmem:[%s166 + $0x190] sm:$0xf]
      %v275 = vld [vmem:[%s166 + $0x194] sm:$0xf]
      %v276 = vld [vmem:[%s166 + $0x198] sm:$0xf]
      %v277 = vld [vmem:[%s166 + $0x19c] sm:$0xf]
      %v278 = vld [vmem:[%s166 + $0x1a0] sm:$0xf]
      %v279 = vld [vmem:[%s166 + $0x1a4] sm:$0xf]
      %v280 = vld [vmem:[%s166 + $0x1a8] sm:$0xf]
      %v281 = vld [vmem:[%s166 + $0x1ac] sm:$0xf]
      %v282 = vld [vmem:[%s166 + $0x1b0] sm:$0xf]
      %v283 = vld [vmem:[%s166 + $0x1b4] sm:$0xf]
      %v284 = vld [vmem:[%s166 + $0x1b8] sm:$0xf]
      %v285 = vld [vmem:[%s166 + $0x1bc] sm:$0xf]
      %v286 = vld [vmem:[%s166 + $0x1c0] sm:$0xf]
      %v287 = vld [vmem:[%s166 + $0x1c4] sm:$0xf]
      %v288 = vld [vmem:[%s166 + $0x1c8] sm:$0xf]
      %v289 = vld [vmem:[%s166 + $0x1cc] sm:$0xf]
      %v290 = vld [vmem:[%s166 + $0x1d0] sm:$0xf]
      %v291 = vld [vmem:[%s166 + $0x1d4] sm:$0xf]
      %v292 = vld [vmem:[%s166 + $0x1d8] sm:$0xf]
      %v293 = vld [vmem:[%s166 + $0x1dc] sm:$0xf]
      %v294 = vld [vmem:[%s166 + $0x1e0] sm:$0xf]
      %v295 = vld [vmem:[%s166 + $0x1e4] sm:$0xf]
      %v296 = vld [vmem:[%s166 + $0x1e8] sm:$0xf]
      %v297 = vld [vmem:[%s166 + $0x1ec] sm:$0xf]
      %v298 = vld [vmem:[%s166 + $0x1f0] sm:$0xf]
      %v299 = vld [vmem:[%s166 + $0x1f4] sm:$0xf]
      %v300 = vld [vmem:[%s166 + $0x1f8] sm:$0xf]
      %v301 = vld [vmem:[%s166 + $0x1fc] sm:$0xf]
      %v302 = vld [vmem:[%s1] sm:$0xf]
      %v303 = vld [vmem:[%s1 + $0x4] sm:$0xf]
      %v304 = vld [vmem:[%s1 + $0x8] sm:$0xf]
      %v305 = vld [vmem:[%s1 + $0xc] sm:$0xf]
      %v306 = vld [vmem:[%s1 + $0x10] sm:$0xf]
      %v307 = vld [vmem:[%s1 + $0x14] sm:$0xf]
      %v308 = vld [vmem:[%s1 + $0x18] sm:$0xf]
      %v309 = vld [vmem:[%s1 + $0x1c] sm:$0xf]
      %v310 = vld [vmem:[%s1 + $0x20] sm:$0xf]
      %v311 = vld [vmem:[%s1 + $0x24] sm:$0xf]
      %v312 = vld [vmem:[%s1 + $0x28] sm:$0xf]
      %v313 = vld [vmem:[%s1 + $0x2c] sm:$0xf]
      %v314 = vld [vmem:[%s1 + $0x30] sm:$0xf]
      %v315 = vld [vmem:[%s1 + $0x34] sm:$0xf]
      %v316 = vld [vmem:[%s1 + $0x38] sm:$0xf]
      %v317 = vld [vmem:[%s1 + $0x3c] sm:$0xf]
      %v318 = vld [vmem:[%s2] sm:$0x1]
      %v320 = vperm.slane %v318, 0
      %v450 = vunpack.c.l.b16 %v174
      %v451 = vunpack.c.l.b16 %v175
      %v452 = vunpack.c.l.b16 %v176
      %v453 = vunpack.c.l.b16 %v177
      %v454 = vunpack.c.l.b16 %v178
      %v455 = vunpack.c.l.b16 %v179
      %v456 = vunpack.c.l.b16 %v180
      %v457 = vunpack.c.l.b16 %v181
      %v458 = vunpack.c.l.b16 %v182
      %v459 = vunpack.c.l.b16 %v183
      %v460 = vunpack.c.l.b16 %v184
      %v461 = vunpack.c.l.b16 %v185
      %v462 = vunpack.c.l.b16 %v186
      %v463 = vunpack.c.l.b16 %v187
      %v464 = vunpack.c.l.b16 %v188
      %v465 = vunpack.c.l.b16 %v189
      %v466 = vunpack.c.l.b16 %v190
      %v467 = vunpack.c.l.b16 %v191
      %v468 = vunpack.c.l.b16 %v192
      %v469 = vunpack.c.l.b16 %v193
      %v470 = vunpack.c.l.b16 %v194
      %v471 = vunpack.c.l.b16 %v195
      %v472 = vunpack.c.l.b16 %v196
      %v473 = vunpack.c.l.b16 %v197
      %v474 = vunpack.c.l.b16 %v198
      %v475 = vunpack.c.l.b16 %v199
      %v476 = vunpack.c.l.b16 %v200
      %v477 = vunpack.c.l.b16 %v201
      %v478 = vunpack.c.l.b16 %v202
      %v479 = vunpack.c.l.b16 %v203
      %v480 = vunpack.c.l.b16 %v204
      %v481 = vunpack.c.l.b16 %v205
      %v482 = vunpack.c.l.b16 %v206
      %v483 = vunpack.c.l.b16 %v207
      %v484 = vunpack.c.l.b16 %v208
      %v485 = vunpack.c.l.b16 %v209
      %v486 = vunpack.c.l.b16 %v210
      %v487 = vunpack.c.l.b16 %v211
      %v488 = vunpack.c.l.b16 %v212
      %v489 = vunpack.c.l.b16 %v213
      %v490 = vunpack.c.l.b16 %v214
      %v491 = vunpack.c.l.b16 %v215
      %v492 = vunpack.c.l.b16 %v216
      %v493 = vunpack.c.l.b16 %v217
      %v494 = vunpack.c.l.b16 %v218
      %v495 = vunpack.c.l.b16 %v219
      %v496 = vunpack.c.l.b16 %v220
      %v497 = vunpack.c.l.b16 %v221
      %v498 = vunpack.c.l.b16 %v222
      %v499 = vunpack.c.l.b16 %v223
      %v500 = vunpack.c.l.b16 %v224
      %v501 = vunpack.c.l.b16 %v225
      %v502 = vunpack.c.l.b16 %v226
      %v503 = vunpack.c.l.b16 %v227
      %v504 = vunpack.c.l.b16 %v228
      %v505 = vunpack.c.l.b16 %v229
      %v506 = vunpack.c.l.b16 %v230
      %v507 = vunpack.c.l.b16 %v231
      %v508 = vunpack.c.l.b16 %v232
      %v509 = vunpack.c.l.b16 %v233
      %v510 = vunpack.c.l.b16 %v234
      %v511 = vunpack.c.l.b16 %v235
      %v512 = vunpack.c.l.b16 %v236
      %v513 = vunpack.c.l.b16 %v237
      %v514 = vunpack.c.l.b16 %v238
      %v515 = vunpack.c.l.b16 %v239
      %v516 = vunpack.c.l.b16 %v240
      %v517 = vunpack.c.l.b16 %v241
      %v518 = vunpack.c.l.b16 %v242
      %v519 = vunpack.c.l.b16 %v243
      %v520 = vunpack.c.l.b16 %v244
      %v521 = vunpack.c.l.b16 %v245
      %v522 = vunpack.c.l.b16 %v246
      %v523 = vunpack.c.l.b16 %v247
      %v524 = vunpack.c.l.b16 %v248
      %v525 = vunpack.c.l.b16 %v249
      %v526 = vunpack.c.l.b16 %v250
      %v527 = vunpack.c.l.b16 %v251
      %v528 = vunpack.c.l.b16 %v252
      %v529 = vunpack.c.l.b16 %v253
      %v530 = vunpack.c.l.b16 %v254
      %v531 = vunpack.c.l.b16 %v255
      %v532 = vunpack.c.l.b16 %v256
      %v533 = vunpack.c.l.b16 %v257
      %v534 = vunpack.c.l.b16 %v258
      %v535 = vunpack.c.l.b16 %v259
      %v536 = vunpack.c.l.b16 %v260
      %v537 = vunpack.c.l.b16 %v261
      %v538 = vunpack.c.l.b16 %v262
      %v539 = vunpack.c.l.b16 %v263
      %v540 = vunpack.c.l.b16 %v264
      %v541 = vunpack.c.l.b16 %v265
      %v542 = vunpack.c.l.b16 %v266
      %v543 = vunpack.c.l.b16 %v267
      %v544 = vunpack.c.l.b16 %v268
      %v545 = vunpack.c.l.b16 %v269
      %v546 = vunpack.c.l.b16 %v270
      %v547 = vunpack.c.l.b16 %v271
      %v548 = vunpack.c.l.b16 %v272
      %v549 = vunpack.c.l.b16 %v273
      %v550 = vunpack.c.l.b16 %v274
      %v551 = vunpack.c.l.b16 %v275
      %v552 = vunpack.c.l.b16 %v276
      %v553 = vunpack.c.l.b16 %v277
      %v554 = vunpack.c.l.b16 %v278
      %v555 = vunpack.c.l.b16 %v279
      %v556 = vunpack.c.l.b16 %v280
      %v557 = vunpack.c.l.b16 %v281
      %v558 = vunpack.c.l.b16 %v282
      %v559 = vunpack.c.l.b16 %v283
      %v560 = vunpack.c.l.b16 %v284
      %v561 = vunpack.c.l.b16 %v285
      %v562 = vunpack.c.l.b16 %v286
      %v563 = vunpack.c.l.b16 %v287
      %v564 = vunpack.c.l.b16 %v288
      %v565 = vunpack.c.l.b16 %v289
      %v566 = vunpack.c.l.b16 %v290
      %v567 = vunpack.c.l.b16 %v291
      %v568 = vunpack.c.l.b16 %v292
      %v569 = vunpack.c.l.b16 %v293
      %v570 = vunpack.c.l.b16 %v294
      %v571 = vunpack.c.l.b16 %v295
      %v572 = vunpack.c.l.b16 %v296
      %v573 = vunpack.c.l.b16 %v297
      %v574 = vunpack.c.l.b16 %v298
      %v575 = vunpack.c.l.b16 %v299
      %v576 = vunpack.c.l.b16 %v300
      %v577 = vunpack.c.l.b16 %v301
      %v578 = vpack.c.b16 %v451, %v450
      %v579 = vpack.c.b16 %v453, %v452
      %v580 = vpack.c.b16 %v455, %v454
      %v581 = vpack.c.b16 %v457, %v456
      %v582 = vpack.c.b16 %v459, %v458
      %v583 = vpack.c.b16 %v461, %v460
      %v584 = vpack.c.b16 %v463, %v462
      %v585 = vpack.c.b16 %v465, %v464
      %v586 = vpack.c.b16 %v467, %v466
      %v587 = vpack.c.b16 %v469, %v468
      %v588 = vpack.c.b16 %v471, %v470
      %v589 = vpack.c.b16 %v473, %v472
      %v590 = vpack.c.b16 %v475, %v474
      %v591 = vpack.c.b16 %v477, %v476
      %v592 = vpack.c.b16 %v479, %v478
      %v593 = vpack.c.b16 %v481, %v480
      %v594 = vpack.c.b16 %v483, %v482
      %v595 = vpack.c.b16 %v485, %v484
      %v596 = vpack.c.b16 %v487, %v486
      %v597 = vpack.c.b16 %v489, %v488
      %v598 = vpack.c.b16 %v491, %v490
      %v599 = vpack.c.b16 %v493, %v492
      %v600 = vpack.c.b16 %v495, %v494
      %v601 = vpack.c.b16 %v497, %v496
      %v602 = vpack.c.b16 %v499, %v498
      %v603 = vpack.c.b16 %v501, %v500
      %v604 = vpack.c.b16 %v503, %v502
      %v605 = vpack.c.b16 %v505, %v504
      %v606 = vpack.c.b16 %v507, %v506
      %v607 = vpack.c.b16 %v509, %v508
      %v608 = vpack.c.b16 %v511, %v510
      %v609 = vpack.c.b16 %v513, %v512
      %v610 = vpack.c.b16 %v515, %v514
      %v611 = vpack.c.b16 %v517, %v516
      %v612 = vpack.c.b16 %v519, %v518
      %v613 = vpack.c.b16 %v521, %v520
      %v614 = vpack.c.b16 %v523, %v522
      %v615 = vpack.c.b16 %v525, %v524
      %v616 = vpack.c.b16 %v527, %v526
      %v617 = vpack.c.b16 %v529, %v528
      %v618 = vpack.c.b16 %v531, %v530
      %v619 = vpack.c.b16 %v533, %v532
      %v620 = vpack.c.b16 %v535, %v534
      %v621 = vpack.c.b16 %v537, %v536
      %v622 = vpack.c.b16 %v539, %v538
      %v623 = vpack.c.b16 %v541, %v540
      %v624 = vpack.c.b16 %v543, %v542
      %v625 = vpack.c.b16 %v545, %v544
      %v626 = vpack.c.b16 %v547, %v546
      %v627 = vpack.c.b16 %v549, %v548
      %v628 = vpack.c.b16 %v551, %v550
      %v629 = vpack.c.b16 %v553, %v552
      %v630 = vpack.c.b16 %v555, %v554
      %v631 = vpack.c.b16 %v557, %v556
      %v632 = vpack.c.b16 %v559, %v558
      %v633 = vpack.c.b16 %v561, %v560
      %v634 = vpack.c.b16 %v563, %v562
      %v635 = vpack.c.b16 %v565, %v564
      %v636 = vpack.c.b16 %v567, %v566
      %v637 = vpack.c.b16 %v569, %v568
      %v638 = vpack.c.b16 %v571, %v570
      %v639 = vpack.c.b16 %v573, %v572
      %v640 = vpack.c.b16 %v575, %v574
      %v641 = vpack.c.b16 %v577, %v576
      %v722 = vunpack.c.l.b16 %v302
      %v723 = vunpack.c.l.b16 %v303
      %v724 = vunpack.c.l.b16 %v304
      %v725 = vunpack.c.l.b16 %v305
      %v726 = vunpack.c.l.b16 %v306
      %v727 = vunpack.c.l.b16 %v307
      %v728 = vunpack.c.l.b16 %v308
      %v729 = vunpack.c.l.b16 %v309
      %v730 = vunpack.c.l.b16 %v310
      %v731 = vunpack.c.l.b16 %v311
      %v732 = vunpack.c.l.b16 %v312
      %v733 = vunpack.c.l.b16 %v313
      %v734 = vunpack.c.l.b16 %v314
      %v735 = vunpack.c.l.b16 %v315
      %v736 = vunpack.c.l.b16 %v316
      %v737 = vunpack.c.l.b16 %v317
      %v738 = vpack.c.b16 %v723, %v722
      %v739 = vpack.c.b16 %v725, %v724
      %v740 = vpack.c.b16 %v727, %v726
      %v741 = vpack.c.b16 %v729, %v728
      %v742 = vpack.c.b16 %v731, %v730
      %v743 = vpack.c.b16 %v733, %v732
      %v744 = vpack.c.b16 %v735, %v734
      %v745 = vpack.c.b16 %v737, %v736
      %754 = vmatpush.bf16.msra.mxu0 %v745
      %755 = vmatpush.bf16.msra.mxu0 %v744
      %756 = vmatpush.bf16.msra.mxu0 %v743
      %757 = vmatpush.bf16.msra.mxu0 %v742
      %758 = vmatpush.bf16.msra.mxu0 %v741
      %759 = vmatpush.bf16.msra.mxu0 %v740
      %760 = vmatpush.bf16.msra.mxu0 %v739
      %761 = vmatpush.bf16.msra.mxu0 %v738
      %762 = vmatmul.bf16.gmra.mxu0 %v578
      %v763 = vpop.f32.mrf.mxu0
      %v764 = vadd.f32 %v320, %v763
      %v765 = vpop.f32.mrf.mxu0
      %v766 = vadd.f32 %v320, %v765
      %767 = vmatmul.bf16.gmra.mxu0 %v579
      %v768 = vpop.f32.mrf.mxu0
      %v769 = vadd.f32 %v320, %v768
      %v770 = vpop.f32.mrf.mxu0
      %v771 = vadd.f32 %v320, %v770
      %772 = vmatmul.bf16.gmra.mxu0 %v580
      %v773 = vpop.f32.mrf.mxu0
      %v774 = vadd.f32 %v320, %v773
      %v775 = vpop.f32.mrf.mxu0
      %v776 = vadd.f32 %v320, %v775
      %777 = vmatmul.bf16.gmra.mxu0 %v581
      %v778 = vpop.f32.mrf.mxu0
      %v779 = vadd.f32 %v320, %v778
      %v780 = vpop.f32.mrf.mxu0
      %v781 = vadd.f32 %v320, %v780
      %782 = vmatmul.bf16.gmra.mxu0 %v582
      %v783 = vpop.f32.mrf.mxu0
      %v784 = vadd.f32 %v320, %v783
      %v785 = vpop.f32.mrf.mxu0
      %v786 = vadd.f32 %v320, %v785
      %787 = vmatmul.bf16.gmra.mxu0 %v583
      %v788 = vpop.f32.mrf.mxu0
      %v789 = vadd.f32 %v320, %v788
      %v790 = vpop.f32.mrf.mxu0
      %v791 = vadd.f32 %v320, %v790
      %792 = vmatmul.bf16.gmra.mxu0 %v584
      %v793 = vpop.f32.mrf.mxu0
      %v794 = vadd.f32 %v320, %v793
      %v795 = vpop.f32.mrf.mxu0
      %v796 = vadd.f32 %v320, %v795
      %797 = vmatmul.bf16.gmra.mxu0 %v585
      %v798 = vpop.f32.mrf.mxu0
      %v799 = vadd.f32 %v320, %v798
      %v800 = vpop.f32.mrf.mxu0
      %v801 = vadd.f32 %v320, %v800
      %802 = vmatmul.bf16.gmra.mxu0 %v586
      %v803 = vpop.f32.mrf.mxu0
      %v804 = vadd.f32 %v320, %v803
      %v805 = vpop.f32.mrf.mxu0
      %v806 = vadd.f32 %v320, %v805
      %807 = vmatmul.bf16.gmra.mxu0 %v587
      %v808 = vpop.f32.mrf.mxu0
      %v809 = vadd.f32 %v320, %v808
      %v810 = vpop.f32.mrf.mxu0
      %v811 = vadd.f32 %v320, %v810
      %812 = vmatmul.bf16.gmra.mxu0 %v588
      %v813 = vpop.f32.mrf.mxu0
      %v814 = vadd.f32 %v320, %v813
      %v815 = vpop.f32.mrf.mxu0
      %v816 = vadd.f32 %v320, %v815
      %817 = vmatmul.bf16.gmra.mxu0 %v589
      %v818 = vpop.f32.mrf.mxu0
      %v819 = vadd.f32 %v320, %v818
      %v820 = vpop.f32.mrf.mxu0
      %v821 = vadd.f32 %v320, %v820
      %822 = vmatmul.bf16.gmra.mxu0 %v590
      %v823 = vpop.f32.mrf.mxu0
      %v824 = vadd.f32 %v320, %v823
      %v825 = vpop.f32.mrf.mxu0
      %v826 = vadd.f32 %v320, %v825
      %827 = vmatmul.bf16.gmra.mxu0 %v591
      %v828 = vpop.f32.mrf.mxu0
      %v829 = vadd.f32 %v320, %v828
      %v830 = vpop.f32.mrf.mxu0
      %v831 = vadd.f32 %v320, %v830
      %832 = vmatmul.bf16.gmra.mxu0 %v592
      %v833 = vpop.f32.mrf.mxu0
      %v834 = vadd.f32 %v320, %v833
      %v835 = vpop.f32.mrf.mxu0
      %v836 = vadd.f32 %v320, %v835
      %837 = vmatmul.bf16.gmra.mxu0 %v593
      %v838 = vpop.f32.mrf.mxu0
      %v839 = vadd.f32 %v320, %v838
      %v840 = vpop.f32.mrf.mxu0
      %v841 = vadd.f32 %v320, %v840
      %842 = vmatmul.bf16.gmra.mxu0 %v594
      %v843 = vpop.f32.mrf.mxu0
      %v844 = vadd.f32 %v320, %v843
      %v845 = vpop.f32.mrf.mxu0
      %v846 = vadd.f32 %v320, %v845
      %847 = vmatmul.bf16.gmra.mxu0 %v595
      %v848 = vpop.f32.mrf.mxu0
      %v849 = vadd.f32 %v320, %v848
      %v850 = vpop.f32.mrf.mxu0
      %v851 = vadd.f32 %v320, %v850
      %852 = vmatmul.bf16.gmra.mxu0 %v596
      %v853 = vpop.f32.mrf.mxu0
      %v854 = vadd.f32 %v320, %v853
      %v855 = vpop.f32.mrf.mxu0
      %v856 = vadd.f32 %v320, %v855
      %857 = vmatmul.bf16.gmra.mxu0 %v597
      %v858 = vpop.f32.mrf.mxu0
      %v859 = vadd.f32 %v320, %v858
      %v860 = vpop.f32.mrf.mxu0
      %v861 = vadd.f32 %v320, %v860
      %862 = vmatmul.bf16.gmra.mxu0 %v598
      %v863 = vpop.f32.mrf.mxu0
      %v864 = vadd.f32 %v320, %v863
      %v865 = vpop.f32.mrf.mxu0
      %v866 = vadd.f32 %v320, %v865
      %867 = vmatmul.bf16.gmra.mxu0 %v599
      %v868 = vpop.f32.mrf.mxu0
      %v869 = vadd.f32 %v320, %v868
      %v870 = vpop.f32.mrf.mxu0
      %v871 = vadd.f32 %v320, %v870
      %872 = vmatmul.bf16.gmra.mxu0 %v600
      %v873 = vpop.f32.mrf.mxu0
      %v874 = vadd.f32 %v320, %v873
      %v875 = vpop.f32.mrf.mxu0
      %v876 = vadd.f32 %v320, %v875
      %877 = vmatmul.bf16.gmra.mxu0 %v601
      %v878 = vpop.f32.mrf.mxu0
      %v879 = vadd.f32 %v320, %v878
      %v880 = vpop.f32.mrf.mxu0
      %v881 = vadd.f32 %v320, %v880
      %882 = vmatmul.bf16.gmra.mxu0 %v602
      %v883 = vpop.f32.mrf.mxu0
      %v884 = vadd.f32 %v320, %v883
      %v885 = vpop.f32.mrf.mxu0
      %v886 = vadd.f32 %v320, %v885
      %887 = vmatmul.bf16.gmra.mxu0 %v603
      %v888 = vpop.f32.mrf.mxu0
      %v889 = vadd.f32 %v320, %v888
      %v890 = vpop.f32.mrf.mxu0
      %v891 = vadd.f32 %v320, %v890
      %892 = vmatmul.bf16.gmra.mxu0 %v604
      %v893 = vpop.f32.mrf.mxu0
      %v894 = vadd.f32 %v320, %v893
      %v895 = vpop.f32.mrf.mxu0
      %v896 = vadd.f32 %v320, %v895
      %897 = vmatmul.bf16.gmra.mxu0 %v605
      %v898 = vpop.f32.mrf.mxu0
      %v899 = vadd.f32 %v320, %v898
      %v900 = vpop.f32.mrf.mxu0
      %v901 = vadd.f32 %v320, %v900
      %902 = vmatmul.bf16.gmra.mxu0 %v606
      %v903 = vpop.f32.mrf.mxu0
      %v904 = vadd.f32 %v320, %v903
      %v905 = vpop.f32.mrf.mxu0
      %v906 = vadd.f32 %v320, %v905
      %907 = vmatmul.bf16.gmra.mxu0 %v607
      %v908 = vpop.f32.mrf.mxu0
      %v909 = vadd.f32 %v320, %v908
      %v910 = vpop.f32.mrf.mxu0
      %v911 = vadd.f32 %v320, %v910
      %912 = vmatmul.bf16.gmra.mxu0 %v608
      %v913 = vpop.f32.mrf.mxu0
      %v914 = vadd.f32 %v320, %v913
      %v915 = vpop.f32.mrf.mxu0
      %v916 = vadd.f32 %v320, %v915
      %917 = vmatmul.bf16.gmra.mxu0 %v609
      %v918 = vpop.f32.mrf.mxu0
      %v919 = vadd.f32 %v320, %v918
      %v920 = vpop.f32.mrf.mxu0
      %v921 = vadd.f32 %v320, %v920
      %922 = vmatmul.bf16.gmra.mxu0 %v610
      %v923 = vpop.f32.mrf.mxu0
      %v924 = vadd.f32 %v320, %v923
      %v925 = vpop.f32.mrf.mxu0
      %v926 = vadd.f32 %v320, %v925
      %927 = vmatmul.bf16.gmra.mxu0 %v611
      %v928 = vpop.f32.mrf.mxu0
      %v929 = vadd.f32 %v320, %v928
      %v930 = vpop.f32.mrf.mxu0
      %v931 = vadd.f32 %v320, %v930
      %932 = vmatmul.bf16.gmra.mxu0 %v612
      %v933 = vpop.f32.mrf.mxu0
      %v934 = vadd.f32 %v320, %v933
      %v935 = vpop.f32.mrf.mxu0
      %v936 = vadd.f32 %v320, %v935
      %937 = vmatmul.bf16.gmra.mxu0 %v613
      %v938 = vpop.f32.mrf.mxu0
      %v939 = vadd.f32 %v320, %v938
      %v940 = vpop.f32.mrf.mxu0
      %v941 = vadd.f32 %v320, %v940
      %942 = vmatmul.bf16.gmra.mxu0 %v614
      %v943 = vpop.f32.mrf.mxu0
      %v944 = vadd.f32 %v320, %v943
      %v945 = vpop.f32.mrf.mxu0
      %v946 = vadd.f32 %v320, %v945
      %947 = vmatmul.bf16.gmra.mxu0 %v615
      %v948 = vpop.f32.mrf.mxu0
      %v949 = vadd.f32 %v320, %v948
      %v950 = vpop.f32.mrf.mxu0
      %v951 = vadd.f32 %v320, %v950
      %952 = vmatmul.bf16.gmra.mxu0 %v616
      %v953 = vpop.f32.mrf.mxu0
      %v954 = vadd.f32 %v320, %v953
      %v955 = vpop.f32.mrf.mxu0
      %v956 = vadd.f32 %v320, %v955
      %957 = vmatmul.bf16.gmra.mxu0 %v617
      %v958 = vpop.f32.mrf.mxu0
      %v959 = vadd.f32 %v320, %v958
      %v960 = vpop.f32.mrf.mxu0
      %v961 = vadd.f32 %v320, %v960
      %962 = vmatmul.bf16.gmra.mxu0 %v618
      %v963 = vpop.f32.mrf.mxu0
      %v964 = vadd.f32 %v320, %v963
      %v965 = vpop.f32.mrf.mxu0
      %v966 = vadd.f32 %v320, %v965
      %967 = vmatmul.bf16.gmra.mxu0 %v619
      %v968 = vpop.f32.mrf.mxu0
      %v969 = vadd.f32 %v320, %v968
      %v970 = vpop.f32.mrf.mxu0
      %v971 = vadd.f32 %v320, %v970
      %972 = vmatmul.bf16.gmra.mxu0 %v620
      %v973 = vpop.f32.mrf.mxu0
      %v974 = vadd.f32 %v320, %v973
      %v975 = vpop.f32.mrf.mxu0
      %v976 = vadd.f32 %v320, %v975
      %977 = vmatmul.bf16.gmra.mxu0 %v621
      %v978 = vpop.f32.mrf.mxu0
      %v979 = vadd.f32 %v320, %v978
      %v980 = vpop.f32.mrf.mxu0
      %v981 = vadd.f32 %v320, %v980
      %982 = vmatmul.bf16.gmra.mxu0 %v622
      %v983 = vpop.f32.mrf.mxu0
      %v984 = vadd.f32 %v320, %v983
      %v985 = vpop.f32.mrf.mxu0
      %v986 = vadd.f32 %v320, %v985
      %987 = vmatmul.bf16.gmra.mxu0 %v623
      %v988 = vpop.f32.mrf.mxu0
      %v989 = vadd.f32 %v320, %v988
      %v990 = vpop.f32.mrf.mxu0
      %v991 = vadd.f32 %v320, %v990
      %992 = vmatmul.bf16.gmra.mxu0 %v624
      %v993 = vpop.f32.mrf.mxu0
      %v994 = vadd.f32 %v320, %v993
      %v995 = vpop.f32.mrf.mxu0
      %v996 = vadd.f32 %v320, %v995
      %997 = vmatmul.bf16.gmra.mxu0 %v625
      %v998 = vpop.f32.mrf.mxu0
      %v999 = vadd.f32 %v320, %v998
      %v1000 = vpop.f32.mrf.mxu0
      %v1001 = vadd.f32 %v320, %v1000
      %1002 = vmatmul.bf16.gmra.mxu0 %v626
      %v1003 = vpop.f32.mrf.mxu0
      %v1004 = vadd.f32 %v320, %v1003
      %v1005 = vpop.f32.mrf.mxu0
      %v1006 = vadd.f32 %v320, %v1005
      %1007 = vmatmul.bf16.gmra.mxu0 %v627
      %v1008 = vpop.f32.mrf.mxu0
      %v1009 = vadd.f32 %v320, %v1008
      %v1010 = vpop.f32.mrf.mxu0
      %v1011 = vadd.f32 %v320, %v1010
      %1012 = vmatmul.bf16.gmra.mxu0 %v628
      %v1013 = vpop.f32.mrf.mxu0
      %v1014 = vadd.f32 %v320, %v1013
      %v1015 = vpop.f32.mrf.mxu0
      %v1016 = vadd.f32 %v320, %v1015
      %1017 = vmatmul.bf16.gmra.mxu0 %v629
      %v1018 = vpop.f32.mrf.mxu0
      %v1019 = vadd.f32 %v320, %v1018
      %v1020 = vpop.f32.mrf.mxu0
      %v1021 = vadd.f32 %v320, %v1020
      %1022 = vmatmul.bf16.gmra.mxu0 %v630
      %v1023 = vpop.f32.mrf.mxu0
      %v1024 = vadd.f32 %v320, %v1023
      %v1025 = vpop.f32.mrf.mxu0
      %v1026 = vadd.f32 %v320, %v1025
      %1027 = vmatmul.bf16.gmra.mxu0 %v631
      %v1028 = vpop.f32.mrf.mxu0
      %v1029 = vadd.f32 %v320, %v1028
      %v1030 = vpop.f32.mrf.mxu0
      %v1031 = vadd.f32 %v320, %v1030
      %1032 = vmatmul.bf16.gmra.mxu0 %v632
      %v1033 = vpop.f32.mrf.mxu0
      %v1034 = vadd.f32 %v320, %v1033
      %v1035 = vpop.f32.mrf.mxu0
      %v1036 = vadd.f32 %v320, %v1035
      %1037 = vmatmul.bf16.gmra.mxu0 %v633
      %v1038 = vpop.f32.mrf.mxu0
      %v1039 = vadd.f32 %v320, %v1038
      %v1040 = vpop.f32.mrf.mxu0
      %v1041 = vadd.f32 %v320, %v1040
      %1042 = vmatmul.bf16.gmra.mxu0 %v634
      %v1043 = vpop.f32.mrf.mxu0
      %v1044 = vadd.f32 %v320, %v1043
      %v1045 = vpop.f32.mrf.mxu0
      %v1046 = vadd.f32 %v320, %v1045
      %1047 = vmatmul.bf16.gmra.mxu0 %v635
      %v1048 = vpop.f32.mrf.mxu0
      %v1049 = vadd.f32 %v320, %v1048
      %v1050 = vpop.f32.mrf.mxu0
      %v1051 = vadd.f32 %v320, %v1050
      %1052 = vmatmul.bf16.gmra.mxu0 %v636
      %v1053 = vpop.f32.mrf.mxu0
      %v1054 = vadd.f32 %v320, %v1053
      %v1055 = vpop.f32.mrf.mxu0
      %v1056 = vadd.f32 %v320, %v1055
      %1057 = vmatmul.bf16.gmra.mxu0 %v637
      %v1058 = vpop.f32.mrf.mxu0
      %v1059 = vadd.f32 %v320, %v1058
      %v1060 = vpop.f32.mrf.mxu0
      %v1061 = vadd.f32 %v320, %v1060
      %1062 = vmatmul.bf16.gmra.mxu0 %v638
      %v1063 = vpop.f32.mrf.mxu0
      %v1064 = vadd.f32 %v320, %v1063
      %v1065 = vpop.f32.mrf.mxu0
      %v1066 = vadd.f32 %v320, %v1065
      %1067 = vmatmul.bf16.gmra.mxu0 %v639
      %v1068 = vpop.f32.mrf.mxu0
      %v1069 = vadd.f32 %v320, %v1068
      %v1070 = vpop.f32.mrf.mxu0
      %v1071 = vadd.f32 %v320, %v1070
      %1072 = vmatmul.bf16.gmra.mxu0 %v640
      %v1073 = vpop.f32.mrf.mxu0
      %v1074 = vadd.f32 %v320, %v1073
      %v1075 = vpop.f32.mrf.mxu0
      %v1076 = vadd.f32 %v320, %v1075
      %1077 = vmatmul.bf16.gmra.mxu0 %v641
      %v1078 = vpop.f32.mrf.mxu0
      %v1079 = vadd.f32 %v320, %v1078
      %v1080 = vpop.f32.mrf.mxu0
      %v1081 = vadd.f32 %v320, %v1080
      %1082 = vdwg.mxu0
      %v1083 = vmax.f32 %v764, 0.0
      %v1084 = vmax.f32 %v766, 0.0
      %v1085 = vmax.f32 %v769, 0.0
      %v1086 = vmax.f32 %v771, 0.0
      %v1087 = vmax.f32 %v774, 0.0
      %v1088 = vmax.f32 %v776, 0.0
      %v1089 = vmax.f32 %v779, 0.0
      %v1090 = vmax.f32 %v781, 0.0
      %v1091 = vmax.f32 %v784, 0.0
      %v1092 = vmax.f32 %v786, 0.0
      %v1093 = vmax.f32 %v789, 0.0
      %v1094 = vmax.f32 %v791, 0.0
      %v1095 = vmax.f32 %v794, 0.0
      %v1096 = vmax.f32 %v796, 0.0
      %v1097 = vmax.f32 %v799, 0.0
      %v1098 = vmax.f32 %v801, 0.0
      %v1099 = vmax.f32 %v804, 0.0
      %v1100 = vmax.f32 %v806, 0.0
      %v1101 = vmax.f32 %v809, 0.0
      %v1102 = vmax.f32 %v811, 0.0
      %v1103 = vmax.f32 %v814, 0.0
      %v1104 = vmax.f32 %v816, 0.0
      %v1105 = vmax.f32 %v819, 0.0
      %v1106 = vmax.f32 %v821, 0.0
      %v1107 = vmax.f32 %v824, 0.0
      %v1108 = vmax.f32 %v826, 0.0
      %v1109 = vmax.f32 %v829, 0.0
      %v1110 = vmax.f32 %v831, 0.0
      %v1111 = vmax.f32 %v834, 0.0
      %v1112 = vmax.f32 %v836, 0.0
      %v1113 = vmax.f32 %v839, 0.0
      %v1114 = vmax.f32 %v841, 0.0
      %v1115 = vmax.f32 %v844, 0.0
      %v1116 = vmax.f32 %v846, 0.0
      %v1117 = vmax.f32 %v849, 0.0
      %v1118 = vmax.f32 %v851, 0.0
      %v1119 = vmax.f32 %v854, 0.0
      %v1120 = vmax.f32 %v856, 0.0
      %v1121 = vmax.f32 %v859, 0.0
      %v1122 = vmax.f32 %v861, 0.0
      %v1123 = vmax.f32 %v864, 0.0
      %v1124 = vmax.f32 %v866, 0.0
      %v1125 = vmax.f32 %v869, 0.0
      %v1126 = vmax.f32 %v871, 0.0
      %v1127 = vmax.f32 %v874, 0.0
      %v1128 = vmax.f32 %v876, 0.0
      %v1129 = vmax.f32 %v879, 0.0
      %v1130 = vmax.f32 %v881, 0.0
      %v1131 = vmax.f32 %v884, 0.0
      %v1132 = vmax.f32 %v886, 0.0
      %v1133 = vmax.f32 %v889, 0.0
      %v1134 = vmax.f32 %v891, 0.0
      %v1135 = vmax.f32 %v894, 0.0
      %v1136 = vmax.f32 %v896, 0.0
      %v1137 = vmax.f32 %v899, 0.0
      %v1138 = vmax.f32 %v901, 0.0
      %v1139 = vmax.f32 %v904, 0.0
      %v1140 = vmax.f32 %v906, 0.0
      %v1141 = vmax.f32 %v909, 0.0
      %v1142 = vmax.f32 %v911, 0.0
      %v1143 = vmax.f32 %v914, 0.0
      %v1144 = vmax.f32 %v916, 0.0
      %v1145 = vmax.f32 %v919, 0.0
      %v1146 = vmax.f32 %v921, 0.0
      %v1147 = vmax.f32 %v924, 0.0
      %v1148 = vmax.f32 %v926, 0.0
      %v1149 = vmax.f32 %v929, 0.0
      %v1150 = vmax.f32 %v931, 0.0
      %v1151 = vmax.f32 %v934, 0.0
      %v1152 = vmax.f32 %v936, 0.0
      %v1153 = vmax.f32 %v939, 0.0
      %v1154 = vmax.f32 %v941, 0.0
      %v1155 = vmax.f32 %v944, 0.0
      %v1156 = vmax.f32 %v946, 0.0
      %v1157 = vmax.f32 %v949, 0.0
      %v1158 = vmax.f32 %v951, 0.0
      %v1159 = vmax.f32 %v954, 0.0
      %v1160 = vmax.f32 %v956, 0.0
      %v1161 = vmax.f32 %v959, 0.0
      %v1162 = vmax.f32 %v961, 0.0
      %v1163 = vmax.f32 %v964, 0.0
      %v1164 = vmax.f32 %v966, 0.0
      %v1165 = vmax.f32 %v969, 0.0
      %v1166 = vmax.f32 %v971, 0.0
      %v1167 = vmax.f32 %v974, 0.0
      %v1168 = vmax.f32 %v976, 0.0
      %v1169 = vmax.f32 %v979, 0.0
      %v1170 = vmax.f32 %v981, 0.0
      %v1171 = vmax.f32 %v984, 0.0
      %v1172 = vmax.f32 %v986, 0.0
      %v1173 = vmax.f32 %v989, 0.0
      %v1174 = vmax.f32 %v991, 0.0
      %v1175 = vmax.f32 %v994, 0.0
      %v1176 = vmax.f32 %v996, 0.0
      %v1177 = vmax.f32 %v999, 0.0
      %v1178 = vmax.f32 %v1001, 0.0
      %v1179 = vmax.f32 %v1004, 0.0
      %v1180 = vmax.f32 %v1006, 0.0
      %v1181 = vmax.f32 %v1009, 0.0
      %v1182 = vmax.f32 %v1011, 0.0
      %v1183 = vmax.f32 %v1014, 0.0
      %v1184 = vmax.f32 %v1016, 0.0
      %v1185 = vmax.f32 %v1019, 0.0
      %v1186 = vmax.f32 %v1021, 0.0
      %v1187 = vmax.f32 %v1024, 0.0
      %v1188 = vmax.f32 %v1026, 0.0
      %v1189 = vmax.f32 %v1029, 0.0
      %v1190 = vmax.f32 %v1031, 0.0
      %v1191 = vmax.f32 %v1034, 0.0
      %v1192 = vmax.f32 %v1036, 0.0
      %v1193 = vmax.f32 %v1039, 0.0
      %v1194 = vmax.f32 %v1041, 0.0
      %v1195 = vmax.f32 %v1044, 0.0
      %v1196 = vmax.f32 %v1046, 0.0
      %v1197 = vmax.f32 %v1049, 0.0
      %v1198 = vmax.f32 %v1051, 0.0
      %v1199 = vmax.f32 %v1054, 0.0
      %v1200 = vmax.f32 %v1056, 0.0
      %v1201 = vmax.f32 %v1059, 0.0
      %v1202 = vmax.f32 %v1061, 0.0
      %v1203 = vmax.f32 %v1064, 0.0
      %v1204 = vmax.f32 %v1066, 0.0
      %v1205 = vmax.f32 %v1069, 0.0
      %v1206 = vmax.f32 %v1071, 0.0
      %v1207 = vmax.f32 %v1074, 0.0
      %v1208 = vmax.f32 %v1076, 0.0
      %v1209 = vmax.f32 %v1079, 0.0
      %v1210 = vmax.f32 %v1081, 0.0
      %v1211 = vmax.f32 %v1083, %v1115
      %v1212 = vmax.f32 %v1084, %v1116
      %v1213 = vmax.f32 %v1085, %v1117
      %v1214 = vmax.f32 %v1086, %v1118
      %v1215 = vmax.f32 %v1087, %v1119
      %v1216 = vmax.f32 %v1088, %v1120
      %v1217 = vmax.f32 %v1089, %v1121
      %v1218 = vmax.f32 %v1090, %v1122
      %v1219 = vmax.f32 %v1091, %v1123
      %v1220 = vmax.f32 %v1092, %v1124
      %v1221 = vmax.f32 %v1093, %v1125
      %v1222 = vmax.f32 %v1094, %v1126
      %v1223 = vmax.f32 %v1095, %v1127
      %v1224 = vmax.f32 %v1096, %v1128
      %v1225 = vmax.f32 %v1097, %v1129
      %v1226 = vmax.f32 %v1098, %v1130
      %v1227 = vmax.f32 %v1099, %v1131
      %v1228 = vmax.f32 %v1100, %v1132
      %v1229 = vmax.f32 %v1101, %v1133
      %v1230 = vmax.f32 %v1102, %v1134
      %v1231 = vmax.f32 %v1103, %v1135
      %v1232 = vmax.f32 %v1104, %v1136
      %v1233 = vmax.f32 %v1105, %v1137
      %v1234 = vmax.f32 %v1106, %v1138
      %v1235 = vmax.f32 %v1107, %v1139
      %v1236 = vmax.f32 %v1108, %v1140
      %v1237 = vmax.f32 %v1109, %v1141
      %v1238 = vmax.f32 %v1110, %v1142
      %v1239 = vmax.f32 %v1111, %v1143
      %v1240 = vmax.f32 %v1112, %v1144
      %v1241 = vmax.f32 %v1113, %v1145
      %v1242 = vmax.f32 %v1114, %v1146
      %v1243 = vmax.f32 %v1147, %v1179
      %v1244 = vmax.f32 %v1148, %v1180
      %v1245 = vmax.f32 %v1149, %v1181
      %v1246 = vmax.f32 %v1150, %v1182
      %v1247 = vmax.f32 %v1151, %v1183
      %v1248 = vmax.f32 %v1152, %v1184
      %v1249 = vmax.f32 %v1153, %v1185
      %v1250 = vmax.f32 %v1154, %v1186
      %v1251 = vmax.f32 %v1155, %v1187
      %v1252 = vmax.f32 %v1156, %v1188
      %v1253 = vmax.f32 %v1157, %v1189
      %v1254 = vmax.f32 %v1158, %v1190
      %v1255 = vmax.f32 %v1159, %v1191
      %v1256 = vmax.f32 %v1160, %v1192
      %v1257 = vmax.f32 %v1161, %v1193
      %v1258 = vmax.f32 %v1162, %v1194
      %v1259 = vmax.f32 %v1163, %v1195
      %v1260 = vmax.f32 %v1164, %v1196
      %v1261 = vmax.f32 %v1165, %v1197
      %v1262 = vmax.f32 %v1166, %v1198
      %v1263 = vmax.f32 %v1167, %v1199
      %v1264 = vmax.f32 %v1168, %v1200
      %v1265 = vmax.f32 %v1169, %v1201
      %v1266 = vmax.f32 %v1170, %v1202
      %v1267 = vmax.f32 %v1171, %v1203
      %v1268 = vmax.f32 %v1172, %v1204
      %v1269 = vmax.f32 %v1173, %v1205
      %v1270 = vmax.f32 %v1174, %v1206
      %v1271 = vmax.f32 %v1175, %v1207
      %v1272 = vmax.f32 %v1176, %v1208
      %v1273 = vmax.f32 %v1177, %v1209
      %v1274 = vmax.f32 %v1178, %v1210
      %v1275 = vmax.f32 %v1211, %v1243
      %v1276 = vmax.f32 %v1212, %v1244
      %v1277 = vmax.f32 %v1213, %v1245
      %v1278 = vmax.f32 %v1214, %v1246
      %v1279 = vmax.f32 %v1215, %v1247
      %v1280 = vmax.f32 %v1216, %v1248
      %v1281 = vmax.f32 %v1217, %v1249
      %v1282 = vmax.f32 %v1218, %v1250
      %v1283 = vmax.f32 %v1219, %v1251
      %v1284 = vmax.f32 %v1220, %v1252
      %v1285 = vmax.f32 %v1221, %v1253
      %v1286 = vmax.f32 %v1222, %v1254
      %v1287 = vmax.f32 %v1223, %v1255
      %v1288 = vmax.f32 %v1224, %v1256
      %v1289 = vmax.f32 %v1225, %v1257
      %v1290 = vmax.f32 %v1226, %v1258
      %v1291 = vmax.f32 %v1227, %v1259
      %v1292 = vmax.f32 %v1228, %v1260
      %v1293 = vmax.f32 %v1229, %v1261
      %v1294 = vmax.f32 %v1230, %v1262
      %v1295 = vmax.f32 %v1231, %v1263
      %v1296 = vmax.f32 %v1232, %v1264
      %v1297 = vmax.f32 %v1233, %v1265
      %v1298 = vmax.f32 %v1234, %v1266
      %v1299 = vmax.f32 %v1235, %v1267
      %v1300 = vmax.f32 %v1236, %v1268
      %v1301 = vmax.f32 %v1237, %v1269
      %v1302 = vmax.f32 %v1238, %v1270
      %v1303 = vmax.f32 %v1239, %v1271
      %v1304 = vmax.f32 %v1240, %v1272
      %v1305 = vmax.f32 %v1241, %v1273
      %v1306 = vmax.f32 %v1242, %v1274
      %v1307 = vpack.c.bf16 %v1275, %v1275
      %v1308 = vpack.c.bf16 %v1276, %v1276
      %v1309 = vpack.c.bf16 %v1277, %v1277
      %v1310 = vpack.c.bf16 %v1278, %v1278
      %v1311 = vpack.c.bf16 %v1279, %v1279
      %v1312 = vpack.c.bf16 %v1280, %v1280
      %v1313 = vpack.c.bf16 %v1281, %v1281
      %v1314 = vpack.c.bf16 %v1282, %v1282
      %v1315 = vpack.c.bf16 %v1283, %v1283
      %v1316 = vpack.c.bf16 %v1284, %v1284
      %v1317 = vpack.c.bf16 %v1285, %v1285
      %v1318 = vpack.c.bf16 %v1286, %v1286
      %v1319 = vpack.c.bf16 %v1287, %v1287
      %v1320 = vpack.c.bf16 %v1288, %v1288
      %v1321 = vpack.c.bf16 %v1289, %v1289
      %v1322 = vpack.c.bf16 %v1290, %v1290
      %v1323 = vpack.c.bf16 %v1291, %v1291
      %v1324 = vpack.c.bf16 %v1292, %v1292
      %v1325 = vpack.c.bf16 %v1293, %v1293
      %v1326 = vpack.c.bf16 %v1294, %v1294
      %v1327 = vpack.c.bf16 %v1295, %v1295
      %v1328 = vpack.c.bf16 %v1296, %v1296
      %v1329 = vpack.c.bf16 %v1297, %v1297
      %v1330 = vpack.c.bf16 %v1298, %v1298
      %v1331 = vpack.c.bf16 %v1299, %v1299
      %v1332 = vpack.c.bf16 %v1300, %v1300
      %v1333 = vpack.c.bf16 %v1301, %v1301
      %v1334 = vpack.c.bf16 %v1302, %v1302
      %v1335 = vpack.c.bf16 %v1303, %v1303
      %v1336 = vpack.c.bf16 %v1304, %v1304
      %v1337 = vpack.c.bf16 %v1305, %v1305
      %v1338 = vpack.c.bf16 %v1306, %v1306
      %vm1339 = vcmask 125952
      %1340 = vst.msk [vmem:[%s172] sm:$0xf] %vm1339, %v1307
      %1341 = vst.msk [vmem:[%s172 + $0x4] sm:$0xf] %vm1339, %v1308
      %1342 = vst.msk [vmem:[%s172 + $0x8] sm:$0xf] %vm1339, %v1309
      %1343 = vst.msk [vmem:[%s172 + $0xc] sm:$0xf] %vm1339, %v1310
      %1344 = vst.msk [vmem:[%s172 + $0x10] sm:$0xf] %vm1339, %v1311
      %1345 = vst.msk [vmem:[%s172 + $0x14] sm:$0xf] %vm1339, %v1312
      %1346 = vst.msk [vmem:[%s172 + $0x18] sm:$0xf] %vm1339, %v1313
      %1347 = vst.msk [vmem:[%s172 + $0x1c] sm:$0xf] %vm1339, %v1314
      %1348 = vst.msk [vmem:[%s172 + $0x20] sm:$0xf] %vm1339, %v1315
      %1349 = vst.msk [vmem:[%s172 + $0x24] sm:$0xf] %vm1339, %v1316
      %1350 = vst.msk [vmem:[%s172 + $0x28] sm:$0xf] %vm1339, %v1317
      %1351 = vst.msk [vmem:[%s172 + $0x2c] sm:$0xf] %vm1339, %v1318
      %1352 = vst.msk [vmem:[%s172 + $0x30] sm:$0xf] %vm1339, %v1319
      %1353 = vst.msk [vmem:[%s172 + $0x34] sm:$0xf] %vm1339, %v1320
      %1354 = vst.msk [vmem:[%s172 + $0x38] sm:$0xf] %vm1339, %v1321
      %1355 = vst.msk [vmem:[%s172 + $0x3c] sm:$0xf] %vm1339, %v1322
      %1356 = vst.msk [vmem:[%s172 + $0x40] sm:$0xf] %vm1339, %v1323
      %1357 = vst.msk [vmem:[%s172 + $0x44] sm:$0xf] %vm1339, %v1324
      %1358 = vst.msk [vmem:[%s172 + $0x48] sm:$0xf] %vm1339, %v1325
      %1359 = vst.msk [vmem:[%s172 + $0x4c] sm:$0xf] %vm1339, %v1326
      %1360 = vst.msk [vmem:[%s172 + $0x50] sm:$0xf] %vm1339, %v1327
      %1361 = vst.msk [vmem:[%s172 + $0x54] sm:$0xf] %vm1339, %v1328
      %1362 = vst.msk [vmem:[%s172 + $0x58] sm:$0xf] %vm1339, %v1329
      %1363 = vst.msk [vmem:[%s172 + $0x5c] sm:$0xf] %vm1339, %v1330
      %1364 = vst.msk [vmem:[%s172 + $0x60] sm:$0xf] %vm1339, %v1331
      %1365 = vst.msk [vmem:[%s172 + $0x64] sm:$0xf] %vm1339, %v1332
      %1366 = vst.msk [vmem:[%s172 + $0x68] sm:$0xf] %vm1339, %v1333
      %1367 = vst.msk [vmem:[%s172 + $0x6c] sm:$0xf] %vm1339, %v1334
      %1368 = vst.msk [vmem:[%s172 + $0x70] sm:$0xf] %vm1339, %v1335
      %1369 = vst.msk [vmem:[%s172 + $0x74] sm:$0xf] %vm1339, %v1336
      %1370 = vst.msk [vmem:[%s172 + $0x78] sm:$0xf] %vm1339, %v1337
      %1371 = vst.msk [vmem:[%s172 + $0x7c] sm:$0xf] %vm1339, %v1338
      %s1372 = smul.u32 32, %s14
      %p1373 = scmp.lt.s32.totalorder %s1372, 63
      %s1374 = scalar_select %p1373, %s1372, 63
      %s1375 = smul.addr %s1374, 4
      %s1376 = scalar_lea.vmem %s3, %s1375
      // Predicated region
      $region33: #{forward.3} parent=31 // pred_check
        %p1377 = pneg %p100
      $region34: #{forward.3} parent=31 // pred_check_branch
        %1379 = sbr.rel (%p1377) target = $region36
      $region35: #{forward.3} parent=31 // pred_region
        %s1380 = smul.u32 32, %s14
      $region36: #{forward.3} parent=31 // pred_fallthru
        _
    $region32: #{forward.3} parent=5 // pred_fallthru
      _
    %p1381 = scmp.le.s32.totalorder 2, %s9
    // Predicated region
    $region37: #{forward.3} parent=5 // pred_check
      %p1382 = pneg %p1381
    $region38: #{forward.3} parent=5 // pred_check_branch
      %1384 = sbr.rel (%p1382) target = $region40
    $region39: #{forward.3} parent=5 // pred_region
      %s1385 = ssub.s32 %s9, 2
      // Predicated region
      $region41: #{forward.3} parent=39 // pred_check
        %p1386 = pneg %p106
      $region42: #{forward.3} parent=39 // pred_check_branch
        %1388 = sbr.rel (%p1386) target = $region44
      $region43: #{forward.3} parent=39 // pred_region
        %s1389 = smul.u32 32, %s15
        %p1390 = scmp.lt.s32.totalorder %s1389, 63
        %s1391 = scalar_select %p1390, %s1389, 63
        %s1392 = smul.addr %s1391, 4
        %s1393 = scalar_lea.vmem %s3, %s1392
      $region44: #{forward.3} parent=39 // pred_fallthru
        _
    $region40: #{forward.3} parent=5 // pred_fallthru
      _
  $region6: #{forward.3} parent=0 // loop_footer
    %s13 = sadd.s32 1, %s9
  $region7: #{forward.3} parent=0 // loop_footer_branch
    %8 = sbr.rel target = $region3
  $region8: #{forward.3} parent=0 // loop_exit
    _

// kernel: forward.4
$region0: #{forward.4}
  #allocation0 [shape = 'u32[]', space=smem, size = 0x4, offset = 0x4, fixed_abs, tag = 'smem constant byte address 0x4 - core index']
  #allocation1 [shape = 'u32[72,128]{1,0:T(1,128)}', space=vmem, size = 0x9000, scoped, tag = 'internal scratch']
  %s0 = inlined_call_operand.vmem [shape: bf16[128,512], index: 0, kind: input, shape index: {}]
  %s1 = inlined_call_operand.vmem [shape: bf16[512,64], index: 1, kind: input, shape index: {}]
  %s2 = inlined_call_operand.vmem [shape: f32[1,64], index: 2, kind: input, shape index: {}]
  %s3 = inlined_call_operand.vmem [shape: bf16[32,64], index: 3, kind: output, shape index: {}]
  %s4 = sld [smem:[#allocation0]]
  $region45: #{forward.4} parent=0
    _
  %s6 = ssub.s32 1, %s4
  %s7 = scalar_select 0, %s6, %s4
  loop: start=0, step=1, limit=4
  $region2: #{forward.4} parent=0 // loop_pre_header
    _
  $region3: #{forward.4} parent=0 // loop_header
    %s9 = sphi 0, %s13
    %p10 = scmp.ge.s32.totalorder %s9, 4
    %s19 = sphi 0, %s21
    %s22 = sphi 0, %s19
    %s23 = sphi 0, %s22
    %s39 = sphi 0, %s23
    %s43 = sphi 0, %s43
    %s45 = sphi 0, %s43
    %s46 = sphi 0, %s45
    %s60 = sphi 0, %s46
    %s64 = sphi 0, %s64
    %s66 = sphi 0, %s64
    %s67 = sphi 0, %s66
    %s81 = sphi 0, %s67
    %s87 = sphi 0, %s89
    %s90 = sphi 0, %s87
    %s91 = sphi 0, %s90
    %s107 = sphi 0, %s91
  $region4: #{forward.4} parent=0 // loop_header_branch
    %12 = sbr.rel (%p10) target = $region8
  $region5: #{forward.4} parent=0 // loop_body
    %s14 = ssub.s32 %s9, 1
    %s15 = ssub.s32 %s9, 2
    %s16 = sadd.s32 %s9, 1
    %s17 = ssub.s32 %s9, %s16
    %p18 = scmp.eq.s32.totalorder %s17, 0
    %s20 = sadd.s32 %s19, 1
    %s21 = scalar_select %p18, %s19, %s20
    %p24 = pneg %p18
    %p25 = scmp.eq.s32.totalorder %s9, 1
    %p26 = por %p24, %p25
    %p27 = scmp.ne.s32.totalorder %s19, %s22
    %p28 = scmp.eq.s32.totalorder %s9, 0
    %p29 = por %p27, %p28
    %p30 = scmp.ne.s32.totalorder %s19, %s22
    %p31 = scmp.eq.s32.totalorder %s14, 1
    %p32 = por %p30, %p31
    %p33 = scmp.ne.s32.totalorder %s22, %s23
    %p34 = scmp.eq.s32.totalorder %s14, 0
    %p35 = por %p33, %p34
    %p36 = scmp.ne.s32.totalorder %s22, %s23
    %p37 = scmp.eq.s32.totalorder %s15, 1
    %p38 = por %p36, %p37
    %p40 = scmp.ne.s32.totalorder %s23, %s39
    %p41 = scmp.eq.s32.totalorder %s15, 0
    %p42 = por %p40, %p41
    %s44 = sadd.s32 %s43, 1
    %p47 = scmp.eq.s32.totalorder %s9, 1
    %p48 = scmp.ne.s32.totalorder %s43, %s45
    %p49 = scmp.eq.s32.totalorder %s9, 0
    %p50 = por %p48, %p49
    %p51 = scmp.ne.s32.totalorder %s43, %s45
    %p52 = scmp.eq.s32.totalorder %s14, 1
    %p53 = por %p51, %p52
    %p54 = scmp.ne.s32.totalorder %s45, %s46
    %p55 = scmp.eq.s32.totalorder %s14, 0
    %p56 = por %p54, %p55
    %p57 = scmp.ne.s32.totalorder %s45, %s46
    %p58 = scmp.eq.s32.totalorder %s15, 1
    %p59 = por %p57, %p58
    %p61 = scmp.ne.s32.totalorder %s46, %s60
    %p62 = scmp.eq.s32.totalorder %s15, 0
    %p63 = por %p61, %p62
    %s65 = sadd.s32 %s64, 1
    %p68 = scmp.eq.s32.totalorder %s9, 1
    %p69 = scmp.ne.s32.totalorder %s64, %s66
    %p70 = scmp.eq.s32.totalorder %s9, 0
    %p71 = por %p69, %p70
    %p72 = scmp.ne.s32.totalorder %s64, %s66
    %p73 = scmp.eq.s32.totalorder %s14, 1
    %p74 = por %p72, %p73
    %p75 = scmp.ne.s32.totalorder %s66, %s67
    %p76 = scmp.eq.s32.totalorder %s14, 0
    %p77 = por %p75, %p76
    %p78 = scmp.ne.s32.totalorder %s66, %s67
    %p79 = scmp.eq.s32.totalorder %s15, 1
    %p80 = por %p78, %p79
    %p82 = scmp.ne.s32.totalorder %s67, %s81
    %p83 = scmp.eq.s32.totalorder %s15, 0
    %p84 = por %p82, %p83
    %s85 = ssub.s32 %s9, %s16
    %p86 = scmp.eq.s32.totalorder %s85, 0
    %s88 = sadd.s32 %s87, 1
    %s89 = scalar_select %p86, %s87, %s88
    %p92 = pneg %p86
    %p93 = scmp.eq.s32.totalorder %s9, 1
    %p94 = por %p92, %p93
    %p95 = scmp.ne.s32.totalorder %s87, %s90
    %p96 = scmp.eq.s32.totalorder %s9, 0
    %p97 = por %p95, %p96
    %p98 = scmp.ne.s32.totalorder %s87, %s90
    %p99 = scmp.eq.s32.totalorder %s14, 1
    %p100 = por %p98, %p99
    %p101 = scmp.ne.s32.totalorder %s90, %s91
    %p102 = scmp.eq.s32.totalorder %s14, 0
    %p103 = por %p101, %p102
    %p104 = scmp.ne.s32.totalorder %s90, %s91
    %p105 = scmp.eq.s32.totalorder %s15, 1
    %p106 = por %p104, %p105
    %p108 = scmp.ne.s32.totalorder %s91, %s107
    %p109 = scmp.eq.s32.totalorder %s15, 0
    %p110 = por %p108, %p109
    %p111 = scmp.le.s32.totalorder 1, %s9
    %p112 = scmp.lt.s32.totalorder %s9, 3
    %p113 = pnand %p111, %p112
    %p114 = pneg %p113
    // Predicated region
    $region9: #{forward.4} parent=5 // pred_check
      _
    $region10: #{forward.4} parent=5 // pred_check_branch
      %116 = sbr.rel (%p113) target = $region12
    $region11: #{forward.4} parent=5 // pred_region
      %s117 = ssub.s32 %s9, 1
      // Predicated region
      $region13: #{forward.4} parent=11 // pred_check
        %p118 = pneg %p56
      $region14: #{forward.4} parent=11 // pred_check_branch
        %120 = sbr.rel (%p118) target = $region16
      $region15: #{forward.4} parent=11 // pred_region
        _
      $region16: #{forward.4} parent=11 // pred_fallthru
        _
      // Predicated region
      $region17: #{forward.4} parent=11 // pred_check
        %p121 = pneg %p77
      $region18: #{forward.4} parent=11 // pred_check_branch
        %123 = sbr.rel (%p121) target = $region20
      $region19: #{forward.4} parent=11 // pred_region
        _
      $region20: #{forward.4} parent=11 // pred_fallthru
        _
    $region12: #{forward.4} parent=5 // pred_fallthru
      _
    %p124 = scmp.lt.s32.totalorder %s9, 2
    // Predicated region
    $region21: #{forward.4} parent=5 // pred_check
      %p125 = pneg %p124
    $region22: #{forward.4} parent=5 // pred_check_branch
      %127 = sbr.rel (%p125) target = $region24
    $region23: #{forward.4} parent=5 // pred_region
      // Predicated region
      $region25: #{forward.4} parent=23 // pred_check
        %p128 = pneg %p29
      $region26: #{forward.4} parent=23 // pred_check_branch
        %130 = sbr.rel (%p128) target = $region28
      $region27: #{forward.4} parent=23 // pred_region
        %s131 = smul.u32 8, %s9
        %p132 = scmp.lt.s32.totalorder %s131, 15
        %s133 = scalar_select %p132, %s131, 15
        %s134 = smul.addr %s133, 4
        %s135 = smul.addr %s134, 4
        %s136 = scalar_lea.vmem %s0, %s135
        %s137 = smul.u32 8, %s9
      $region28: #{forward.4} parent=23 // pred_fallthru
        _
    $region24: #{forward.4} parent=5 // pred_fallthru
      _
    %p138 = scmp.le.s32.totalorder 1, %s9
    %p139 = scmp.lt.s32.totalorder %s9, 3
    %p140 = pnand %p138, %p139
    %p141 = pneg %p140
    // Predicated region
    $region29: #{forward.4} parent=5 // pred_check
      _
    $region30: #{forward.4} parent=5 // pred_check_branch
      %143 = sbr.rel (%p140) target = $region32
    $region31: #{forward.4} parent=5 // pred_region
      %s144 = ssub.s32 %s9, 1
      %s145 = smul.u32 8, %s14
      %p146 = scmp.lt.s32.totalorder %s145, 15
      %s147 = scalar_select %p146, %s145, 15
      %s148 = smul.addr %s147, 4
      %s149 = smul.addr %s148, 4
      %s150 = scalar_lea.vmem %s0, %s149
      %p151 = pneg %p35
      %p152 = pneg %p32
      %p153 = pneg %p56
      %p154 = pneg %p53
      %p155 = pneg %p77
      %p156 = pneg %p74
      %p157 = pneg %p103
      %p158 = pneg %p100
      %s159 = smul.u32 2, %s14
      %p160 = scmp.lt.s32.totalorder %s159, 3
      %s161 = scalar_select %p160, %s159, 3
      %s162 = smul.addr %s161, 4
      %s163 = scalar_lea.vmem %s3, %s162
      %s164 = smul.u32 8, %s14
      %p165 = scmp.lt.s32.totalorder %s164, 15
      %s166 = scalar_select %p165, %s164, 15
      %s167 = smul.addr %s166, 4
      %s168 = smul.addr %s167, 4
      %s169 = scalar_lea.vmem %s0, %s168
      %s170 = smul.u32 8, %s14
      %s171 = smul.u32 2, %s14
      %p172 = scmp.lt.s32.totalorder %s171, 3
      %s173 = scalar_select %p172, %s171, 3
      %s174 = smul.addr %s173, 4
      %s175 = scalar_lea.vmem %s3, %s174
      %s176 = smul.u32 2, %s14
      %v177 = vld [vmem:[%s169] sm:$0xff]
      %v178 = vld [vmem:[%s169 + $0x8] sm:$0xff]
      %v179 = vld [vmem:[%s169 + $0x10] sm:$0xff]
      %v180 = vld [vmem:[%s169 + $0x18] sm:$0xff]
      %v181 = vld [vmem:[%s169 + $0x20] sm:$0xff]
      %v182 = vld [vmem:[%s169 + $0x28] sm:$0xff]
      %v183 = vld [vmem:[%s169 + $0x30] sm:$0xff]
      %v184 = vld [vmem:[%s169 + $0x38] sm:$0xff]
      %v185 = vld [vmem:[%s169 + $0x40] sm:$0xff]
      %v186 = vld [vmem:[%s169 + $0x48] sm:$0xff]
      %v187 = vld [vmem:[%s169 + $0x50] sm:$0xff]
      %v188 = vld [vmem:[%s169 + $0x58] sm:$0xff]
      %v189 = vld [vmem:[%s169 + $0x60] sm:$0xff]
      %v190 = vld [vmem:[%s169 + $0x68] sm:$0xff]
      %v191 = vld [vmem:[%s169 + $0x70] sm:$0xff]
      %v192 = vld [vmem:[%s169 + $0x78] sm:$0xff]
      %v193 = vld [vmem:[%s1] sm:$0xf]
      %v194 = vld [vmem:[%s1 + $0x4] sm:$0xf]
      %v195 = vld [vmem:[%s1 + $0x8] sm:$0xf]
      %v196 = vld [vmem:[%s1 + $0xc] sm:$0xf]
      %v197 = vld [vmem:[%s1 + $0x10] sm:$0xf]
      %v198 = vld [vmem:[%s1 + $0x14] sm:$0xf]
      %v199 = vld [vmem:[%s1 + $0x18] sm:$0xf]
      %v200 = vld [vmem:[%s1 + $0x1c] sm:$0xf]
      %v201 = vld [vmem:[%s1 + $0x20] sm:$0xf]
      %v202 = vld [vmem:[%s1 + $0x24] sm:$0xf]
      %v203 = vld [vmem:[%s1 + $0x28] sm:$0xf]
      %v204 = vld [vmem:[%s1 + $0x2c] sm:$0xf]
      %v205 = vld [vmem:[%s1 + $0x30] sm:$0xf]
      %v206 = vld [vmem:[%s1 + $0x34] sm:$0xf]
      %v207 = vld [vmem:[%s1 + $0x38] sm:$0xf]
      %v208 = vld [vmem:[%s1 + $0x3c] sm:$0xf]
      %v209 = vld [vmem:[%s1 + $0x40] sm:$0xf]
      %v210 = vld [vmem:[%s1 + $0x44] sm:$0xf]
      %v211 = vld [vmem:[%s1 + $0x48] sm:$0xf]
      %v212 = vld [vmem:[%s1 + $0x4c] sm:$0xf]
      %v213 = vld [vmem:[%s1 + $0x50] sm:$0xf]
      %v214 = vld [vmem:[%s1 + $0x54] sm:$0xf]
      %v215 = vld [vmem:[%s1 + $0x58] sm:$0xf]
      %v216 = vld [vmem:[%s1 + $0x5c] sm:$0xf]
      %v217 = vld [vmem:[%s1 + $0x60] sm:$0xf]
      %v218 = vld [vmem:[%s1 + $0x64] sm:$0xf]
      %v219 = vld [vmem:[%s1 + $0x68] sm:$0xf]
      %v220 = vld [vmem:[%s1 + $0x6c] sm:$0xf]
      %v221 = vld [vmem:[%s1 + $0x70] sm:$0xf]
      %v222 = vld [vmem:[%s1 + $0x74] sm:$0xf]
      %v223 = vld [vmem:[%s1 + $0x78] sm:$0xf]
      %v224 = vld [vmem:[%s1 + $0x7c] sm:$0xf]
      %v225 = vld [vmem:[%s1 + $0x80] sm:$0xf]
      %v226 = vld [vmem:[%s1 + $0x84] sm:$0xf]
      %v227 = vld [vmem:[%s1 + $0x88] sm:$0xf]
      %v228 = vld [vmem:[%s1 + $0x8c] sm:$0xf]
      %v229 = vld [vmem:[%s1 + $0x90] sm:$0xf]
      %v230 = vld [vmem:[%s1 + $0x94] sm:$0xf]
      %v231 = vld [vmem:[%s1 + $0x98] sm:$0xf]
      %v232 = vld [vmem:[%s1 + $0x9c] sm:$0xf]
      %v233 = vld [vmem:[%s1 + $0xa0] sm:$0xf]
      %v234 = vld [vmem:[%s1 + $0xa4] sm:$0xf]
      %v235 = vld [vmem:[%s1 + $0xa8] sm:$0xf]
      %v236 = vld [vmem:[%s1 + $0xac] sm:$0xf]
      %v237 = vld [vmem:[%s1 + $0xb0] sm:$0xf]
      %v238 = vld [vmem:[%s1 + $0xb4] sm:$0xf]
      %v239 = vld [vmem:[%s1 + $0xb8] sm:$0xf]
      %v240 = vld [vmem:[%s1 + $0xbc] sm:$0xf]
      %v241 = vld [vmem:[%s1 + $0xc0] sm:$0xf]
      %v242 = vld [vmem:[%s1 + $0xc4] sm:$0xf]
      %v243 = vld [vmem:[%s1 + $0xc8] sm:$0xf]
      %v244 = vld [vmem:[%s1 + $0xcc] sm:$0xf]
      %v245 = vld [vmem:[%s1 + $0xd0] sm:$0xf]
      %v246 = vld [vmem:[%s1 + $0xd4] sm:$0xf]
      %v247 = vld [vmem:[%s1 + $0xd8] sm:$0xf]
      %v248 = vld [vmem:[%s1 + $0xdc] sm:$0xf]
      %v249 = vld [vmem:[%s1 + $0xe0] sm:$0xf]
      %v250 = vld [vmem:[%s1 + $0xe4] sm:$0xf]
      %v251 = vld [vmem:[%s1 + $0xe8] sm:$0xf]
      %v252 = vld [vmem:[%s1 + $0xec] sm:$0xf]
      %v253 = vld [vmem:[%s1 + $0xf0] sm:$0xf]
      %v254 = vld [vmem:[%s1 + $0xf4] sm:$0xf]
      %v255 = vld [vmem:[%s1 + $0xf8] sm:$0xf]
      %v256 = vld [vmem:[%s1 + $0xfc] sm:$0xf]
      %v257 = vld [vmem:[%s2] sm:$0x1]
      %v259 = vperm.slane %v257, 0
      %v277 = vunpack.c.l.b16 %v177
      %v278 = vunpack.c.h.b16 %v177
      %v279 = vunpack.c.l.b16 %v178
      %v280 = vunpack.c.h.b16 %v178
      %v281 = vunpack.c.l.b16 %v179
      %v282 = vunpack.c.h.b16 %v179
      %v283 = vunpack.c.l.b16 %v180
      %v284 = vunpack.c.h.b16 %v180
      %v285 = vunpack.c.l.b16 %v181
      %v286 = vunpack.c.h.b16 %v181
      %v287 = vunpack.c.l.b16 %v182
      %v288 = vunpack.c.h.b16 %v182
      %v289 = vunpack.c.l.b16 %v183
      %v290 = vunpack.c.h.b16 %v183
      %v291 = vunpack.c.l.b16 %v184
      %v292 = vunpack.c.h.b16 %v184
      %v293 = vunpack.c.l.b16 %v185
      %v294 = vunpack.c.h.b16 %v185
      %v295 = vunpack.c.l.b16 %v186
      %v296 = vunpack.c.h.b16 %v186
      %v297 = vunpack.c.l.b16 %v187
      %v298 = vunpack.c.h.b16 %v187
      %v299 = vunpack.c.l.b16 %v188
      %v300 = vunpack.c.h.b16 %v188
      %v301 = vunpack.c.l.b16 %v189
      %v302 = vunpack.c.h.b16 %v189
      %v303 = vunpack.c.l.b16 %v190
      %v304 = vunpack.c.h.b16 %v190
      %v305 = vunpack.c.l.b16 %v191
      %v306 = vunpack.c.h.b16 %v191
      %v307 = vunpack.c.l.b16 %v192
      %v308 = vunpack.c.h.b16 %v192
      %v309 = vpack.c.b16 %v281, %v277
      %v310 = vpack.c.b16 %v282, %v278
      %v311 = vpack.c.b16 %v283, %v279
      %v312 = vpack.c.b16 %v284, %v280
      %v313 = vpack.c.b16 %v289, %v285
      %v314 = vpack.c.b16 %v290, %v286
      %v315 = vpack.c.b16 %v291, %v287
      %v316 = vpack.c.b16 %v292, %v288
      %v317 = vpack.c.b16 %v297, %v293
      %v318 = vpack.c.b16 %v298, %v294
      %v319 = vpack.c.b16 %v299, %v295
      %v320 = vpack.c.b16 %v300, %v296
      %v321 = vpack.c.b16 %v305, %v301
      %v322 = vpack.c.b16 %v306, %v302
      %v323 = vpack.c.b16 %v307, %v303
      %v324 = vpack.c.b16 %v308, %v304
      %v405 = vunpack.c.l.b16 %v193
      %v406 = vunpack.c.l.b16 %v194
      %v407 = vunpack.c.l.b16 %v195
      %v408 = vunpack.c.l.b16 %v196
      %v409 = vunpack.c.l.b16 %v197
      %v410 = vunpack.c.l.b16 %v198
      %v411 = vunpack.c.l.b16 %v199
      %v412 = vunpack.c.l.b16 %v200
      %v413 = vunpack.c.l.b16 %v201
      %v414 = vunpack.c.l.b16 %v202
      %v415 = vunpack.c.l.b16 %v203
      %v416 = vunpack.c.l.b16 %v204
      %v417 = vunpack.c.l.b16 %v205
      %v418 = vunpack.c.l.b16 %v206
      %v419 = vunpack.c.l.b16 %v207
      %v420 = vunpack.c.l.b16 %v208
      %v421 = vunpack.c.l.b16 %v209
      %v422 = vunpack.c.l.b16 %v210
      %v423 = vunpack.c.l.b16 %v211
      %v424 = vunpack.c.l.b16 %v212
      %v425 = vunpack.c.l.b16 %v213
      %v426 = vunpack.c.l.b16 %v214
      %v427 = vunpack.c.l.b16 %v215
      %v428 = vunpack.c.l.b16 %v216
      %v429 = vunpack.c.l.b16 %v217
      %v430 = vunpack.c.l.b16 %v218
      %v431 = vunpack.c.l.b16 %v219
      %v432 = vunpack.c.l.b16 %v220
      %v433 = vunpack.c.l.b16 %v221
      %v434 = vunpack.c.l.b16 %v222
      %v435 = vunpack.c.l.b16 %v223
      %v436 = vunpack.c.l.b16 %v224
      %v437 = vunpack.c.l.b16 %v225
      %v438 = vunpack.c.l.b16 %v226
      %v439 = vunpack.c.l.b16 %v227
      %v440 = vunpack.c.l.b16 %v228
      %v441 = vunpack.c.l.b16 %v229
      %v442 = vunpack.c.l.b16 %v230
      %v443 = vunpack.c.l.b16 %v231
      %v444 = vunpack.c.l.b16 %v232
      %v445 = vunpack.c.l.b16 %v233
      %v446 = vunpack.c.l.b16 %v234
      %v447 = vunpack.c.l.b16 %v235
      %v448 = vunpack.c.l.b16 %v236
      %v449 = vunpack.c.l.b16 %v237
      %v450 = vunpack.c.l.b16 %v238
      %v451 = vunpack.c.l.b16 %v239
      %v452 = vunpack.c.l.b16 %v240
      %v453 = vunpack.c.l.b16 %v241
      %v454 = vunpack.c.l.b16 %v242
      %v455 = vunpack.c.l.b16 %v243
      %v456 = vunpack.c.l.b16 %v244
      %v457 = vunpack.c.l.b16 %v245
      %v458 = vunpack.c.l.b16 %v246
      %v459 = vunpack.c.l.b16 %v247
      %v460 = vunpack.c.l.b16 %v248
      %v461 = vunpack.c.l.b16 %v249
      %v462 = vunpack.c.l.b16 %v250
      %v463 = vunpack.c.l.b16 %v251
      %v464 = vunpack.c.l.b16 %v252
      %v465 = vunpack.c.l.b16 %v253
      %v466 = vunpack.c.l.b16 %v254
      %v467 = vunpack.c.l.b16 %v255
      %v468 = vunpack.c.l.b16 %v256
      %v469 = vpack.c.b16 %v406, %v405
      %v470 = vpack.c.b16 %v408, %v407
      %v471 = vpack.c.b16 %v410, %v409
      %v472 = vpack.c.b16 %v412, %v411
      %v473 = vpack.c.b16 %v414, %v413
      %v474 = vpack.c.b16 %v416, %v415
      %v475 = vpack.c.b16 %v418, %v417
      %v476 = vpack.c.b16 %v420, %v419
      %v477 = vpack.c.b16 %v422, %v421
      %v478 = vpack.c.b16 %v424, %v423
      %v479 = vpack.c.b16 %v426, %v425
      %v480 = vpack.c.b16 %v428, %v427
      %v481 = vpack.c.b16 %v430, %v429
      %v482 = vpack.c.b16 %v432, %v431
      %v483 = vpack.c.b16 %v434, %v433
      %v484 = vpack.c.b16 %v436, %v435
      %v485 = vpack.c.b16 %v438, %v437
      %v486 = vpack.c.b16 %v440, %v439
      %v487 = vpack.c.b16 %v442, %v441
      %v488 = vpack.c.b16 %v444, %v443
      %v489 = vpack.c.b16 %v446, %v445
      %v490 = vpack.c.b16 %v448, %v447
      %v491 = vpack.c.b16 %v450, %v449
      %v492 = vpack.c.b16 %v452, %v451
      %v493 = vpack.c.b16 %v454, %v453
      %v494 = vpack.c.b16 %v456, %v455
      %v495 = vpack.c.b16 %v458, %v457
      %v496 = vpack.c.b16 %v460, %v459
      %v497 = vpack.c.b16 %v462, %v461
      %v498 = vpack.c.b16 %v464, %v463
      %v499 = vpack.c.b16 %v466, %v465
      %v500 = vpack.c.b16 %v468, %v467
      %533 = vmatpush.bf16.msra.mxu0 %v476
      %534 = vmatpush.bf16.msra.mxu0 %v475
      %535 = vmatpush.bf16.msra.mxu0 %v474
      %536 = vmatpush.bf16.msra.mxu0 %v473
      %537 = vmatpush.bf16.msra.mxu0 %v472
      %538 = vmatpush.bf16.msra.mxu0 %v471
      %539 = vmatpush.bf16.msra.mxu0 %v470
      %540 = vmatpush.bf16.msra.mxu0 %v469
      %541 = vmatmul.bf16.gmra.mxu0 %v309
      %v542 = vpop.f32.mrf.mxu0
      %v543 = vadd.f32 %v259, %v542
      %v544 = vpop.f32.mrf.mxu0
      %v545 = vadd.f32 %v259, %v544
      %546 = vmatmul.bf16.gmra.mxu0 %v313
      %v547 = vpop.f32.mrf.mxu0
      %v548 = vadd.f32 %v259, %v547
      %v549 = vpop.f32.mrf.mxu0
      %v550 = vadd.f32 %v259, %v549
      %551 = vmatmul.bf16.gmra.mxu0 %v317
      %v552 = vpop.f32.mrf.mxu0
      %v553 = vadd.f32 %v259, %v552
      %v554 = vpop.f32.mrf.mxu0
      %v555 = vadd.f32 %v259, %v554
      %556 = vmatmul.bf16.gmra.mxu0 %v321
      %v557 = vpop.f32.mrf.mxu0
      %v558 = vadd.f32 %v259, %v557
      %v559 = vpop.f32.mrf.mxu0
      %v560 = vadd.f32 %v259, %v559
      %561 = vdwg.mxu0
      %562 = vmatpush.bf16.msra.mxu0 %v484
      %563 = vmatpush.bf16.msra.mxu0 %v483
      %564 = vmatpush.bf16.msra.mxu0 %v482
      %565 = vmatpush.bf16.msra.mxu0 %v481
      %566 = vmatpush.bf16.msra.mxu0 %v480
      %567 = vmatpush.bf16.msra.mxu0 %v479
      %568 = vmatpush.bf16.msra.mxu0 %v478
      %569 = vmatpush.bf16.msra.mxu0 %v477
      %570 = vmatmul.bf16.gmra.mxu0 %v310
      %v571 = vpop.f32.mrf.mxu0
      %v572 = vadd.f32 %v543, %v571
      %v573 = vpop.f32.mrf.mxu0
      %v574 = vadd.f32 %v545, %v573
      %575 = vmatmul.bf16.gmra.mxu0 %v314
      %v576 = vpop.f32.mrf.mxu0
      %v577 = vadd.f32 %v548, %v576
      %v578 = vpop.f32.mrf.mxu0
      %v579 = vadd.f32 %v550, %v578
      %580 = vmatmul.bf16.gmra.mxu0 %v318
      %v581 = vpop.f32.mrf.mxu0
      %v582 = vadd.f32 %v553, %v581
      %v583 = vpop.f32.mrf.mxu0
      %v584 = vadd.f32 %v555, %v583
      %585 = vmatmul.bf16.gmra.mxu0 %v322
      %v586 = vpop.f32.mrf.mxu0
      %v587 = vadd.f32 %v558, %v586
      %v588 = vpop.f32.mrf.mxu0
      %v589 = vadd.f32 %v560, %v588
      %590 = vdwg.mxu0
      %591 = vmatpush.bf16.msra.mxu0 %v492
      %592 = vmatpush.bf16.msra.mxu0 %v491
      %593 = vmatpush.bf16.msra.mxu0 %v490
      %594 = vmatpush.bf16.msra.mxu0 %v489
      %595 = vmatpush.bf16.msra.mxu0 %v488
      %596 = vmatpush.bf16.msra.mxu0 %v487
      %597 = vmatpush.bf16.msra.mxu0 %v486
      %598 = vmatpush.bf16.msra.mxu0 %v485
      %599 = vmatmul.bf16.gmra.mxu0 %v311
      %v600 = vpop.f32.mrf.mxu0
      %v601 = vadd.f32 %v572, %v600
      %v602 = vpop.f32.mrf.mxu0
      %v603 = vadd.f32 %v574, %v602
      %604 = vmatmul.bf16.gmra.mxu0 %v315
      %v605 = vpop.f32.mrf.mxu0
      %v606 = vadd.f32 %v577, %v605
      %v607 = vpop.f32.mrf.mxu0
      %v608 = vadd.f32 %v579, %v607
      %609 = vmatmul.bf16.gmra.mxu0 %v319
      %v610 = vpop.f32.mrf.mxu0
      %v611 = vadd.f32 %v582, %v610
      %v612 = vpop.f32.mrf.mxu0
      %v613 = vadd.f32 %v584, %v612
      %614 = vmatmul.bf16.gmra.mxu0 %v323
      %v615 = vpop.f32.mrf.mxu0
      %v616 = vadd.f32 %v587, %v615
      %v617 = vpop.f32.mrf.mxu0
      %v618 = vadd.f32 %v589, %v617
      %619 = vdwg.mxu0
      %620 = vmatpush.bf16.msra.mxu0 %v500
      %621 = vmatpush.bf16.msra.mxu0 %v499
      %622 = vmatpush.bf16.msra.mxu0 %v498
      %623 = vmatpush.bf16.msra.mxu0 %v497
      %624 = vmatpush.bf16.msra.mxu0 %v496
      %625 = vmatpush.bf16.msra.mxu0 %v495
      %626 = vmatpush.bf16.msra.mxu0 %v494
      %627 = vmatpush.bf16.msra.mxu0 %v493
      %628 = vmatmul.bf16.gmra.mxu0 %v312
      %v629 = vpop.f32.mrf.mxu0
      %v630 = vadd.f32 %v601, %v629
      %v631 = vpop.f32.mrf.mxu0
      %v632 = vadd.f32 %v603, %v631
      %633 = vmatmul.bf16.gmra.mxu0 %v316
      %v634 = vpop.f32.mrf.mxu0
      %v635 = vadd.f32 %v606, %v634
      %v636 = vpop.f32.mrf.mxu0
      %v637 = vadd.f32 %v608, %v636
      %638 = vmatmul.bf16.gmra.mxu0 %v320
      %v639 = vpop.f32.mrf.mxu0
      %v640 = vadd.f32 %v611, %v639
      %v641 = vpop.f32.mrf.mxu0
      %v642 = vadd.f32 %v613, %v641
      %643 = vmatmul.bf16.gmra.mxu0 %v324
      %v644 = vpop.f32.mrf.mxu0
      %v645 = vadd.f32 %v616, %v644
      %v646 = vpop.f32.mrf.mxu0
      %v647 = vadd.f32 %v618, %v646
      %648 = vdwg.mxu0
      %v649 = vmax.f32 %v630, 0.0
      %v650 = vmax.f32 %v632, 0.0
      %v651 = vmax.f32 %v635, 0.0
      %v652 = vmax.f32 %v637, 0.0
      %v653 = vmax.f32 %v640, 0.0
      %v654 = vmax.f32 %v642, 0.0
      %v655 = vmax.f32 %v645, 0.0
      %v656 = vmax.f32 %v647, 0.0
      %v657 = vmax.f32 %v649, %v651
      %v658 = vmax.f32 %v650, %v652
      %v659 = vmax.f32 %v653, %v655
      %v660 = vmax.f32 %v654, %v656
      %v661 = vmax.f32 %v657, %v659
      %v662 = vmax.f32 %v658, %v660
      %v663 = vpack.c.bf16 %v661, %v661
      %v664 = vpack.c.bf16 %v662, %v662
      %vm665 = vcmask 519168
      %666 = vst.msk [vmem:[%s175] sm:$0xf] %vm665, %v663
      %667 = vst.msk [vmem:[%s175 + $0x4] sm:$0xf] %vm665, %v664
      %s668 = smul.u32 2, %s14
      %p669 = scmp.lt.s32.totalorder %s668, 3
      %s670 = scalar_select %p669, %s668, 3
      %s671 = smul.addr %s670, 4
      %s672 = scalar_lea.vmem %s3, %s671
      // Predicated region
      $region33: #{forward.4} parent=31 // pred_check
        %p673 = pneg %p100
      $region34: #{forward.4} parent=31 // pred_check_branch
        %675 = sbr.rel (%p673) target = $region36
      $region35: #{forward.4} parent=31 // pred_region
        %s676 = smul.u32 2, %s14
      $region36: #{forward.4} parent=31 // pred_fallthru
        _
    $region32: #{forward.4} parent=5 // pred_fallthru
      _
    %p677 = scmp.le.s32.totalorder 2, %s9
    // Predicated region
    $region37: #{forward.4} parent=5 // pred_check
      %p678 = pneg %p677
    $region38: #{forward.4} parent=5 // pred_check_branch
      %680 = sbr.rel (%p678) target = $region40
    $region39: #{forward.4} parent=5 // pred_region
      %s681 = ssub.s32 %s9, 2
      // Predicated region
      $region41: #{forward.4} parent=39 // pred_check
        %p682 = pneg %p106
      $region42: #{forward.4} parent=39 // pred_check_branch
        %684 = sbr.rel (%p682) target = $region44
      $region43: #{forward.4} parent=39 // pred_region
        %s685 = smul.u32 2, %s15
        %p686 = scmp.lt.s32.totalorder %s685, 3
        %s687 = scalar_select %p686, %s685, 3
        %s688 = smul.addr %s687, 4
        %s689 = scalar_lea.vmem %s3, %s688
      $region44: #{forward.4} parent=39 // pred_fallthru
        _
    $region40: #{forward.4} parent=5 // pred_fallthru
      _
  $region6: #{forward.4} parent=0 // loop_footer
    %s13 = sadd.s32 1, %s9
  $region7: #{forward.4} parent=0 // loop_footer_branch
    %8 = sbr.rel target = $region3
  $region8: #{forward.4} parent=0 // loop_exit
    _

// kernel: forward.5
$region0: #{forward.5}
  #allocation0 [shape = 'u32[]', space=smem, size = 0x4, offset = 0x4, fixed_abs, tag = 'smem constant byte address 0x4 - core index']
  #allocation1 [shape = 'u32[72,128]{1,0:T(1,128)}', space=vmem, size = 0x9000, scoped, tag = 'internal scratch']
  %s0 = inlined_call_operand.vmem [shape: bf16[4,16,1664], index: 0, kind: input, shape index: {}]
  %s1 = inlined_call_operand.vmem [shape: bf16[1664,128], index: 1, kind: input, shape index: {}]
  %s2 = inlined_call_operand.vmem [shape: f32[1,128], index: 2, kind: input, shape index: {}]
  %s3 = inlined_call_operand.vmem [shape: bf16[4,128,128], index: 3, kind: input, shape index: {}]
  %s4 = inlined_call_operand.vmem [shape: f32[1,128], index: 4, kind: input, shape index: {}]
  %s5 = inlined_call_operand.vmem [shape: bf16[128,256], index: 5, kind: input, shape index: {}]
  %s6 = inlined_call_operand.vmem [shape: f32[1,256], index: 6, kind: input, shape index: {}]
  %s7 = inlined_call_operand.vmem [shape: bf16[256,128], index: 7, kind: input, shape index: {}]
  %s8 = inlined_call_operand.vmem [shape: f32[1,128], index: 8, kind: input, shape index: {}]
  %s9 = inlined_call_operand.vmem [shape: f32[16,128], index: 9, kind: output, shape index: {}]
  %s10 = sld [smem:[#allocation0]]
  $region46: #{forward.5} parent=0
    _
  %s12 = ssub.s32 1, %s10
  %s13 = scalar_select 0, %s12, %s10
  // Predicated region
  $region2: #{forward.5} parent=0 // pred_check
    _
  $region3: #{forward.5} parent=0 // pred_check_branch
    %15 = sbr.rel (0) target = $region5
  $region4: #{forward.5} parent=0 // pred_region
    _
  $region5: #{forward.5} parent=0 // pred_fallthru
    _
  // Predicated region
  $region6: #{forward.5} parent=0 // pred_check
    _
  $region7: #{forward.5} parent=0 // pred_check_branch
    %17 = sbr.rel (0) target = $region9
  $region8: #{forward.5} parent=0 // pred_region
    _
  $region9: #{forward.5} parent=0 // pred_fallthru
    _
  // Predicated region
  $region10: #{forward.5} parent=0 // pred_check
    _
  $region11: #{forward.5} parent=0 // pred_check_branch
    %19 = sbr.rel (0) target = $region13
  $region12: #{forward.5} parent=0 // pred_region
    _
  $region13: #{forward.5} parent=0 // pred_fallthru
    _
  // Predicated region
  $region14: #{forward.5} parent=0 // pred_check
    _
  $region15: #{forward.5} parent=0 // pred_check_branch
    %21 = sbr.rel (0) target = $region17
  $region16: #{forward.5} parent=0 // pred_region
    _
  $region17: #{forward.5} parent=0 // pred_fallthru
    _
  // Predicated region
  $region18: #{forward.5} parent=0 // pred_check
    _
  $region19: #{forward.5} parent=0 // pred_check_branch
    %23 = sbr.rel (0) target = $region21
  $region20: #{forward.5} parent=0 // pred_region
    _
  $region21: #{forward.5} parent=0 // pred_fallthru
    _
  // Predicated region
  $region22: #{forward.5} parent=0 // pred_check
    _
  $region23: #{forward.5} parent=0 // pred_check_branch
    %25 = sbr.rel (0) target = $region25
  $region24: #{forward.5} parent=0 // pred_region
    _
  $region25: #{forward.5} parent=0 // pred_fallthru
    _
  // Predicated region
  $region26: #{forward.5} parent=0 // pred_check
    _
  $region27: #{forward.5} parent=0 // pred_check_branch
    %27 = sbr.rel (0) target = $region29
  $region28: #{forward.5} parent=0 // pred_region
    _
  $region29: #{forward.5} parent=0 // pred_fallthru
    _
  // Predicated region
  $region30: #{forward.5} parent=0 // pred_check
    _
  $region31: #{forward.5} parent=0 // pred_check_branch
    %29 = sbr.rel (0) target = $region33
  $region32: #{forward.5} parent=0 // pred_region
    _
  $region33: #{forward.5} parent=0 // pred_fallthru
    _
  // Predicated region
  $region34: #{forward.5} parent=0 // pred_check
    _
  $region35: #{forward.5} parent=0 // pred_check_branch
    %31 = sbr.rel (0) target = $region37
  $region36: #{forward.5} parent=0 // pred_region
    _
  $region37: #{forward.5} parent=0 // pred_fallthru
    _
  %v32 = vld [vmem:[%s4] sm:$0x1]
  %v33 = vld [vmem:[%s0] sm:$0xff]
  %v34 = vld [vmem:[%s0 + $0x8] sm:$0xff]
  %v35 = vld [vmem:[%s0 + $0x10] sm:$0xff]
  %v36 = vld [vmem:[%s0 + $0x18] sm:$0xff]
  %v37 = vld [vmem:[%s0 + $0x20] sm:$0xff]
  %v38 = vld [vmem:[%s0 + $0x28] sm:$0xff]
  %v39 = vld [vmem:[%s0 + $0x30] sm:$0xf]
  %v40 = vld [vmem:[%s0 + $0x34] sm:$0xff]
  %v41 = vld [vmem:[%s0 + $0x3c] sm:$0xff]
  %v42 = vld [vmem:[%s0 + $0x44] sm:$0xff]
  %v43 = vld [vmem:[%s0 + $0x4c] sm:$0xff]
  %v44 = vld [vmem:[%s0 + $0x54] sm:$0xff]
  %v45 = vld [vmem:[%s0 + $0x5c] sm:$0xff]
  %v46 = vld [vmem:[%s0 + $0x64] sm:$0xf]
  %v47 = vld [vmem:[%s1] sm:$0xf]
  %v48 = vld [vmem:[%s1 + $0x4] sm:$0xf]
  %v49 = vld [vmem:[%s1 + $0x8] sm:$0xf]
  %v50 = vld [vmem:[%s1 + $0xc] sm:$0xf]
  %v51 = vld [vmem:[%s1 + $0x10] sm:$0xf]
  %v52 = vld [vmem:[%s1 + $0x14] sm:$0xf]
  %v53 = vld [vmem:[%s1 + $0x18] sm:$0xf]
  %v54 = vld [vmem:[%s1 + $0x1c] sm:$0xf]
  %v55 = vld [vmem:[%s1 + $0x20] sm:$0xf]
  %v56 = vld [vmem:[%s1 + $0x24] sm:$0xf]
  %v57 = vld [vmem:[%s1 + $0x28] sm:$0xf]
  %v58 = vld [vmem:[%s1 + $0x2c] sm:$0xf]
  %v59 = vld [vmem:[%s1 + $0x30] sm:$0xf]
  %v60 = vld [vmem:[%s1 + $0x34] sm:$0xf]
  %v61 = vld [vmem:[%s1 + $0x38] sm:$0xf]
  %v62 = vld [vmem:[%s1 + $0x3c] sm:$0xf]
  %v63 = vld [vmem:[%s1 + $0x40] sm:$0xf]
  %v64 = vld [vmem:[%s1 + $0x44] sm:$0xf]
  %v65 = vld [vmem:[%s1 + $0x48] sm:$0xf]
  %v66 = vld [vmem:[%s1 + $0x4c] sm:$0xf]
  %v67 = vld [vmem:[%s1 + $0x50] sm:$0xf]
  %v68 = vld [vmem:[%s1 + $0x54] sm:$0xf]
  %v69 = vld [vmem:[%s1 + $0x58] sm:$0xf]
  %v70 = vld [vmem:[%s1 + $0x5c] sm:$0xf]
  %v71 = vld [vmem:[%s1 + $0x60] sm:$0xf]
  %v72 = vld [vmem:[%s1 + $0x64] sm:$0xf]
  %v73 = vld [vmem:[%s1 + $0x68] sm:$0xf]
  %v74 = vld [vmem:[%s1 + $0x6c] sm:$0xf]
  %v75 = vld [vmem:[%s1 + $0x70] sm:$0xf]
  %v76 = vld [vmem:[%s1 + $0x74] sm:$0xf]
  %v77 = vld [vmem:[%s1 + $0x78] sm:$0xf]
  %v78 = vld [vmem:[%s1 + $0x7c] sm:$0xf]
  %v79 = vld [vmem:[%s1 + $0x80] sm:$0xf]
  %v80 = vld [vmem:[%s1 + $0x84] sm:$0xf]
  %v81 = vld [vmem:[%s1 + $0x88] sm:$0xf]
  %v82 = vld [vmem:[%s1 + $0x8c] sm:$0xf]
  %v83 = vld [vmem:[%s1 + $0x90] sm:$0xf]
  %v84 = vld [vmem:[%s1 + $0x94] sm:$0xf]
  %v85 = vld [vmem:[%s1 + $0x98] sm:$0xf]
  %v86 = vld [vmem:[%s1 + $0x9c] sm:$0xf]
  %v87 = vld [vmem:[%s1 + $0xa0] sm:$0xf]
  %v88 = vld [vmem:[%s1 + $0xa4] sm:$0xf]
  %v89 = vld [vmem:[%s1 + $0xa8] sm:$0xf]
  %v90 = vld [vmem:[%s1 + $0xac] sm:$0xf]
  %v91 = vld [vmem:[%s1 + $0xb0] sm:$0xf]
  %v92 = vld [vmem:[%s1 + $0xb4] sm:$0xf]
  %v93 = vld [vmem:[%s1 + $0xb8] sm:$0xf]
  %v94 = vld [vmem:[%s1 + $0xbc] sm:$0xf]
  %v95 = vld [vmem:[%s1 + $0xc0] sm:$0xf]
  %v96 = vld [vmem:[%s1 + $0xc4] sm:$0xf]
  %v97 = vld [vmem:[%s1 + $0xc8] sm:$0xf]
  %v98 = vld [vmem:[%s1 + $0xcc] sm:$0xf]
  %v99 = vld [vmem:[%s1 + $0xd0] sm:$0xf]
  %v100 = vld [vmem:[%s1 + $0xd4] sm:$0xf]
  %v101 = vld [vmem:[%s1 + $0xd8] sm:$0xf]
  %v102 = vld [vmem:[%s1 + $0xdc] sm:$0xf]
  %v103 = vld [vmem:[%s1 + $0xe0] sm:$0xf]
  %v104 = vld [vmem:[%s1 + $0xe4] sm:$0xf]
  %v105 = vld [vmem:[%s1 + $0xe8] sm:$0xf]
  %v106 = vld [vmem:[%s1 + $0xec] sm:$0xf]
  %v107 = vld [vmem:[%s1 + $0xf0] sm:$0xf]
  %v108 = vld [vmem:[%s1 + $0xf4] sm:$0xf]
  %v109 = vld [vmem:[%s1 + $0xf8] sm:$0xf]
  %v110 = vld [vmem:[%s1 + $0xfc] sm:$0xf]
  %v111 = vld [vmem:[%s1 + $0x100] sm:$0xf]
  %v112 = vld [vmem:[%s1 + $0x104] sm:$0xf]
  %v113 = vld [vmem:[%s1 + $0x108] sm:$0xf]
  %v114 = vld [vmem:[%s1 + $0x10c] sm:$0xf]
  %v115 = vld [vmem:[%s1 + $0x110] sm:$0xf]
  %v116 = vld [vmem:[%s1 + $0x114] sm:$0xf]
  %v117 = vld [vmem:[%s1 + $0x118] sm:$0xf]
  %v118 = vld [vmem:[%s1 + $0x11c] sm:$0xf]
  %v119 = vld [vmem:[%s1 + $0x120] sm:$0xf]
  %v120 = vld [vmem:[%s1 + $0x124] sm:$0xf]
  %v121 = vld [vmem:[%s1 + $0x128] sm:$0xf]
  %v122 = vld [vmem:[%s1 + $0x12c] sm:$0xf]
  %v123 = vld [vmem:[%s1 + $0x130] sm:$0xf]
  %v124 = vld [vmem:[%s1 + $0x134] sm:$0xf]
  %v125 = vld [vmem:[%s1 + $0x138] sm:$0xf]
  %v126 = vld [vmem:[%s1 + $0x13c] sm:$0xf]
  %v127 = vld [vmem:[%s1 + $0x140] sm:$0xf]
  %v128 = vld [vmem:[%s1 + $0x144] sm:$0xf]
  %v129 = vld [vmem:[%s1 + $0x148] sm:$0xf]
  %v130 = vld [vmem:[%s1 + $0x14c] sm:$0xf]
  %v131 = vld [vmem:[%s1 + $0x150] sm:$0xf]
  %v132 = vld [vmem:[%s1 + $0x154] sm:$0xf]
  %v133 = vld [vmem:[%s1 + $0x158] sm:$0xf]
  %v134 = vld [vmem:[%s1 + $0x15c] sm:$0xf]
  %v135 = vld [vmem:[%s1 + $0x160] sm:$0xf]
  %v136 = vld [vmem:[%s1 + $0x164] sm:$0xf]
  %v137 = vld [vmem:[%s1 + $0x168] sm:$0xf]
  %v138 = vld [vmem:[%s1 + $0x16c] sm:$0xf]
  %v139 = vld [vmem:[%s1 + $0x170] sm:$0xf]
  %v140 = vld [vmem:[%s1 + $0x174] sm:$0xf]
  %v141 = vld [vmem:[%s1 + $0x178] sm:$0xf]
  %v142 = vld [vmem:[%s1 + $0x17c] sm:$0xf]
  %v143 = vld [vmem:[%s1 + $0x180] sm:$0xf]
  %v144 = vld [vmem:[%s1 + $0x184] sm:$0xf]
  %v145 = vld [vmem:[%s1 + $0x188] sm:$0xf]
  %v146 = vld [vmem:[%s1 + $0x18c] sm:$0xf]
  %v147 = vld [vmem:[%s1 + $0x190] sm:$0xf]
  %v148 = vld [vmem:[%s1 + $0x194] sm:$0xf]
  %v149 = vld [vmem:[%s1 + $0x198] sm:$0xf]
  %v150 = vld [vmem:[%s1 + $0x19c] sm:$0xf]
  %v151 = vld [vmem:[%s1 + $0x1a0] sm:$0xf]
  %v152 = vld [vmem:[%s1 + $0x1a4] sm:$0xf]
  %v153 = vld [vmem:[%s1 + $0x1a8] sm:$0xf]
  %v154 = vld [vmem:[%s1 + $0x1ac] sm:$0xf]
  %v155 = vld [vmem:[%s1 + $0x1b0] sm:$0xf]
  %v156 = vld [vmem:[%s1 + $0x1b4] sm:$0xf]
  %v157 = vld [vmem:[%s1 + $0x1b8] sm:$0xf]
  %v158 = vld [vmem:[%s1 + $0x1bc] sm:$0xf]
  %v159 = vld [vmem:[%s1 + $0x1c0] sm:$0xf]
  %v160 = vld [vmem:[%s1 + $0x1c4] sm:$0xf]
  %v161 = vld [vmem:[%s1 + $0x1c8] sm:$0xf]
  %v162 = vld [vmem:[%s1 + $0x1cc] sm:$0xf]
  %v163 = vld [vmem:[%s1 + $0x1d0] sm:$0xf]
  %v164 = vld [vmem:[%s1 + $0x1d4] sm:$0xf]
  %v165 = vld [vmem:[%s1 + $0x1d8] sm:$0xf]
  %v166 = vld [vmem:[%s1 + $0x1dc] sm:$0xf]
  %v167 = vld [vmem:[%s1 + $0x1e0] sm:$0xf]
  %v168 = vld [vmem:[%s1 + $0x1e4] sm:$0xf]
  %v169 = vld [vmem:[%s1 + $0x1e8] sm:$0xf]
  %v170 = vld [vmem:[%s1 + $0x1ec] sm:$0xf]
  %v171 = vld [vmem:[%s1 + $0x1f0] sm:$0xf]
  %v172 = vld [vmem:[%s1 + $0x1f4] sm:$0xf]
  %v173 = vld [vmem:[%s1 + $0x1f8] sm:$0xf]
  %v174 = vld [vmem:[%s1 + $0x1fc] sm:$0xf]
  %v175 = vld [vmem:[%s1 + $0x200] sm:$0xf]
  %v176 = vld [vmem:[%s1 + $0x204] sm:$0xf]
  %v177 = vld [vmem:[%s1 + $0x208] sm:$0xf]
  %v178 = vld [vmem:[%s1 + $0x20c] sm:$0xf]
  %v179 = vld [vmem:[%s1 + $0x210] sm:$0xf]
  %v180 = vld [vmem:[%s1 + $0x214] sm:$0xf]
  %v181 = vld [vmem:[%s1 + $0x218] sm:$0xf]
  %v182 = vld [vmem:[%s1 + $0x21c] sm:$0xf]
  %v183 = vld [vmem:[%s1 + $0x220] sm:$0xf]
  %v184 = vld [vmem:[%s1 + $0x224] sm:$0xf]
  %v185 = vld [vmem:[%s1 + $0x228] sm:$0xf]
  %v186 = vld [vmem:[%s1 + $0x22c] sm:$0xf]
  %v187 = vld [vmem:[%s1 + $0x230] sm:$0xf]
  %v188 = vld [vmem:[%s1 + $0x234] sm:$0xf]
  %v189 = vld [vmem:[%s1 + $0x238] sm:$0xf]
  %v190 = vld [vmem:[%s1 + $0x23c] sm:$0xf]
  %v191 = vld [vmem:[%s1 + $0x240] sm:$0xf]
  %v192 = vld [vmem:[%s1 + $0x244] sm:$0xf]
  %v193 = vld [vmem:[%s1 + $0x248] sm:$0xf]
  %v194 = vld [vmem:[%s1 + $0x24c] sm:$0xf]
  %v195 = vld [vmem:[%s1 + $0x250] sm:$0xf]
  %v196 = vld [vmem:[%s1 + $0x254] sm:$0xf]
  %v197 = vld [vmem:[%s1 + $0x258] sm:$0xf]
  %v198 = vld [vmem:[%s1 + $0x25c] sm:$0xf]
  %v199 = vld [vmem:[%s1 + $0x260] sm:$0xf]
  %v200 = vld [vmem:[%s1 + $0x264] sm:$0xf]
  %v201 = vld [vmem:[%s1 + $0x268] sm:$0xf]
  %v202 = vld [vmem:[%s1 + $0x26c] sm:$0xf]
  %v203 = vld [vmem:[%s1 + $0x270] sm:$0xf]
  %v204 = vld [vmem:[%s1 + $0x274] sm:$0xf]
  %v205 = vld [vmem:[%s1 + $0x278] sm:$0xf]
  %v206 = vld [vmem:[%s1 + $0x27c] sm:$0xf]
  %v207 = vld [vmem:[%s1 + $0x280] sm:$0xf]
  %v208 = vld [vmem:[%s1 + $0x284] sm:$0xf]
  %v209 = vld [vmem:[%s1 + $0x288] sm:$0xf]
  %v210 = vld [vmem:[%s1 + $0x28c] sm:$0xf]
  %v211 = vld [vmem:[%s1 + $0x290] sm:$0xf]
  %v212 = vld [vmem:[%s1 + $0x294] sm:$0xf]
  %v213 = vld [vmem:[%s1 + $0x298] sm:$0xf]
  %v214 = vld [vmem:[%s1 + $0x29c] sm:$0xf]
  %v215 = vld [vmem:[%s1 + $0x2a0] sm:$0xf]
  %v216 = vld [vmem:[%s1 + $0x2a4] sm:$0xf]
  %v217 = vld [vmem:[%s1 + $0x2a8] sm:$0xf]
  %v218 = vld [vmem:[%s1 + $0x2ac] sm:$0xf]
  %v219 = vld [vmem:[%s1 + $0x2b0] sm:$0xf]
  %v220 = vld [vmem:[%s1 + $0x2b4] sm:$0xf]
  %v221 = vld [vmem:[%s1 + $0x2b8] sm:$0xf]
  %v222 = vld [vmem:[%s1 + $0x2bc] sm:$0xf]
  %v223 = vld [vmem:[%s1 + $0x2c0] sm:$0xf]
  %v224 = vld [vmem:[%s1 + $0x2c4] sm:$0xf]
  %v225 = vld [vmem:[%s1 + $0x2c8] sm:$0xf]
  %v226 = vld [vmem:[%s1 + $0x2cc] sm:$0xf]
  %v227 = vld [vmem:[%s1 + $0x2d0] sm:$0xf]
  %v228 = vld [vmem:[%s1 + $0x2d4] sm:$0xf]
  %v229 = vld [vmem:[%s1 + $0x2d8] sm:$0xf]
  %v230 = vld [vmem:[%s1 + $0x2dc] sm:$0xf]
  %v231 = vld [vmem:[%s1 + $0x2e0] sm:$0xf]
  %v232 = vld [vmem:[%s1 + $0x2e4] sm:$0xf]
  %v233 = vld [vmem:[%s1 + $0x2e8] sm:$0xf]
  %v234 = vld [vmem:[%s1 + $0x2ec] sm:$0xf]
  %v235 = vld [vmem:[%s1 + $0x2f0] sm:$0xf]
  %v236 = vld [vmem:[%s1 + $0x2f4] sm:$0xf]
  %v237 = vld [vmem:[%s1 + $0x2f8] sm:$0xf]
  %v238 = vld [vmem:[%s1 + $0x2fc] sm:$0xf]
  %v239 = vld [vmem:[%s1 + $0x300] sm:$0xf]
  %v240 = vld [vmem:[%s1 + $0x304] sm:$0xf]
  %v241 = vld [vmem:[%s1 + $0x308] sm:$0xf]
  %v242 = vld [vmem:[%s1 + $0x30c] sm:$0xf]
  %v243 = vld [vmem:[%s1 + $0x310] sm:$0xf]
  %v244 = vld [vmem:[%s1 + $0x314] sm:$0xf]
  %v245 = vld [vmem:[%s1 + $0x318] sm:$0xf]
  %v246 = vld [vmem:[%s1 + $0x31c] sm:$0xf]
  %v247 = vld [vmem:[%s1 + $0x320] sm:$0xf]
  %v248 = vld [vmem:[%s1 + $0x324] sm:$0xf]
  %v249 = vld [vmem:[%s1 + $0x328] sm:$0xf]
  %v250 = vld [vmem:[%s1 + $0x32c] sm:$0xf]
  %v251 = vld [vmem:[%s1 + $0x330] sm:$0xf]
  %v252 = vld [vmem:[%s1 + $0x334] sm:$0xf]
  %v253 = vld [vmem:[%s1 + $0x338] sm:$0xf]
  %v254 = vld [vmem:[%s1 + $0x33c] sm:$0xf]
  %v255 = vld [vmem:[%s2] sm:$0x1]
  %v257 = vperm.slane %v255, 0
  %v273 = vunpack.c.l.b16 %v33
  %v274 = vunpack.c.h.b16 %v33
  %v275 = vunpack.c.l.b16 %v34
  %v276 = vunpack.c.h.b16 %v34
  %v277 = vunpack.c.l.b16 %v35
  %v278 = vunpack.c.h.b16 %v35
  %v279 = vunpack.c.l.b16 %v36
  %v280 = vunpack.c.h.b16 %v36
  %v281 = vunpack.c.l.b16 %v37
  %v282 = vunpack.c.h.b16 %v37
  %v283 = vunpack.c.l.b16 %v38
  %v284 = vunpack.c.h.b16 %v38
  %v285 = vunpack.c.l.b16 %v39
  %v286 = vunpack.c.l.b16 %v40
  %v287 = vunpack.c.h.b16 %v40
  %v288 = vunpack.c.l.b16 %v41
  %v289 = vunpack.c.h.b16 %v41
  %v290 = vunpack.c.l.b16 %v42
  %v291 = vunpack.c.h.b16 %v42
  %v292 = vunpack.c.l.b16 %v43
  %v293 = vunpack.c.h.b16 %v43
  %v294 = vunpack.c.l.b16 %v44
  %v295 = vunpack.c.h.b16 %v44
  %v296 = vunpack.c.l.b16 %v45
  %v297 = vunpack.c.h.b16 %v45
  %v298 = vunpack.c.l.b16 %v46
  %v299 = vpack.c.b16 %v286, %v273
  %v300 = vpack.c.b16 %v287, %v274
  %v301 = vpack.c.b16 %v288, %v275
  %v302 = vpack.c.b16 %v289, %v276
  %v303 = vpack.c.b16 %v290, %v277
  %v304 = vpack.c.b16 %v291, %v278
  %v305 = vpack.c.b16 %v292, %v279
  %v306 = vpack.c.b16 %v293, %v280
  %v307 = vpack.c.b16 %v294, %v281
  %v308 = vpack.c.b16 %v295, %v282
  %v309 = vpack.c.b16 %v296, %v283
  %v310 = vpack.c.b16 %v297, %v284
  %v311 = vpack.c.b16 %v298, %v285
  %v533 = vunpack.c.l.b16 %v47
  %v534 = vunpack.c.l.b16 %v48
  %v535 = vunpack.c.l.b16 %v49
  %v536 = vunpack.c.l.b16 %v50
  %v537 = vunpack.c.l.b16 %v51
  %v538 = vunpack.c.l.b16 %v52
  %v539 = vunpack.c.l.b16 %v53
  %v540 = vunpack.c.l.b16 %v54
  %v541 = vunpack.c.l.b16 %v55
  %v542 = vunpack.c.l.b16 %v56
  %v543 = vunpack.c.l.b16 %v57
  %v544 = vunpack.c.l.b16 %v58
  %v545 = vunpack.c.l.b16 %v59
  %v546 = vunpack.c.l.b16 %v60
  %v547 = vunpack.c.l.b16 %v61
  %v548 = vunpack.c.l.b16 %v62
  %v549 = vunpack.c.l.b16 %v63
  %v550 = vunpack.c.l.b16 %v64
  %v551 = vunpack.c.l.b16 %v65
  %v552 = vunpack.c.l.b16 %v66
  %v553 = vunpack.c.l.b16 %v67
  %v554 = vunpack.c.l.b16 %v68
  %v555 = vunpack.c.l.b16 %v69
  %v556 = vunpack.c.l.b16 %v70
  %v557 = vunpack.c.l.b16 %v71
  %v558 = vunpack.c.l.b16 %v72
  %v559 = vunpack.c.l.b16 %v73
  %v560 = vunpack.c.l.b16 %v74
  %v561 = vunpack.c.l.b16 %v75
  %v562 = vunpack.c.l.b16 %v76
  %v563 = vunpack.c.l.b16 %v77
  %v564 = vunpack.c.l.b16 %v78
  %v565 = vunpack.c.l.b16 %v79
  %v566 = vunpack.c.l.b16 %v80
  %v567 = vunpack.c.l.b16 %v81
  %v568 = vunpack.c.l.b16 %v82
  %v569 = vunpack.c.l.b16 %v83
  %v570 = vunpack.c.l.b16 %v84
  %v571 = vunpack.c.l.b16 %v85
  %v572 = vunpack.c.l.b16 %v86
  %v573 = vunpack.c.l.b16 %v87
  %v574 = vunpack.c.l.b16 %v88
  %v575 = vunpack.c.l.b16 %v89
  %v576 = vunpack.c.l.b16 %v90
  %v577 = vunpack.c.l.b16 %v91
  %v578 = vunpack.c.l.b16 %v92
  %v579 = vunpack.c.l.b16 %v93
  %v580 = vunpack.c.l.b16 %v94
  %v581 = vunpack.c.l.b16 %v95
  %v582 = vunpack.c.l.b16 %v96
  %v583 = vunpack.c.l.b16 %v97
  %v584 = vunpack.c.l.b16 %v98
  %v585 = vunpack.c.l.b16 %v99
  %v586 = vunpack.c.l.b16 %v100
  %v587 = vunpack.c.l.b16 %v101
  %v588 = vunpack.c.l.b16 %v102
  %v589 = vunpack.c.l.b16 %v103
  %v590 = vunpack.c.l.b16 %v104
  %v591 = vunpack.c.l.b16 %v105
  %v592 = vunpack.c.l.b16 %v106
  %v593 = vunpack.c.l.b16 %v107
  %v594 = vunpack.c.l.b16 %v108
  %v595 = vunpack.c.l.b16 %v109
  %v596 = vunpack.c.l.b16 %v110
  %v597 = vunpack.c.l.b16 %v111
  %v598 = vunpack.c.l.b16 %v112
  %v599 = vunpack.c.l.b16 %v113
  %v600 = vunpack.c.l.b16 %v114
  %v601 = vunpack.c.l.b16 %v115
  %v602 = vunpack.c.l.b16 %v116
  %v603 = vunpack.c.l.b16 %v117
  %v604 = vunpack.c.l.b16 %v118
  %v605 = vunpack.c.l.b16 %v119
  %v606 = vunpack.c.l.b16 %v120
  %v607 = vunpack.c.l.b16 %v121
  %v608 = vunpack.c.l.b16 %v122
  %v609 = vunpack.c.l.b16 %v123
  %v610 = vunpack.c.l.b16 %v124
  %v611 = vunpack.c.l.b16 %v125
  %v612 = vunpack.c.l.b16 %v126
  %v613 = vunpack.c.l.b16 %v127
  %v614 = vunpack.c.l.b16 %v128
  %v615 = vunpack.c.l.b16 %v129
  %v616 = vunpack.c.l.b16 %v130
  %v617 = vunpack.c.l.b16 %v131
  %v618 = vunpack.c.l.b16 %v132
  %v619 = vunpack.c.l.b16 %v133
  %v620 = vunpack.c.l.b16 %v134
  %v621 = vunpack.c.l.b16 %v135
  %v622 = vunpack.c.l.b16 %v136
  %v623 = vunpack.c.l.b16 %v137
  %v624 = vunpack.c.l.b16 %v138
  %v625 = vunpack.c.l.b16 %v139
  %v626 = vunpack.c.l.b16 %v140
  %v627 = vunpack.c.l.b16 %v141
  %v628 = vunpack.c.l.b16 %v142
  %v629 = vunpack.c.l.b16 %v143
  %v630 = vunpack.c.l.b16 %v144
  %v631 = vunpack.c.l.b16 %v145
  %v632 = vunpack.c.l.b16 %v146
  %v633 = vunpack.c.l.b16 %v147
  %v634 = vunpack.c.l.b16 %v148
  %v635 = vunpack.c.l.b16 %v149
  %v636 = vunpack.c.l.b16 %v150
  %v637 = vunpack.c.l.b16 %v151
  %v638 = vunpack.c.l.b16 %v152
  %v639 = vunpack.c.l.b16 %v153
  %v640 = vunpack.c.l.b16 %v154
  %v641 = vunpack.c.l.b16 %v155
  %v642 = vunpack.c.l.b16 %v156
  %v643 = vunpack.c.l.b16 %v157
  %v644 = vunpack.c.l.b16 %v158
  %v645 = vunpack.c.l.b16 %v159
  %v646 = vunpack.c.l.b16 %v160
  %v647 = vunpack.c.l.b16 %v161
  %v648 = vunpack.c.l.b16 %v162
  %v649 = vunpack.c.l.b16 %v163
  %v650 = vunpack.c.l.b16 %v164
  %v651 = vunpack.c.l.b16 %v165
  %v652 = vunpack.c.l.b16 %v166
  %v653 = vunpack.c.l.b16 %v167
  %v654 = vunpack.c.l.b16 %v168
  %v655 = vunpack.c.l.b16 %v169
  %v656 = vunpack.c.l.b16 %v170
  %v657 = vunpack.c.l.b16 %v171
  %v658 = vunpack.c.l.b16 %v172
  %v659 = vunpack.c.l.b16 %v173
  %v660 = vunpack.c.l.b16 %v174
  %v661 = vunpack.c.l.b16 %v175
  %v662 = vunpack.c.l.b16 %v176
  %v663 = vunpack.c.l.b16 %v177
  %v664 = vunpack.c.l.b16 %v178
  %v665 = vunpack.c.l.b16 %v179
  %v666 = vunpack.c.l.b16 %v180
  %v667 = vunpack.c.l.b16 %v181
  %v668 = vunpack.c.l.b16 %v182
  %v669 = vunpack.c.l.b16 %v183
  %v670 = vunpack.c.l.b16 %v184
  %v671 = vunpack.c.l.b16 %v185
  %v672 = vunpack.c.l.b16 %v186
  %v673 = vunpack.c.l.b16 %v187
  %v674 = vunpack.c.l.b16 %v188
  %v675 = vunpack.c.l.b16 %v189
  %v676 = vunpack.c.l.b16 %v190
  %v677 = vunpack.c.l.b16 %v191
  %v678 = vunpack.c.l.b16 %v192
  %v679 = vunpack.c.l.b16 %v193
  %v680 = vunpack.c.l.b16 %v194
  %v681 = vunpack.c.l.b16 %v195
  %v682 = vunpack.c.l.b16 %v196
  %v683 = vunpack.c.l.b16 %v197
  %v684 = vunpack.c.l.b16 %v198
  %v685 = vunpack.c.l.b16 %v199
  %v686 = vunpack.c.l.b16 %v200
  %v687 = vunpack.c.l.b16 %v201
  %v688 = vunpack.c.l.b16 %v202
  %v689 = vunpack.c.l.b16 %v203
  %v690 = vunpack.c.l.b16 %v204
  %v691 = vunpack.c.l.b16 %v205
  %v692 = vunpack.c.l.b16 %v206
  %v693 = vunpack.c.l.b16 %v207
  %v694 = vunpack.c.l.b16 %v208
  %v695 = vunpack.c.l.b16 %v209
  %v696 = vunpack.c.l.b16 %v210
  %v697 = vunpack.c.l.b16 %v211
  %v698 = vunpack.c.l.b16 %v212
  %v699 = vunpack.c.l.b16 %v213
  %v700 = vunpack.c.l.b16 %v214
  %v701 = vunpack.c.l.b16 %v215
  %v702 = vunpack.c.l.b16 %v216
  %v703 = vunpack.c.l.b16 %v217
  %v704 = vunpack.c.l.b16 %v218
  %v705 = vunpack.c.l.b16 %v219
  %v706 = vunpack.c.l.b16 %v220
  %v707 = vunpack.c.l.b16 %v221
  %v708 = vunpack.c.l.b16 %v222
  %v709 = vunpack.c.l.b16 %v223
  %v710 = vunpack.c.l.b16 %v224
  %v711 = vunpack.c.l.b16 %v225
  %v712 = vunpack.c.l.b16 %v226
  %v713 = vunpack.c.l.b16 %v227
  %v714 = vunpack.c.l.b16 %v228
  %v715 = vunpack.c.l.b16 %v229
  %v716 = vunpack.c.l.b16 %v230
  %v717 = vunpack.c.l.b16 %v231
  %v718 = vunpack.c.l.b16 %v232
  %v719 = vunpack.c.l.b16 %v233
  %v720 = vunpack.c.l.b16 %v234
  %v721 = vunpack.c.l.b16 %v235
  %v722 = vunpack.c.l.b16 %v236
  %v723 = vunpack.c.l.b16 %v237
  %v724 = vunpack.c.l.b16 %v238
  %v725 = vunpack.c.l.b16 %v239
  %v726 = vunpack.c.l.b16 %v240
  %v727 = vunpack.c.l.b16 %v241
  %v728 = vunpack.c.l.b16 %v242
  %v729 = vunpack.c.l.b16 %v243
  %v730 = vunpack.c.l.b16 %v244
  %v731 = vunpack.c.l.b16 %v245
  %v732 = vunpack.c.l.b16 %v246
  %v733 = vunpack.c.l.b16 %v247
  %v734 = vunpack.c.l.b16 %v248
  %v735 = vunpack.c.l.b16 %v249
  %v736 = vunpack.c.l.b16 %v250
  %v737 = vunpack.c.l.b16 %v251
  %v738 = vunpack.c.l.b16 %v252
  %v739 = vunpack.c.l.b16 %v253
  %v740 = vunpack.c.l.b16 %v254
  %v741 = vpack.c.b16 %v534, %v533
  %v742 = vpack.c.b16 %v536, %v535
  %v743 = vpack.c.b16 %v538, %v537
  %v744 = vpack.c.b16 %v540, %v539
  %v745 = vpack.c.b16 %v542, %v541
  %v746 = vpack.c.b16 %v544, %v543
  %v747 = vpack.c.b16 %v546, %v545
  %v748 = vpack.c.b16 %v548, %v547
  %v749 = vpack.c.b16 %v550, %v549
  %v750 = vpack.c.b16 %v552, %v551
  %v751 = vpack.c.b16 %v554, %v553
  %v752 = vpack.c.b16 %v556, %v555
  %v753 = vpack.c.b16 %v558, %v557
  %v754 = vpack.c.b16 %v560, %v559
  %v755 = vpack.c.b16 %v562, %v561
  %v756 = vpack.c.b16 %v564, %v563
  %v757 = vpack.c.b16 %v566, %v565
  %v758 = vpack.c.b16 %v568, %v567
  %v759 = vpack.c.b16 %v570, %v569
  %v760 = vpack.c.b16 %v572, %v571
  %v761 = vpack.c.b16 %v574, %v573
  %v762 = vpack.c.b16 %v576, %v575
  %v763 = vpack.c.b16 %v578, %v577
  %v764 = vpack.c.b16 %v580, %v579
  %v765 = vpack.c.b16 %v582, %v581
  %v766 = vpack.c.b16 %v584, %v583
  %v767 = vpack.c.b16 %v586, %v585
  %v768 = vpack.c.b16 %v588, %v587
  %v769 = vpack.c.b16 %v590, %v589
  %v770 = vpack.c.b16 %v592, %v591
  %v771 = vpack.c.b16 %v594, %v593
  %v772 = vpack.c.b16 %v596, %v595
  %v773 = vpack.c.b16 %v598, %v597
  %v774 = vpack.c.b16 %v600, %v599
  %v775 = vpack.c.b16 %v602, %v601
  %v776 = vpack.c.b16 %v604, %v603
  %v777 = vpack.c.b16 %v606, %v605
  %v778 = vpack.c.b16 %v608, %v607
  %v779 = vpack.c.b16 %v610, %v609
  %v780 = vpack.c.b16 %v612, %v611
  %v781 = vpack.c.b16 %v614, %v613
  %v782 = vpack.c.b16 %v616, %v615
  %v783 = vpack.c.b16 %v618, %v617
  %v784 = vpack.c.b16 %v620, %v619
  %v785 = vpack.c.b16 %v622, %v621
  %v786 = vpack.c.b16 %v624, %v623
  %v787 = vpack.c.b16 %v626, %v625
  %v788 = vpack.c.b16 %v628, %v627
  %v789 = vpack.c.b16 %v630, %v629
  %v790 = vpack.c.b16 %v632, %v631
  %v791 = vpack.c.b16 %v634, %v633
  %v792 = vpack.c.b16 %v636, %v635
  %v793 = vpack.c.b16 %v638, %v637
  %v794 = vpack.c.b16 %v640, %v639
  %v795 = vpack.c.b16 %v642, %v641
  %v796 = vpack.c.b16 %v644, %v643
  %v797 = vpack.c.b16 %v646, %v645
  %v798 = vpack.c.b16 %v648, %v647
  %v799 = vpack.c.b16 %v650, %v649
  %v800 = vpack.c.b16 %v652, %v651
  %v801 = vpack.c.b16 %v654, %v653
  %v802 = vpack.c.b16 %v656, %v655
  %v803 = vpack.c.b16 %v658, %v657
  %v804 = vpack.c.b16 %v660, %v659
  %v805 = vpack.c.b16 %v662, %v661
  %v806 = vpack.c.b16 %v664, %v663
  %v807 = vpack.c.b16 %v666, %v665
  %v808 = vpack.c.b16 %v668, %v667
  %v809 = vpack.c.b16 %v670, %v669
  %v810 = vpack.c.b16 %v672, %v671
  %v811 = vpack.c.b16 %v674, %v673
  %v812 = vpack.c.b16 %v676, %v675
  %v813 = vpack.c.b16 %v678, %v677
  %v814 = vpack.c.b16 %v680, %v679
  %v815 = vpack.c.b16 %v682, %v681
  %v816 = vpack.c.b16 %v684, %v683
  %v817 = vpack.c.b16 %v686, %v685
  %v818 = vpack.c.b16 %v688, %v687
  %v819 = vpack.c.b16 %v690, %v689
  %v820 = vpack.c.b16 %v692, %v691
  %v821 = vpack.c.b16 %v694, %v693
  %v822 = vpack.c.b16 %v696, %v695
  %v823 = vpack.c.b16 %v698, %v697
  %v824 = vpack.c.b16 %v700, %v699
  %v825 = vpack.c.b16 %v702, %v701
  %v826 = vpack.c.b16 %v704, %v703
  %v827 = vpack.c.b16 %v706, %v705
  %v828 = vpack.c.b16 %v708, %v707
  %v829 = vpack.c.b16 %v710, %v709
  %v830 = vpack.c.b16 %v712, %v711
  %v831 = vpack.c.b16 %v714, %v713
  %v832 = vpack.c.b16 %v716, %v715
  %v833 = vpack.c.b16 %v718, %v717
  %v834 = vpack.c.b16 %v720, %v719
  %v835 = vpack.c.b16 %v722, %v721
  %v836 = vpack.c.b16 %v724, %v723
  %v837 = vpack.c.b16 %v726, %v725
  %v838 = vpack.c.b16 %v728, %v727
  %v839 = vpack.c.b16 %v730, %v729
  %v840 = vpack.c.b16 %v732, %v731
  %v841 = vpack.c.b16 %v734, %v733
  %v842 = vpack.c.b16 %v736, %v735
  %v843 = vpack.c.b16 %v738, %v737
  %v844 = vpack.c.b16 %v740, %v739
  %949 = vmatpush.bf16.msra.mxu0 %v748
  %950 = vmatpush.bf16.msra.mxu0 %v747
  %951 = vmatpush.bf16.msra.mxu0 %v746
  %952 = vmatpush.bf16.msra.mxu0 %v745
  %953 = vmatpush.bf16.msra.mxu0 %v744
  %954 = vmatpush.bf16.msra.mxu0 %v743
  %955 = vmatpush.bf16.msra.mxu0 %v742
  %956 = vmatpush.bf16.msra.mxu0 %v741
  %957 = vmatmul.bf16.gmra.mxu0 %v299
  %v958 = vpop.f32.mrf.mxu0
  %v959 = vadd.f32 %v257, %v958
  %v960 = vpop.f32.mrf.mxu0
  %v961 = vadd.f32 %v257, %v960
  %962 = vdwg.mxu0
  %963 = vmatpush.bf16.msra.mxu0 %v756
  %964 = vmatpush.bf16.msra.mxu0 %v755
  %965 = vmatpush.bf16.msra.mxu0 %v754
  %966 = vmatpush.bf16.msra.mxu0 %v753
  %967 = vmatpush.bf16.msra.mxu0 %v752
  %968 = vmatpush.bf16.msra.mxu0 %v751
  %969 = vmatpush.bf16.msra.mxu0 %v750
  %970 = vmatpush.bf16.msra.mxu0 %v749
  %971 = vmatmul.bf16.gmra.mxu0 %v300
  %v972 = vpop.f32.mrf.mxu0
  %v973 = vadd.f32 %v959, %v972
  %v974 = vpop.f32.mrf.mxu0
  %v975 = vadd.f32 %v961, %v974
  %976 = vdwg.mxu0
  %977 = vmatpush.bf16.msra.mxu0 %v764
  %978 = vmatpush.bf16.msra.mxu0 %v763
  %979 = vmatpush.bf16.msra.mxu0 %v762
  %980 = vmatpush.bf16.msra.mxu0 %v761
  %981 = vmatpush.bf16.msra.mxu0 %v760
  %982 = vmatpush.bf16.msra.mxu0 %v759
  %983 = vmatpush.bf16.msra.mxu0 %v758
  %984 = vmatpush.bf16.msra.mxu0 %v757
  %985 = vmatmul.bf16.gmra.mxu0 %v301
  %v986 = vpop.f32.mrf.mxu0
  %v987 = vadd.f32 %v973, %v986
  %v988 = vpop.f32.mrf.mxu0
  %v989 = vadd.f32 %v975, %v988
  %990 = vdwg.mxu0
  %991 = vmatpush.bf16.msra.mxu0 %v772
  %992 = vmatpush.bf16.msra.mxu0 %v771
  %993 = vmatpush.bf16.msra.mxu0 %v770
  %994 = vmatpush.bf16.msra.mxu0 %v769
  %995 = vmatpush.bf16.msra.mxu0 %v768
  %996 = vmatpush.bf16.msra.mxu0 %v767
  %997 = vmatpush.bf16.msra.mxu0 %v766
  %998 = vmatpush.bf16.msra.mxu0 %v765
  %999 = vmatmul.bf16.gmra.mxu0 %v302
  %v1000 = vpop.f32.mrf.mxu0
  %v1001 = vadd.f32 %v987, %v1000
  %v1002 = vpop.f32.mrf.mxu0
  %v1003 = vadd.f32 %v989, %v1002
  %1004 = vdwg.mxu0
  %1005 = vmatpush.bf16.msra.mxu0 %v780
  %1006 = vmatpush.bf16.msra.mxu0 %v779
  %1007 = vmatpush.bf16.msra.mxu0 %v778
  %1008 = vmatpush.bf16.msra.mxu0 %v777
  %1009 = vmatpush.bf16.msra.mxu0 %v776
  %1010 = vmatpush.bf16.msra.mxu0 %v775
  %1011 = vmatpush.bf16.msra.mxu0 %v774
  %1012 = vmatpush.bf16.msra.mxu0 %v773
  %1013 = vmatmul.bf16.gmra.mxu0 %v303
  %v1014 = vpop.f32.mrf.mxu0
  %v1015 = vadd.f32 %v1001, %v1014
  %v1016 = vpop.f32.mrf.mxu0
  %v1017 = vadd.f32 %v1003, %v1016
  %1018 = vdwg.mxu0
  %1019 = vmatpush.bf16.msra.mxu0 %v788
  %1020 = vmatpush.bf16.msra.mxu0 %v787
  %1021 = vmatpush.bf16.msra.mxu0 %v786
  %1022 = vmatpush.bf16.msra.mxu0 %v785
  %1023 = vmatpush.bf16.msra.mxu0 %v784
  %1024 = vmatpush.bf16.msra.mxu0 %v783
  %1025 = vmatpush.bf16.msra.mxu0 %v782
  %1026 = vmatpush.bf16.msra.mxu0 %v781
  %1027 = vmatmul.bf16.gmra.mxu0 %v304
  %v1028 = vpop.f32.mrf.mxu0
  %v1029 = vadd.f32 %v1015, %v1028
  %v1030 = vpop.f32.mrf.mxu0
  %v1031 = vadd.f32 %v1017, %v1030
  %1032 = vdwg.mxu0
  %1033 = vmatpush.bf16.msra.mxu0 %v796
  %1034 = vmatpush.bf16.msra.mxu0 %v795
  %1035 = vmatpush.bf16.msra.mxu0 %v794
  %1036 = vmatpush.bf16.msra.mxu0 %v793
  %1037 = vmatpush.bf16.msra.mxu0 %v792
  %1038 = vmatpush.bf16.msra.mxu0 %v791
  %1039 = vmatpush.bf16.msra.mxu0 %v790
  %1040 = vmatpush.bf16.msra.mxu0 %v789
  %1041 = vmatmul.bf16.gmra.mxu0 %v305
  %v1042 = vpop.f32.mrf.mxu0
  %v1043 = vadd.f32 %v1029, %v1042
  %v1044 = vpop.f32.mrf.mxu0
  %v1045 = vadd.f32 %v1031, %v1044
  %1046 = vdwg.mxu0
  %1047 = vmatpush.bf16.msra.mxu0 %v804
  %1048 = vmatpush.bf16.msra.mxu0 %v803
  %1049 = vmatpush.bf16.msra.mxu0 %v802
  %1050 = vmatpush.bf16.msra.mxu0 %v801
  %1051 = vmatpush.bf16.msra.mxu0 %v800
  %1052 = vmatpush.bf16.msra.mxu0 %v799
  %1053 = vmatpush.bf16.msra.mxu0 %v798
  %1054 = vmatpush.bf16.msra.mxu0 %v797
  %1055 = vmatmul.bf16.gmra.mxu0 %v306
  %v1056 = vpop.f32.mrf.mxu0
  %v1057 = vadd.f32 %v1043, %v1056
  %v1058 = vpop.f32.mrf.mxu0
  %v1059 = vadd.f32 %v1045, %v1058
  %1060 = vdwg.mxu0
  %1061 = vmatpush.bf16.msra.mxu0 %v812
  %1062 = vmatpush.bf16.msra.mxu0 %v811
  %1063 = vmatpush.bf16.msra.mxu0 %v810
  %1064 = vmatpush.bf16.msra.mxu0 %v809
  %1065 = vmatpush.bf16.msra.mxu0 %v808
  %1066 = vmatpush.bf16.msra.mxu0 %v807
  %1067 = vmatpush.bf16.msra.mxu0 %v806
  %1068 = vmatpush.bf16.msra.mxu0 %v805
  %1069 = vmatmul.bf16.gmra.mxu0 %v307
  %v1070 = vpop.f32.mrf.mxu0
  %v1071 = vadd.f32 %v1057, %v1070
  %v1072 = vpop.f32.mrf.mxu0
  %v1073 = vadd.f32 %v1059, %v1072
  %1074 = vdwg.mxu0
  %1075 = vmatpush.bf16.msra.mxu0 %v820
  %1076 = vmatpush.bf16.msra.mxu0 %v819
  %1077 = vmatpush.bf16.msra.mxu0 %v818
  %1078 = vmatpush.bf16.msra.mxu0 %v817
  %1079 = vmatpush.bf16.msra.mxu0 %v816
  %1080 = vmatpush.bf16.msra.mxu0 %v815
  %1081 = vmatpush.bf16.msra.mxu0 %v814
  %1082 = vmatpush.bf16.msra.mxu0 %v813
  %1083 = vmatmul.bf16.gmra.mxu0 %v308
  %v1084 = vpop.f32.mrf.mxu0
  %v1085 = vadd.f32 %v1071, %v1084
  %v1086 = vpop.f32.mrf.mxu0
  %v1087 = vadd.f32 %v1073, %v1086
  %1088 = vdwg.mxu0
  %1089 = vmatpush.bf16.msra.mxu0 %v828
  %1090 = vmatpush.bf16.msra.mxu0 %v827
  %1091 = vmatpush.bf16.msra.mxu0 %v826
  %1092 = vmatpush.bf16.msra.mxu0 %v825
  %1093 = vmatpush.bf16.msra.mxu0 %v824
  %1094 = vmatpush.bf16.msra.mxu0 %v823
  %1095 = vmatpush.bf16.msra.mxu0 %v822
  %1096 = vmatpush.bf16.msra.mxu0 %v821
  %1097 = vmatmul.bf16.gmra.mxu0 %v309
  %v1098 = vpop.f32.mrf.mxu0
  %v1099 = vadd.f32 %v1085, %v1098
  %v1100 = vpop.f32.mrf.mxu0
  %v1101 = vadd.f32 %v1087, %v1100
  %1102 = vdwg.mxu0
  %1103 = vmatpush.bf16.msra.mxu0 %v836
  %1104 = vmatpush.bf16.msra.mxu0 %v835
  %1105 = vmatpush.bf16.msra.mxu0 %v834
  %1106 = vmatpush.bf16.msra.mxu0 %v833
  %1107 = vmatpush.bf16.msra.mxu0 %v832
  %1108 = vmatpush.bf16.msra.mxu0 %v831
  %1109 = vmatpush.bf16.msra.mxu0 %v830
  %1110 = vmatpush.bf16.msra.mxu0 %v829
  %1111 = vmatmul.bf16.gmra.mxu0 %v310
  %v1112 = vpop.f32.mrf.mxu0
  %v1113 = vadd.f32 %v1099, %v1112
  %v1114 = vpop.f32.mrf.mxu0
  %v1115 = vadd.f32 %v1101, %v1114
  %1116 = vdwg.mxu0
  %1117 = vmatpush.bf16.msra.mxu0 %v844
  %1118 = vmatpush.bf16.msra.mxu0 %v843
  %1119 = vmatpush.bf16.msra.mxu0 %v842
  %1120 = vmatpush.bf16.msra.mxu0 %v841
  %1121 = vmatpush.bf16.msra.mxu0 %v840
  %1122 = vmatpush.bf16.msra.mxu0 %v839
  %1123 = vmatpush.bf16.msra.mxu0 %v838
  %1124 = vmatpush.bf16.msra.mxu0 %v837
  %1125 = vmatmul.bf16.gmra.mxu0 %v311
  %v1126 = vpop.f32.mrf.mxu0
  %v1127 = vadd.f32 %v1113, %v1126
  %v1128 = vpop.f32.mrf.mxu0
  %v1129 = vadd.f32 %v1115, %v1128
  %1130 = vdwg.mxu0
  %v1131 = vmax.f32 %v1127, 0.0
  %v1132 = vmax.f32 %v1129, 0.0
  %v1133 = vpack.c.bf16 %v1132, %v1131
  %v1134 = vld [vmem:[%s3] sm:$0xf]
  %v1135 = vld [vmem:[%s3 + $0x4] sm:$0xf]
  %v1136 = vld [vmem:[%s3 + $0x8] sm:$0xf]
  %v1137 = vld [vmem:[%s3 + $0xc] sm:$0xf]
  %v1138 = vld [vmem:[%s3 + $0x10] sm:$0xf]
  %v1139 = vld [vmem:[%s3 + $0x14] sm:$0xf]
  %v1140 = vld [vmem:[%s3 + $0x18] sm:$0xf]
  %v1141 = vld [vmem:[%s3 + $0x1c] sm:$0xf]
  %v1142 = vld [vmem:[%s3 + $0x20] sm:$0xf]
  %v1143 = vld [vmem:[%s3 + $0x24] sm:$0xf]
  %v1144 = vld [vmem:[%s3 + $0x28] sm:$0xf]
  %v1145 = vld [vmem:[%s3 + $0x2c] sm:$0xf]
  %v1146 = vld [vmem:[%s3 + $0x30] sm:$0xf]
  %v1147 = vld [vmem:[%s3 + $0x34] sm:$0xf]
  %v1148 = vld [vmem:[%s3 + $0x38] sm:$0xf]
  %v1149 = vld [vmem:[%s3 + $0x3c] sm:$0xf]
  %v1166 = vunpack.c.l.b16 %v1134
  %v1167 = vunpack.c.l.b16 %v1135
  %v1168 = vunpack.c.l.b16 %v1136
  %v1169 = vunpack.c.l.b16 %v1137
  %v1170 = vunpack.c.l.b16 %v1138
  %v1171 = vunpack.c.l.b16 %v1139
  %v1172 = vunpack.c.l.b16 %v1140
  %v1173 = vunpack.c.l.b16 %v1141
  %v1174 = vunpack.c.l.b16 %v1142
  %v1175 = vunpack.c.l.b16 %v1143
  %v1176 = vunpack.c.l.b16 %v1144
  %v1177 = vunpack.c.l.b16 %v1145
  %v1178 = vunpack.c.l.b16 %v1146
  %v1179 = vunpack.c.l.b16 %v1147
  %v1180 = vunpack.c.l.b16 %v1148
  %v1181 = vunpack.c.l.b16 %v1149
  %v1182 = vpack.c.b16 %v1167, %v1166
  %v1183 = vpack.c.b16 %v1169, %v1168
  %v1184 = vpack.c.b16 %v1171, %v1170
  %v1185 = vpack.c.b16 %v1173, %v1172
  %v1186 = vpack.c.b16 %v1175, %v1174
  %v1187 = vpack.c.b16 %v1177, %v1176
  %v1188 = vpack.c.b16 %v1179, %v1178
  %v1189 = vpack.c.b16 %v1181, %v1180
  %1198 = vmatpush.bf16.msra.mxu0 %v1189
  %1199 = vmatpush.bf16.msra.mxu0 %v1188
  %1200 = vmatpush.bf16.msra.mxu0 %v1187
  %1201 = vmatpush.bf16.msra.mxu0 %v1186
  %1202 = vmatpush.bf16.msra.mxu0 %v1185
  %1203 = vmatpush.bf16.msra.mxu0 %v1184
  %1204 = vmatpush.bf16.msra.mxu0 %v1183
  %1205 = vmatpush.bf16.msra.mxu0 %v1182
  %1206 = vmatmul.bf16.gmra.mxu0 %v1133
  %v1207 = vpop.f32.mrf.mxu0
  %v1208 = vadd.f32 0.0, %v1207
  %v1209 = vpop.f32.mrf.mxu0
  %v1210 = vadd.f32 0.0, %v1209
  %1211 = vdwg.mxu0
  %v1213 = vperm.slane %v32, 0
  %v1215 = vadd.f32 %v1213, %v1208
  %v1216 = vadd.f32 %v1213, %v1210
  %s1217 = scalar_lea.vmem %s0, 104
  %v1218 = vld [vmem:[%s1217] sm:$0xff]
  %v1219 = vld [vmem:[%s1217 + $0x8] sm:$0xff]
  %v1220 = vld [vmem:[%s1217 + $0x10] sm:$0xff]
  %v1221 = vld [vmem:[%s1217 + $0x18] sm:$0xff]
  %v1222 = vld [vmem:[%s1217 + $0x20] sm:$0xff]
  %v1223 = vld [vmem:[%s1217 + $0x28] sm:$0xff]
  %v1224 = vld [vmem:[%s1217 + $0x30] sm:$0xf]
  %v1225 = vld [vmem:[%s1217 + $0x34] sm:$0xff]
  %v1226 = vld [vmem:[%s1217 + $0x3c] sm:$0xff]
  %v1227 = vld [vmem:[%s1217 + $0x44] sm:$0xff]
  %v1228 = vld [vmem:[%s1217 + $0x4c] sm:$0xff]
  %v1229 = vld [vmem:[%s1217 + $0x54] sm:$0xff]
  %v1230 = vld [vmem:[%s1217 + $0x5c] sm:$0xff]
  %v1231 = vld [vmem:[%s1217 + $0x64] sm:$0xf]
  %v1246 = vunpack.c.l.b16 %v1218
  %v1247 = vunpack.c.h.b16 %v1218
  %v1248 = vunpack.c.l.b16 %v1219
  %v1249 = vunpack.c.h.b16 %v1219
  %v1250 = vunpack.c.l.b16 %v1220
  %v1251 = vunpack.c.h.b16 %v1220
  %v1252 = vunpack.c.l.b16 %v1221
  %v1253 = vunpack.c.h.b16 %v1221
  %v1254 = vunpack.c.l.b16 %v1222
  %v1255 = vunpack.c.h.b16 %v1222
  %v1256 = vunpack.c.l.b16 %v1223
  %v1257 = vunpack.c.h.b16 %v1223
  %v1258 = vunpack.c.l.b16 %v1224
  %v1259 = vunpack.c.l.b16 %v1225
  %v1260 = vunpack.c.h.b16 %v1225
  %v1261 = vunpack.c.l.b16 %v1226
  %v1262 = vunpack.c.h.b16 %v1226
  %v1263 = vunpack.c.l.b16 %v1227
  %v1264 = vunpack.c.h.b16 %v1227
  %v1265 = vunpack.c.l.b16 %v1228
  %v1266 = vunpack.c.h.b16 %v1228
  %v1267 = vunpack.c.l.b16 %v1229
  %v1268 = vunpack.c.h.b16 %v1229
  %v1269 = vunpack.c.l.b16 %v1230
  %v1270 = vunpack.c.h.b16 %v1230
  %v1271 = vunpack.c.l.b16 %v1231
  %v1272 = vpack.c.b16 %v1259, %v1246
  %v1273 = vpack.c.b16 %v1260, %v1247
  %v1274 = vpack.c.b16 %v1261, %v1248
  %v1275 = vpack.c.b16 %v1262, %v1249
  %v1276 = vpack.c.b16 %v1263, %v1250
  %v1277 = vpack.c.b16 %v1264, %v1251
  %v1278 = vpack.c.b16 %v1265, %v1252
  %v1279 = vpack.c.b16 %v1266, %v1253
  %v1280 = vpack.c.b16 %v1267, %v1254
  %v1281 = vpack.c.b16 %v1268, %v1255
  %v1282 = vpack.c.b16 %v1269, %v1256
  %v1283 = vpack.c.b16 %v1270, %v1257
  %v1284 = vpack.c.b16 %v1271, %v1258
  %1298 = vmatpush.bf16.msra.mxu0 %v748
  %1299 = vmatpush.bf16.msra.mxu0 %v747
  %1300 = vmatpush.bf16.msra.mxu0 %v746
  %1301 = vmatpush.bf16.msra.mxu0 %v745
  %1302 = vmatpush.bf16.msra.mxu0 %v744
  %1303 = vmatpush.bf16.msra.mxu0 %v743
  %1304 = vmatpush.bf16.msra.mxu0 %v742
  %1305 = vmatpush.bf16.msra.mxu0 %v741
  %1306 = vmatmul.bf16.gmra.mxu0 %v1272
  %v1307 = vpop.f32.mrf.mxu0
  %v1308 = vadd.f32 %v257, %v1307
  %v1309 = vpop.f32.mrf.mxu0
  %v1310 = vadd.f32 %v257, %v1309
  %1311 = vdwg.mxu0
  %1312 = vmatpush.bf16.msra.mxu0 %v756
  %1313 = vmatpush.bf16.msra.mxu0 %v755
  %1314 = vmatpush.bf16.msra.mxu0 %v754
  %1315 = vmatpush.bf16.msra.mxu0 %v753
  %1316 = vmatpush.bf16.msra.mxu0 %v752
  %1317 = vmatpush.bf16.msra.mxu0 %v751
  %1318 = vmatpush.bf16.msra.mxu0 %v750
  %1319 = vmatpush.bf16.msra.mxu0 %v749
  %1320 = vmatmul.bf16.gmra.mxu0 %v1273
  %v1321 = vpop.f32.mrf.mxu0
  %v1322 = vadd.f32 %v1308, %v1321
  %v1323 = vpop.f32.mrf.mxu0
  %v1324 = vadd.f32 %v1310, %v1323
  %1325 = vdwg.mxu0
  %1326 = vmatpush.bf16.msra.mxu0 %v764
  %1327 = vmatpush.bf16.msra.mxu0 %v763
  %1328 = vmatpush.bf16.msra.mxu0 %v762
  %1329 = vmatpush.bf16.msra.mxu0 %v761
  %1330 = vmatpush.bf16.msra.mxu0 %v760
  %1331 = vmatpush.bf16.msra.mxu0 %v759
  %1332 = vmatpush.bf16.msra.mxu0 %v758
  %1333 = vmatpush.bf16.msra.mxu0 %v757
  %1334 = vmatmul.bf16.gmra.mxu0 %v1274
  %v1335 = vpop.f32.mrf.mxu0
  %v1336 = vadd.f32 %v1322, %v1335
  %v1337 = vpop.f32.mrf.mxu0
  %v1338 = vadd.f32 %v1324, %v1337
  %1339 = vdwg.mxu0
  %1340 = vmatpush.bf16.msra.mxu0 %v772
  %1341 = vmatpush.bf16.msra.mxu0 %v771
  %1342 = vmatpush.bf16.msra.mxu0 %v770
  %1343 = vmatpush.bf16.msra.mxu0 %v769
  %1344 = vmatpush.bf16.msra.mxu0 %v768
  %1345 = vmatpush.bf16.msra.mxu0 %v767
  %1346 = vmatpush.bf16.msra.mxu0 %v766
  %1347 = vmatpush.bf16.msra.mxu0 %v765
  %1348 = vmatmul.bf16.gmra.mxu0 %v1275
  %v1349 = vpop.f32.mrf.mxu0
  %v1350 = vadd.f32 %v1336, %v1349
  %v1351 = vpop.f32.mrf.mxu0
  %v1352 = vadd.f32 %v1338, %v1351
  %1353 = vdwg.mxu0
  %1354 = vmatpush.bf16.msra.mxu0 %v780
  %1355 = vmatpush.bf16.msra.mxu0 %v779
  %1356 = vmatpush.bf16.msra.mxu0 %v778
  %1357 = vmatpush.bf16.msra.mxu0 %v777
  %1358 = vmatpush.bf16.msra.mxu0 %v776
  %1359 = vmatpush.bf16.msra.mxu0 %v775
  %1360 = vmatpush.bf16.msra.mxu0 %v774
  %1361 = vmatpush.bf16.msra.mxu0 %v773
  %1362 = vmatmul.bf16.gmra.mxu0 %v1276
  %v1363 = vpop.f32.mrf.mxu0
  %v1364 = vadd.f32 %v1350, %v1363
  %v1365 = vpop.f32.mrf.mxu0
  %v1366 = vadd.f32 %v1352, %v1365
  %1367 = vdwg.mxu0
  %1368 = vmatpush.bf16.msra.mxu0 %v788
  %1369 = vmatpush.bf16.msra.mxu0 %v787
  %1370 = vmatpush.bf16.msra.mxu0 %v786
  %1371 = vmatpush.bf16.msra.mxu0 %v785
  %1372 = vmatpush.bf16.msra.mxu0 %v784
  %1373 = vmatpush.bf16.msra.mxu0 %v783
  %1374 = vmatpush.bf16.msra.mxu0 %v782
  %1375 = vmatpush.bf16.msra.mxu0 %v781
  %1376 = vmatmul.bf16.gmra.mxu0 %v1277
  %v1377 = vpop.f32.mrf.mxu0
  %v1378 = vadd.f32 %v1364, %v1377
  %v1379 = vpop.f32.mrf.mxu0
  %v1380 = vadd.f32 %v1366, %v1379
  %1381 = vdwg.mxu0
  %1382 = vmatpush.bf16.msra.mxu0 %v796
  %1383 = vmatpush.bf16.msra.mxu0 %v795
  %1384 = vmatpush.bf16.msra.mxu0 %v794
  %1385 = vmatpush.bf16.msra.mxu0 %v793
  %1386 = vmatpush.bf16.msra.mxu0 %v792
  %1387 = vmatpush.bf16.msra.mxu0 %v791
  %1388 = vmatpush.bf16.msra.mxu0 %v790
  %1389 = vmatpush.bf16.msra.mxu0 %v789
  %1390 = vmatmul.bf16.gmra.mxu0 %v1278
  %v1391 = vpop.f32.mrf.mxu0
  %v1392 = vadd.f32 %v1378, %v1391
  %v1393 = vpop.f32.mrf.mxu0
  %v1394 = vadd.f32 %v1380, %v1393
  %1395 = vdwg.mxu0
  %1396 = vmatpush.bf16.msra.mxu0 %v804
  %1397 = vmatpush.bf16.msra.mxu0 %v803
  %1398 = vmatpush.bf16.msra.mxu0 %v802
  %1399 = vmatpush.bf16.msra.mxu0 %v801
  %1400 = vmatpush.bf16.msra.mxu0 %v800
  %1401 = vmatpush.bf16.msra.mxu0 %v799
  %1402 = vmatpush.bf16.msra.mxu0 %v798
  %1403 = vmatpush.bf16.msra.mxu0 %v797
  %1404 = vmatmul.bf16.gmra.mxu0 %v1279
  %v1405 = vpop.f32.mrf.mxu0
  %v1406 = vadd.f32 %v1392, %v1405
  %v1407 = vpop.f32.mrf.mxu0
  %v1408 = vadd.f32 %v1394, %v1407
  %1409 = vdwg.mxu0
  %1410 = vmatpush.bf16.msra.mxu0 %v812
  %1411 = vmatpush.bf16.msra.mxu0 %v811
  %1412 = vmatpush.bf16.msra.mxu0 %v810
  %1413 = vmatpush.bf16.msra.mxu0 %v809
  %1414 = vmatpush.bf16.msra.mxu0 %v808
  %1415 = vmatpush.bf16.msra.mxu0 %v807
  %1416 = vmatpush.bf16.msra.mxu0 %v806
  %1417 = vmatpush.bf16.msra.mxu0 %v805
  %1418 = vmatmul.bf16.gmra.mxu0 %v1280
  %v1419 = vpop.f32.mrf.mxu0
  %v1420 = vadd.f32 %v1406, %v1419
  %v1421 = vpop.f32.mrf.mxu0
  %v1422 = vadd.f32 %v1408, %v1421
  %1423 = vdwg.mxu0
  %1424 = vmatpush.bf16.msra.mxu0 %v820
  %1425 = vmatpush.bf16.msra.mxu0 %v819
  %1426 = vmatpush.bf16.msra.mxu0 %v818
  %1427 = vmatpush.bf16.msra.mxu0 %v817
  %1428 = vmatpush.bf16.msra.mxu0 %v816
  %1429 = vmatpush.bf16.msra.mxu0 %v815
  %1430 = vmatpush.bf16.msra.mxu0 %v814
  %1431 = vmatpush.bf16.msra.mxu0 %v813
  %1432 = vmatmul.bf16.gmra.mxu0 %v1281
  %v1433 = vpop.f32.mrf.mxu0
  %v1434 = vadd.f32 %v1420, %v1433
  %v1435 = vpop.f32.mrf.mxu0
  %v1436 = vadd.f32 %v1422, %v1435
  %1437 = vdwg.mxu0
  %1438 = vmatpush.bf16.msra.mxu0 %v828
  %1439 = vmatpush.bf16.msra.mxu0 %v827
  %1440 = vmatpush.bf16.msra.mxu0 %v826
  %1441 = vmatpush.bf16.msra.mxu0 %v825
  %1442 = vmatpush.bf16.msra.mxu0 %v824
  %1443 = vmatpush.bf16.msra.mxu0 %v823
  %1444 = vmatpush.bf16.msra.mxu0 %v822
  %1445 = vmatpush.bf16.msra.mxu0 %v821
  %1446 = vmatmul.bf16.gmra.mxu0 %v1282
  %v1447 = vpop.f32.mrf.mxu0
  %v1448 = vadd.f32 %v1434, %v1447
  %v1449 = vpop.f32.mrf.mxu0
  %v1450 = vadd.f32 %v1436, %v1449
  %1451 = vdwg.mxu0
  %1452 = vmatpush.bf16.msra.mxu0 %v836
  %1453 = vmatpush.bf16.msra.mxu0 %v835
  %1454 = vmatpush.bf16.msra.mxu0 %v834
  %1455 = vmatpush.bf16.msra.mxu0 %v833
  %1456 = vmatpush.bf16.msra.mxu0 %v832
  %1457 = vmatpush.bf16.msra.mxu0 %v831
  %1458 = vmatpush.bf16.msra.mxu0 %v830
  %1459 = vmatpush.bf16.msra.mxu0 %v829
  %1460 = vmatmul.bf16.gmra.mxu0 %v1283
  %v1461 = vpop.f32.mrf.mxu0
  %v1462 = vadd.f32 %v1448, %v1461
  %v1463 = vpop.f32.mrf.mxu0
  %v1464 = vadd.f32 %v1450, %v1463
  %1465 = vdwg.mxu0
  %1466 = vmatpush.bf16.msra.mxu0 %v844
  %1467 = vmatpush.bf16.msra.mxu0 %v843
  %1468 = vmatpush.bf16.msra.mxu0 %v842
  %1469 = vmatpush.bf16.msra.mxu0 %v841
  %1470 = vmatpush.bf16.msra.mxu0 %v840
  %1471 = vmatpush.bf16.msra.mxu0 %v839
  %1472 = vmatpush.bf16.msra.mxu0 %v838
  %1473 = vmatpush.bf16.msra.mxu0 %v837
  %1474 = vmatmul.bf16.gmra.mxu0 %v1284
  %v1475 = vpop.f32.mrf.mxu0
  %v1476 = vadd.f32 %v1462, %v1475
  %v1477 = vpop.f32.mrf.mxu0
  %v1478 = vadd.f32 %v1464, %v1477
  %1479 = vdwg.mxu0
  %v1480 = vmax.f32 %v1476, 0.0
  %v1481 = vmax.f32 %v1478, 0.0
  %v1482 = vpack.c.bf16 %v1481, %v1480
  %s1483 = scalar_lea.vmem %s3, 64
  %v1484 = vld [vmem:[%s1483] sm:$0xf]
  %v1485 = vld [vmem:[%s1483 + $0x4] sm:$0xf]
  %v1486 = vld [vmem:[%s1483 + $0x8] sm:$0xf]
  %v1487 = vld [vmem:[%s1483 + $0xc] sm:$0xf]
  %v1488 = vld [vmem:[%s1483 + $0x10] sm:$0xf]
  %v1489 = vld [vmem:[%s1483 + $0x14] sm:$0xf]
  %v1490 = vld [vmem:[%s1483 + $0x18] sm:$0xf]
  %v1491 = vld [vmem:[%s1483 + $0x1c] sm:$0xf]
  %v1492 = vld [vmem:[%s1483 + $0x20] sm:$0xf]
  %v1493 = vld [vmem:[%s1483 + $0x24] sm:$0xf]
  %v1494 = vld [vmem:[%s1483 + $0x28] sm:$0xf]
  %v1495 = vld [vmem:[%s1483 + $0x2c] sm:$0xf]
  %v1496 = vld [vmem:[%s1483 + $0x30] sm:$0xf]
  %v1497 = vld [vmem:[%s1483 + $0x34] sm:$0xf]
  %v1498 = vld [vmem:[%s1483 + $0x38] sm:$0xf]
  %v1499 = vld [vmem:[%s1483 + $0x3c] sm:$0xf]
  %v1516 = vunpack.c.l.b16 %v1484
  %v1517 = vunpack.c.l.b16 %v1485
  %v1518 = vunpack.c.l.b16 %v1486
  %v1519 = vunpack.c.l.b16 %v1487
  %v1520 = vunpack.c.l.b16 %v1488
  %v1521 = vunpack.c.l.b16 %v1489
  %v1522 = vunpack.c.l.b16 %v1490
  %v1523 = vunpack.c.l.b16 %v1491
  %v1524 = vunpack.c.l.b16 %v1492
  %v1525 = vunpack.c.l.b16 %v1493
  %v1526 = vunpack.c.l.b16 %v1494
  %v1527 = vunpack.c.l.b16 %v1495
  %v1528 = vunpack.c.l.b16 %v1496
  %v1529 = vunpack.c.l.b16 %v1497
  %v1530 = vunpack.c.l.b16 %v1498
  %v1531 = vunpack.c.l.b16 %v1499
  %v1532 = vpack.c.b16 %v1517, %v1516
  %v1533 = vpack.c.b16 %v1519, %v1518
  %v1534 = vpack.c.b16 %v1521, %v1520
  %v1535 = vpack.c.b16 %v1523, %v1522
  %v1536 = vpack.c.b16 %v1525, %v1524
  %v1537 = vpack.c.b16 %v1527, %v1526
  %v1538 = vpack.c.b16 %v1529, %v1528
  %v1539 = vpack.c.b16 %v1531, %v1530
  %1548 = vmatpush.bf16.msra.mxu0 %v1539
  %1549 = vmatpush.bf16.msra.mxu0 %v1538
  %1550 = vmatpush.bf16.msra.mxu0 %v1537
  %1551 = vmatpush.bf16.msra.mxu0 %v1536
  %1552 = vmatpush.bf16.msra.mxu0 %v1535
  %1553 = vmatpush.bf16.msra.mxu0 %v1534
  %1554 = vmatpush.bf16.msra.mxu0 %v1533
  %1555 = vmatpush.bf16.msra.mxu0 %v1532
  %1556 = vmatmul.bf16.gmra.mxu0 %v1482
  %v1557 = vpop.f32.mrf.mxu0
  %v1558 = vadd.f32 0.0, %v1557
  %v1559 = vpop.f32.mrf.mxu0
  %v1560 = vadd.f32 0.0, %v1559
  %1561 = vdwg.mxu0
  %v1562 = vadd.f32 %v1215, %v1558
  %v1563 = vadd.f32 %v1216, %v1560
  %s1564 = scalar_lea.vmem %s0, 208
  %v1565 = vld [vmem:[%s1564] sm:$0xff]
  %v1566 = vld [vmem:[%s1564 + $0x8] sm:$0xff]
  %v1567 = vld [vmem:[%s1564 + $0x10] sm:$0xff]
  %v1568 = vld [vmem:[%s1564 + $0x18] sm:$0xff]
  %v1569 = vld [vmem:[%s1564 + $0x20] sm:$0xff]
  %v1570 = vld [vmem:[%s1564 + $0x28] sm:$0xff]
  %v1571 = vld [vmem:[%s1564 + $0x30] sm:$0xf]
  %v1572 = vld [vmem:[%s1564 + $0x34] sm:$0xff]
  %v1573 = vld [vmem:[%s1564 + $0x3c] sm:$0xff]
  %v1574 = vld [vmem:[%s1564 + $0x44] sm:$0xff]
  %v1575 = vld [vmem:[%s1564 + $0x4c] sm:$0xff]
  %v1576 = vld [vmem:[%s1564 + $0x54] sm:$0xff]
  %v1577 = vld [vmem:[%s1564 + $0x5c] sm:$0xff]
  %v1578 = vld [vmem:[%s1564 + $0x64] sm:$0xf]
  %v1593 = vunpack.c.l.b16 %v1565
  %v1594 = vunpack.c.h.b16 %v1565
  %v1595 = vunpack.c.l.b16 %v1566
  %v1596 = vunpack.c.h.b16 %v1566
  %v1597 = vunpack.c.l.b16 %v1567
  %v1598 = vunpack.c.h.b16 %v1567
  %v1599 = vunpack.c.l.b16 %v1568
  %v1600 = vunpack.c.h.b16 %v1568
  %v1601 = vunpack.c.l.b16 %v1569
  %v1602 = vunpack.c.h.b16 %v1569
  %v1603 = vunpack.c.l.b16 %v1570
  %v1604 = vunpack.c.h.b16 %v1570
  %v1605 = vunpack.c.l.b16 %v1571
  %v1606 = vunpack.c.l.b16 %v1572
  %v1607 = vunpack.c.h.b16 %v1572
  %v1608 = vunpack.c.l.b16 %v1573
  %v1609 = vunpack.c.h.b16 %v1573
  %v1610 = vunpack.c.l.b16 %v1574
  %v1611 = vunpack.c.h.b16 %v1574
  %v1612 = vunpack.c.l.b16 %v1575
  %v1613 = vunpack.c.h.b16 %v1575
  %v1614 = vunpack.c.l.b16 %v1576
  %v1615 = vunpack.c.h.b16 %v1576
  %v1616 = vunpack.c.l.b16 %v1577
  %v1617 = vunpack.c.h.b16 %v1577
  %v1618 = vunpack.c.l.b16 %v1578
  %v1619 = vpack.c.b16 %v1606, %v1593
  %v1620 = vpack.c.b16 %v1607, %v1594
  %v1621 = vpack.c.b16 %v1608, %v1595
  %v1622 = vpack.c.b16 %v1609, %v1596
  %v1623 = vpack.c.b16 %v1610, %v1597
  %v1624 = vpack.c.b16 %v1611, %v1598
  %v1625 = vpack.c.b16 %v1612, %v1599
  %v1626 = vpack.c.b16 %v1613, %v1600
  %v1627 = vpack.c.b16 %v1614, %v1601
  %v1628 = vpack.c.b16 %v1615, %v1602
  %v1629 = vpack.c.b16 %v1616, %v1603
  %v1630 = vpack.c.b16 %v1617, %v1604
  %v1631 = vpack.c.b16 %v1618, %v1605
  %1645 = vmatpush.bf16.msra.mxu0 %v748
  %1646 = vmatpush.bf16.msra.mxu0 %v747
  %1647 = vmatpush.bf16.msra.mxu0 %v746
  %1648 = vmatpush.bf16.msra.mxu0 %v745
  %1649 = vmatpush.bf16.msra.mxu0 %v744
  %1650 = vmatpush.bf16.msra.mxu0 %v743
  %1651 = vmatpush.bf16.msra.mxu0 %v742
  %1652 = vmatpush.bf16.msra.mxu0 %v741
  %1653 = vmatmul.bf16.gmra.mxu0 %v1619
  %v1654 = vpop.f32.mrf.mxu0
  %v1655 = vadd.f32 %v257, %v1654
  %v1656 = vpop.f32.mrf.mxu0
  %v1657 = vadd.f32 %v257, %v1656
  %1658 = vdwg.mxu0
  %1659 = vmatpush.bf16.msra.mxu0 %v756
  %1660 = vmatpush.bf16.msra.mxu0 %v755
  %1661 = vmatpush.bf16.msra.mxu0 %v754
  %1662 = vmatpush.bf16.msra.mxu0 %v753
  %1663 = vmatpush.bf16.msra.mxu0 %v752
  %1664 = vmatpush.bf16.msra.mxu0 %v751
  %1665 = vmatpush.bf16.msra.mxu0 %v750
  %1666 = vmatpush.bf16.msra.mxu0 %v749
  %1667 = vmatmul.bf16.gmra.mxu0 %v1620
  %v1668 = vpop.f32.mrf.mxu0
  %v1669 = vadd.f32 %v1655, %v1668
  %v1670 = vpop.f32.mrf.mxu0
  %v1671 = vadd.f32 %v1657, %v1670
  %1672 = vdwg.mxu0
  %1673 = vmatpush.bf16.msra.mxu0 %v764
  %1674 = vmatpush.bf16.msra.mxu0 %v763
  %1675 = vmatpush.bf16.msra.mxu0 %v762
  %1676 = vmatpush.bf16.msra.mxu0 %v761
  %1677 = vmatpush.bf16.msra.mxu0 %v760
  %1678 = vmatpush.bf16.msra.mxu0 %v759
  %1679 = vmatpush.bf16.msra.mxu0 %v758
  %1680 = vmatpush.bf16.msra.mxu0 %v757
  %1681 = vmatmul.bf16.gmra.mxu0 %v1621
  %v1682 = vpop.f32.mrf.mxu0
  %v1683 = vadd.f32 %v1669, %v1682
  %v1684 = vpop.f32.mrf.mxu0
  %v1685 = vadd.f32 %v1671, %v1684
  %1686 = vdwg.mxu0
  %1687 = vmatpush.bf16.msra.mxu0 %v772
  %1688 = vmatpush.bf16.msra.mxu0 %v771
  %1689 = vmatpush.bf16.msra.mxu0 %v770
  %1690 = vmatpush.bf16.msra.mxu0 %v769
  %1691 = vmatpush.bf16.msra.mxu0 %v768
  %1692 = vmatpush.bf16.msra.mxu0 %v767
  %1693 = vmatpush.bf16.msra.mxu0 %v766
  %1694 = vmatpush.bf16.msra.mxu0 %v765
  %1695 = vmatmul.bf16.gmra.mxu0 %v1622
  %v1696 = vpop.f32.mrf.mxu0
  %v1697 = vadd.f32 %v1683, %v1696
  %v1698 = vpop.f32.mrf.mxu0
  %v1699 = vadd.f32 %v1685, %v1698
  %1700 = vdwg.mxu0
  %1701 = vmatpush.bf16.msra.mxu0 %v780
  %1702 = vmatpush.bf16.msra.mxu0 %v779
  %1703 = vmatpush.bf16.msra.mxu0 %v778
  %1704 = vmatpush.bf16.msra.mxu0 %v777
  %1705 = vmatpush.bf16.msra.mxu0 %v776
  %1706 = vmatpush.bf16.msra.mxu0 %v775
  %1707 = vmatpush.bf16.msra.mxu0 %v774
  %1708 = vmatpush.bf16.msra.mxu0 %v773
  %1709 = vmatmul.bf16.gmra.mxu0 %v1623
  %v1710 = vpop.f32.mrf.mxu0
  %v1711 = vadd.f32 %v1697, %v1710
  %v1712 = vpop.f32.mrf.mxu0
  %v1713 = vadd.f32 %v1699, %v1712
  %1714 = vdwg.mxu0
  %1715 = vmatpush.bf16.msra.mxu0 %v788
  %1716 = vmatpush.bf16.msra.mxu0 %v787
  %1717 = vmatpush.bf16.msra.mxu0 %v786
  %1718 = vmatpush.bf16.msra.mxu0 %v785
  %1719 = vmatpush.bf16.msra.mxu0 %v784
  %1720 = vmatpush.bf16.msra.mxu0 %v783
  %1721 = vmatpush.bf16.msra.mxu0 %v782
  %1722 = vmatpush.bf16.msra.mxu0 %v781
  %1723 = vmatmul.bf16.gmra.mxu0 %v1624
  %v1724 = vpop.f32.mrf.mxu0
  %v1725 = vadd.f32 %v1711, %v1724
  %v1726 = vpop.f32.mrf.mxu0
  %v1727 = vadd.f32 %v1713, %v1726
  %1728 = vdwg.mxu0
  %1729 = vmatpush.bf16.msra.mxu0 %v796
  %1730 = vmatpush.bf16.msra.mxu0 %v795
  %1731 = vmatpush.bf16.msra.mxu0 %v794
  %1732 = vmatpush.bf16.msra.mxu0 %v793
  %1733 = vmatpush.bf16.msra.mxu0 %v792
  %1734 = vmatpush.bf16.msra.mxu0 %v791
  %1735 = vmatpush.bf16.msra.mxu0 %v790
  %1736 = vmatpush.bf16.msra.mxu0 %v789
  %1737 = vmatmul.bf16.gmra.mxu0 %v1625
  %v1738 = vpop.f32.mrf.mxu0
  %v1739 = vadd.f32 %v1725, %v1738
  %v1740 = vpop.f32.mrf.mxu0
  %v1741 = vadd.f32 %v1727, %v1740
  %1742 = vdwg.mxu0
  %1743 = vmatpush.bf16.msra.mxu0 %v804
  %1744 = vmatpush.bf16.msra.mxu0 %v803
  %1745 = vmatpush.bf16.msra.mxu0 %v802
  %1746 = vmatpush.bf16.msra.mxu0 %v801
  %1747 = vmatpush.bf16.msra.mxu0 %v800
  %1748 = vmatpush.bf16.msra.mxu0 %v799
  %1749 = vmatpush.bf16.msra.mxu0 %v798
  %1750 = vmatpush.bf16.msra.mxu0 %v797
  %1751 = vmatmul.bf16.gmra.mxu0 %v1626
  %v1752 = vpop.f32.mrf.mxu0
  %v1753 = vadd.f32 %v1739, %v1752
  %v1754 = vpop.f32.mrf.mxu0
  %v1755 = vadd.f32 %v1741, %v1754
  %1756 = vdwg.mxu0
  %1757 = vmatpush.bf16.msra.mxu0 %v812
  %1758 = vmatpush.bf16.msra.mxu0 %v811
  %1759 = vmatpush.bf16.msra.mxu0 %v810
  %1760 = vmatpush.bf16.msra.mxu0 %v809
  %1761 = vmatpush.bf16.msra.mxu0 %v808
  %1762 = vmatpush.bf16.msra.mxu0 %v807
  %1763 = vmatpush.bf16.msra.mxu0 %v806
  %1764 = vmatpush.bf16.msra.mxu0 %v805
  %1765 = vmatmul.bf16.gmra.mxu0 %v1627
  %v1766 = vpop.f32.mrf.mxu0
  %v1767 = vadd.f32 %v1753, %v1766
  %v1768 = vpop.f32.mrf.mxu0
  %v1769 = vadd.f32 %v1755, %v1768
  %1770 = vdwg.mxu0
  %1771 = vmatpush.bf16.msra.mxu0 %v820
  %1772 = vmatpush.bf16.msra.mxu0 %v819
  %1773 = vmatpush.bf16.msra.mxu0 %v818
  %1774 = vmatpush.bf16.msra.mxu0 %v817
  %1775 = vmatpush.bf16.msra.mxu0 %v816
  %1776 = vmatpush.bf16.msra.mxu0 %v815
  %1777 = vmatpush.bf16.msra.mxu0 %v814
  %1778 = vmatpush.bf16.msra.mxu0 %v813
  %1779 = vmatmul.bf16.gmra.mxu0 %v1628
  %v1780 = vpop.f32.mrf.mxu0
  %v1781 = vadd.f32 %v1767, %v1780
  %v1782 = vpop.f32.mrf.mxu0
  %v1783 = vadd.f32 %v1769, %v1782
  %1784 = vdwg.mxu0
  %1785 = vmatpush.bf16.msra.mxu0 %v828
  %1786 = vmatpush.bf16.msra.mxu0 %v827
  %1787 = vmatpush.bf16.msra.mxu0 %v826
  %1788 = vmatpush.bf16.msra.mxu0 %v825
  %1789 = vmatpush.bf16.msra.mxu0 %v824
  %1790 = vmatpush.bf16.msra.mxu0 %v823
  %1791 = vmatpush.bf16.msra.mxu0 %v822
  %1792 = vmatpush.bf16.msra.mxu0 %v821
  %1793 = vmatmul.bf16.gmra.mxu0 %v1629
  %v1794 = vpop.f32.mrf.mxu0
  %v1795 = vadd.f32 %v1781, %v1794
  %v1796 = vpop.f32.mrf.mxu0
  %v1797 = vadd.f32 %v1783, %v1796
  %1798 = vdwg.mxu0
  %1799 = vmatpush.bf16.msra.mxu0 %v836
  %1800 = vmatpush.bf16.msra.mxu0 %v835
  %1801 = vmatpush.bf16.msra.mxu0 %v834
  %1802 = vmatpush.bf16.msra.mxu0 %v833
  %1803 = vmatpush.bf16.msra.mxu0 %v832
  %1804 = vmatpush.bf16.msra.mxu0 %v831
  %1805 = vmatpush.bf16.msra.mxu0 %v830
  %1806 = vmatpush.bf16.msra.mxu0 %v829
  %1807 = vmatmul.bf16.gmra.mxu0 %v1630
  %v1808 = vpop.f32.mrf.mxu0
  %v1809 = vadd.f32 %v1795, %v1808
  %v1810 = vpop.f32.mrf.mxu0
  %v1811 = vadd.f32 %v1797, %v1810
  %1812 = vdwg.mxu0
  %1813 = vmatpush.bf16.msra.mxu0 %v844
  %1814 = vmatpush.bf16.msra.mxu0 %v843
  %1815 = vmatpush.bf16.msra.mxu0 %v842
  %1816 = vmatpush.bf16.msra.mxu0 %v841
  %1817 = vmatpush.bf16.msra.mxu0 %v840
  %1818 = vmatpush.bf16.msra.mxu0 %v839
  %1819 = vmatpush.bf16.msra.mxu0 %v838
  %1820 = vmatpush.bf16.msra.mxu0 %v837
  %1821 = vmatmul.bf16.gmra.mxu0 %v1631
  %v1822 = vpop.f32.mrf.mxu0
  %v1823 = vadd.f32 %v1809, %v1822
  %v1824 = vpop.f32.mrf.mxu0
  %v1825 = vadd.f32 %v1811, %v1824
  %1826 = vdwg.mxu0
  %v1827 = vmax.f32 %v1823, 0.0
  %v1828 = vmax.f32 %v1825, 0.0
  %v1829 = vpack.c.bf16 %v1828, %v1827
  %s1830 = scalar_lea.vmem %s3, 128
  %v1831 = vld [vmem:[%s1830] sm:$0xf]
  %v1832 = vld [vmem:[%s1830 + $0x4] sm:$0xf]
  %v1833 = vld [vmem:[%s1830 + $0x8] sm:$0xf]
  %v1834 = vld [vmem:[%s1830 + $0xc] sm:$0xf]
  %v1835 = vld [vmem:[%s1830 + $0x10] sm:$0xf]
  %v1836 = vld [vmem:[%s1830 + $0x14] sm:$0xf]
  %v1837 = vld [vmem:[%s1830 + $0x18] sm:$0xf]
  %v1838 = vld [vmem:[%s1830 + $0x1c] sm:$0xf]
  %v1839 = vld [vmem:[%s1830 + $0x20] sm:$0xf]
  %v1840 = vld [vmem:[%s1830 + $0x24] sm:$0xf]
  %v1841 = vld [vmem:[%s1830 + $0x28] sm:$0xf]
  %v1842 = vld [vmem:[%s1830 + $0x2c] sm:$0xf]
  %v1843 = vld [vmem:[%s1830 + $0x30] sm:$0xf]
  %v1844 = vld [vmem:[%s1830 + $0x34] sm:$0xf]
  %v1845 = vld [vmem:[%s1830 + $0x38] sm:$0xf]
  %v1846 = vld [vmem:[%s1830 + $0x3c] sm:$0xf]
  %v1863 = vunpack.c.l.b16 %v1831
  %v1864 = vunpack.c.l.b16 %v1832
  %v1865 = vunpack.c.l.b16 %v1833
  %v1866 = vunpack.c.l.b16 %v1834
  %v1867 = vunpack.c.l.b16 %v1835
  %v1868 = vunpack.c.l.b16 %v1836
  %v1869 = vunpack.c.l.b16 %v1837
  %v1870 = vunpack.c.l.b16 %v1838
  %v1871 = vunpack.c.l.b16 %v1839
  %v1872 = vunpack.c.l.b16 %v1840
  %v1873 = vunpack.c.l.b16 %v1841
  %v1874 = vunpack.c.l.b16 %v1842
  %v1875 = vunpack.c.l.b16 %v1843
  %v1876 = vunpack.c.l.b16 %v1844
  %v1877 = vunpack.c.l.b16 %v1845
  %v1878 = vunpack.c.l.b16 %v1846
  %v1879 = vpack.c.b16 %v1864, %v1863
  %v1880 = vpack.c.b16 %v1866, %v1865
  %v1881 = vpack.c.b16 %v1868, %v1867
  %v1882 = vpack.c.b16 %v1870, %v1869
  %v1883 = vpack.c.b16 %v1872, %v1871
  %v1884 = vpack.c.b16 %v1874, %v1873
  %v1885 = vpack.c.b16 %v1876, %v1875
  %v1886 = vpack.c.b16 %v1878, %v1877
  %1895 = vmatpush.bf16.msra.mxu0 %v1886
  %1896 = vmatpush.bf16.msra.mxu0 %v1885
  %1897 = vmatpush.bf16.msra.mxu0 %v1884
  %1898 = vmatpush.bf16.msra.mxu0 %v1883
  %1899 = vmatpush.bf16.msra.mxu0 %v1882
  %1900 = vmatpush.bf16.msra.mxu0 %v1881
  %1901 = vmatpush.bf16.msra.mxu0 %v1880
  %1902 = vmatpush.bf16.msra.mxu0 %v1879
  %1903 = vmatmul.bf16.gmra.mxu0 %v1829
  %v1904 = vpop.f32.mrf.mxu0
  %v1905 = vadd.f32 0.0, %v1904
  %v1906 = vpop.f32.mrf.mxu0
  %v1907 = vadd.f32 0.0, %v1906
  %1908 = vdwg.mxu0
  %v1909 = vadd.f32 %v1562, %v1905
  %v1910 = vadd.f32 %v1563, %v1907
  %s1911 = scalar_lea.vmem %s0, 312
  %v1912 = vld [vmem:[%s1911] sm:$0xff]
  %v1913 = vld [vmem:[%s1911 + $0x8] sm:$0xff]
  %v1914 = vld [vmem:[%s1911 + $0x10] sm:$0xff]
  %v1915 = vld [vmem:[%s1911 + $0x18] sm:$0xff]
  %v1916 = vld [vmem:[%s1911 + $0x20] sm:$0xff]
  %v1917 = vld [vmem:[%s1911 + $0x28] sm:$0xff]
  %v1918 = vld [vmem:[%s1911 + $0x30] sm:$0xf]
  %v1919 = vld [vmem:[%s1911 + $0x34] sm:$0xff]
  %v1920 = vld [vmem:[%s1911 + $0x3c] sm:$0xff]
  %v1921 = vld [vmem:[%s1911 + $0x44] sm:$0xff]
  %v1922 = vld [vmem:[%s1911 + $0x4c] sm:$0xff]
  %v1923 = vld [vmem:[%s1911 + $0x54] sm:$0xff]
  %v1924 = vld [vmem:[%s1911 + $0x5c] sm:$0xff]
  %v1925 = vld [vmem:[%s1911 + $0x64] sm:$0xf]
  %v1940 = vunpack.c.l.b16 %v1912
  %v1941 = vunpack.c.h.b16 %v1912
  %v1942 = vunpack.c.l.b16 %v1913
  %v1943 = vunpack.c.h.b16 %v1913
  %v1944 = vunpack.c.l.b16 %v1914
  %v1945 = vunpack.c.h.b16 %v1914
  %v1946 = vunpack.c.l.b16 %v1915
  %v1947 = vunpack.c.h.b16 %v1915
  %v1948 = vunpack.c.l.b16 %v1916
  %v1949 = vunpack.c.h.b16 %v1916
  %v1950 = vunpack.c.l.b16 %v1917
  %v1951 = vunpack.c.h.b16 %v1917
  %v1952 = vunpack.c.l.b16 %v1918
  %v1953 = vunpack.c.l.b16 %v1919
  %v1954 = vunpack.c.h.b16 %v1919
  %v1955 = vunpack.c.l.b16 %v1920
  %v1956 = vunpack.c.h.b16 %v1920
  %v1957 = vunpack.c.l.b16 %v1921
  %v1958 = vunpack.c.h.b16 %v1921
  %v1959 = vunpack.c.l.b16 %v1922
  %v1960 = vunpack.c.h.b16 %v1922
  %v1961 = vunpack.c.l.b16 %v1923
  %v1962 = vunpack.c.h.b16 %v1923
  %v1963 = vunpack.c.l.b16 %v1924
  %v1964 = vunpack.c.h.b16 %v1924
  %v1965 = vunpack.c.l.b16 %v1925
  %v1966 = vpack.c.b16 %v1953, %v1940
  %v1967 = vpack.c.b16 %v1954, %v1941
  %v1968 = vpack.c.b16 %v1955, %v1942
  %v1969 = vpack.c.b16 %v1956, %v1943
  %v1970 = vpack.c.b16 %v1957, %v1944
  %v1971 = vpack.c.b16 %v1958, %v1945
  %v1972 = vpack.c.b16 %v1959, %v1946
  %v1973 = vpack.c.b16 %v1960, %v1947
  %v1974 = vpack.c.b16 %v1961, %v1948
  %v1975 = vpack.c.b16 %v1962, %v1949
  %v1976 = vpack.c.b16 %v1963, %v1950
  %v1977 = vpack.c.b16 %v1964, %v1951
  %v1978 = vpack.c.b16 %v1965, %v1952
  %1992 = vmatpush.bf16.msra.mxu0 %v748
  %1993 = vmatpush.bf16.msra.mxu0 %v747
  %1994 = vmatpush.bf16.msra.mxu0 %v746
  %1995 = vmatpush.bf16.msra.mxu0 %v745
  %1996 = vmatpush.bf16.msra.mxu0 %v744
  %1997 = vmatpush.bf16.msra.mxu0 %v743
  %1998 = vmatpush.bf16.msra.mxu0 %v742
  %1999 = vmatpush.bf16.msra.mxu0 %v741
  %2000 = vmatmul.bf16.gmra.mxu0 %v1966
  %v2001 = vpop.f32.mrf.mxu0
  %v2002 = vadd.f32 %v257, %v2001
  %v2003 = vpop.f32.mrf.mxu0
  %v2004 = vadd.f32 %v257, %v2003
  %2005 = vdwg.mxu0
  %2006 = vmatpush.bf16.msra.mxu0 %v756
  %2007 = vmatpush.bf16.msra.mxu0 %v755
  %2008 = vmatpush.bf16.msra.mxu0 %v754
  %2009 = vmatpush.bf16.msra.mxu0 %v753
  %2010 = vmatpush.bf16.msra.mxu0 %v752
  %2011 = vmatpush.bf16.msra.mxu0 %v751
  %2012 = vmatpush.bf16.msra.mxu0 %v750
  %2013 = vmatpush.bf16.msra.mxu0 %v749
  %2014 = vmatmul.bf16.gmra.mxu0 %v1967
  %v2015 = vpop.f32.mrf.mxu0
  %v2016 = vadd.f32 %v2002, %v2015
  %v2017 = vpop.f32.mrf.mxu0
  %v2018 = vadd.f32 %v2004, %v2017
  %2019 = vdwg.mxu0
  %2020 = vmatpush.bf16.msra.mxu0 %v764
  %2021 = vmatpush.bf16.msra.mxu0 %v763
  %2022 = vmatpush.bf16.msra.mxu0 %v762
  %2023 = vmatpush.bf16.msra.mxu0 %v761
  %2024 = vmatpush.bf16.msra.mxu0 %v760
  %2025 = vmatpush.bf16.msra.mxu0 %v759
  %2026 = vmatpush.bf16.msra.mxu0 %v758
  %2027 = vmatpush.bf16.msra.mxu0 %v757
  %2028 = vmatmul.bf16.gmra.mxu0 %v1968
  %v2029 = vpop.f32.mrf.mxu0
  %v2030 = vadd.f32 %v2016, %v2029
  %v2031 = vpop.f32.mrf.mxu0
  %v2032 = vadd.f32 %v2018, %v2031
  %2033 = vdwg.mxu0
  %2034 = vmatpush.bf16.msra.mxu0 %v772
  %2035 = vmatpush.bf16.msra.mxu0 %v771
  %2036 = vmatpush.bf16.msra.mxu0 %v770
  %2037 = vmatpush.bf16.msra.mxu0 %v769
  %2038 = vmatpush.bf16.msra.mxu0 %v768
  %2039 = vmatpush.bf16.msra.mxu0 %v767
  %2040 = vmatpush.bf16.msra.mxu0 %v766
  %2041 = vmatpush.bf16.msra.mxu0 %v765
  %2042 = vmatmul.bf16.gmra.mxu0 %v1969
  %v2043 = vpop.f32.mrf.mxu0
  %v2044 = vadd.f32 %v2030, %v2043
  %v2045 = vpop.f32.mrf.mxu0
  %v2046 = vadd.f32 %v2032, %v2045
  %2047 = vdwg.mxu0
  %2048 = vmatpush.bf16.msra.mxu0 %v780
  %2049 = vmatpush.bf16.msra.mxu0 %v779
  %2050 = vmatpush.bf16.msra.mxu0 %v778
  %2051 = vmatpush.bf16.msra.mxu0 %v777
  %2052 = vmatpush.bf16.msra.mxu0 %v776
  %2053 = vmatpush.bf16.msra.mxu0 %v775
  %2054 = vmatpush.bf16.msra.mxu0 %v774
  %2055 = vmatpush.bf16.msra.mxu0 %v773
  %2056 = vmatmul.bf16.gmra.mxu0 %v1970
  %v2057 = vpop.f32.mrf.mxu0
  %v2058 = vadd.f32 %v2044, %v2057
  %v2059 = vpop.f32.mrf.mxu0
  %v2060 = vadd.f32 %v2046, %v2059
  %2061 = vdwg.mxu0
  %2062 = vmatpush.bf16.msra.mxu0 %v788
  %2063 = vmatpush.bf16.msra.mxu0 %v787
  %2064 = vmatpush.bf16.msra.mxu0 %v786
  %2065 = vmatpush.bf16.msra.mxu0 %v785
  %2066 = vmatpush.bf16.msra.mxu0 %v784
  %2067 = vmatpush.bf16.msra.mxu0 %v783
  %2068 = vmatpush.bf16.msra.mxu0 %v782
  %2069 = vmatpush.bf16.msra.mxu0 %v781
  %2070 = vmatmul.bf16.gmra.mxu0 %v1971
  %v2071 = vpop.f32.mrf.mxu0
  %v2072 = vadd.f32 %v2058, %v2071
  %v2073 = vpop.f32.mrf.mxu0
  %v2074 = vadd.f32 %v2060, %v2073
  %2075 = vdwg.mxu0
  %2076 = vmatpush.bf16.msra.mxu0 %v796
  %2077 = vmatpush.bf16.msra.mxu0 %v795
  %2078 = vmatpush.bf16.msra.mxu0 %v794
  %2079 = vmatpush.bf16.msra.mxu0 %v793
  %2080 = vmatpush.bf16.msra.mxu0 %v792
  %2081 = vmatpush.bf16.msra.mxu0 %v791
  %2082 = vmatpush.bf16.msra.mxu0 %v790
  %2083 = vmatpush.bf16.msra.mxu0 %v789
  %2084 = vmatmul.bf16.gmra.mxu0 %v1972
  %v2085 = vpop.f32.mrf.mxu0
  %v2086 = vadd.f32 %v2072, %v2085
  %v2087 = vpop.f32.mrf.mxu0
  %v2088 = vadd.f32 %v2074, %v2087
  %2089 = vdwg.mxu0
  %2090 = vmatpush.bf16.msra.mxu0 %v804
  %2091 = vmatpush.bf16.msra.mxu0 %v803
  %2092 = vmatpush.bf16.msra.mxu0 %v802
  %2093 = vmatpush.bf16.msra.mxu0 %v801
  %2094 = vmatpush.bf16.msra.mxu0 %v800
  %2095 = vmatpush.bf16.msra.mxu0 %v799
  %2096 = vmatpush.bf16.msra.mxu0 %v798
  %2097 = vmatpush.bf16.msra.mxu0 %v797
  %2098 = vmatmul.bf16.gmra.mxu0 %v1973
  %v2099 = vpop.f32.mrf.mxu0
  %v2100 = vadd.f32 %v2086, %v2099
  %v2101 = vpop.f32.mrf.mxu0
  %v2102 = vadd.f32 %v2088, %v2101
  %2103 = vdwg.mxu0
  %2104 = vmatpush.bf16.msra.mxu0 %v812
  %2105 = vmatpush.bf16.msra.mxu0 %v811
  %2106 = vmatpush.bf16.msra.mxu0 %v810
  %2107 = vmatpush.bf16.msra.mxu0 %v809
  %2108 = vmatpush.bf16.msra.mxu0 %v808
  %2109 = vmatpush.bf16.msra.mxu0 %v807
  %2110 = vmatpush.bf16.msra.mxu0 %v806
  %2111 = vmatpush.bf16.msra.mxu0 %v805
  %2112 = vmatmul.bf16.gmra.mxu0 %v1974
  %v2113 = vpop.f32.mrf.mxu0
  %v2114 = vadd.f32 %v2100, %v2113
  %v2115 = vpop.f32.mrf.mxu0
  %v2116 = vadd.f32 %v2102, %v2115
  %2117 = vdwg.mxu0
  %2118 = vmatpush.bf16.msra.mxu0 %v820
  %2119 = vmatpush.bf16.msra.mxu0 %v819
  %2120 = vmatpush.bf16.msra.mxu0 %v818
  %2121 = vmatpush.bf16.msra.mxu0 %v817
  %2122 = vmatpush.bf16.msra.mxu0 %v816
  %2123 = vmatpush.bf16.msra.mxu0 %v815
  %2124 = vmatpush.bf16.msra.mxu0 %v814
  %2125 = vmatpush.bf16.msra.mxu0 %v813
  %2126 = vmatmul.bf16.gmra.mxu0 %v1975
  %v2127 = vpop.f32.mrf.mxu0
  %v2128 = vadd.f32 %v2114, %v2127
  %v2129 = vpop.f32.mrf.mxu0
  %v2130 = vadd.f32 %v2116, %v2129
  %2131 = vdwg.mxu0
  %2132 = vmatpush.bf16.msra.mxu0 %v828
  %2133 = vmatpush.bf16.msra.mxu0 %v827
  %2134 = vmatpush.bf16.msra.mxu0 %v826
  %2135 = vmatpush.bf16.msra.mxu0 %v825
  %2136 = vmatpush.bf16.msra.mxu0 %v824
  %2137 = vmatpush.bf16.msra.mxu0 %v823
  %2138 = vmatpush.bf16.msra.mxu0 %v822
  %2139 = vmatpush.bf16.msra.mxu0 %v821
  %2140 = vmatmul.bf16.gmra.mxu0 %v1976
  %v2141 = vpop.f32.mrf.mxu0
  %v2142 = vadd.f32 %v2128, %v2141
  %v2143 = vpop.f32.mrf.mxu0
  %v2144 = vadd.f32 %v2130, %v2143
  %2145 = vdwg.mxu0
  %2146 = vmatpush.bf16.msra.mxu0 %v836
  %2147 = vmatpush.bf16.msra.mxu0 %v835
  %2148 = vmatpush.bf16.msra.mxu0 %v834
  %2149 = vmatpush.bf16.msra.mxu0 %v833
  %2150 = vmatpush.bf16.msra.mxu0 %v832
  %2151 = vmatpush.bf16.msra.mxu0 %v831
  %2152 = vmatpush.bf16.msra.mxu0 %v830
  %2153 = vmatpush.bf16.msra.mxu0 %v829
  %2154 = vmatmul.bf16.gmra.mxu0 %v1977
  %v2155 = vpop.f32.mrf.mxu0
  %v2156 = vadd.f32 %v2142, %v2155
  %v2157 = vpop.f32.mrf.mxu0
  %v2158 = vadd.f32 %v2144, %v2157
  %2159 = vdwg.mxu0
  %2160 = vmatpush.bf16.msra.mxu0 %v844
  %2161 = vmatpush.bf16.msra.mxu0 %v843
  %2162 = vmatpush.bf16.msra.mxu0 %v842
  %2163 = vmatpush.bf16.msra.mxu0 %v841
  %2164 = vmatpush.bf16.msra.mxu0 %v840
  %2165 = vmatpush.bf16.msra.mxu0 %v839
  %2166 = vmatpush.bf16.msra.mxu0 %v838
  %2167 = vmatpush.bf16.msra.mxu0 %v837
  %2168 = vmatmul.bf16.gmra.mxu0 %v1978
  %v2169 = vpop.f32.mrf.mxu0
  %v2170 = vadd.f32 %v2156, %v2169
  %v2171 = vpop.f32.mrf.mxu0
  %v2172 = vadd.f32 %v2158, %v2171
  %2173 = vdwg.mxu0
  %v2174 = vmax.f32 %v2170, 0.0
  %v2175 = vmax.f32 %v2172, 0.0
  %v2176 = vpack.c.bf16 %v2175, %v2174
  %s2177 = scalar_lea.vmem %s3, 192
  %v2178 = vld [vmem:[%s2177] sm:$0xf]
  %v2179 = vld [vmem:[%s2177 + $0x4] sm:$0xf]
  %v2180 = vld [vmem:[%s2177 + $0x8] sm:$0xf]
  %v2181 = vld [vmem:[%s2177 + $0xc] sm:$0xf]
  %v2182 = vld [vmem:[%s2177 + $0x10] sm:$0xf]
  %v2183 = vld [vmem:[%s2177 + $0x14] sm:$0xf]
  %v2184 = vld [vmem:[%s2177 + $0x18] sm:$0xf]
  %v2185 = vld [vmem:[%s2177 + $0x1c] sm:$0xf]
  %v2186 = vld [vmem:[%s2177 + $0x20] sm:$0xf]
  %v2187 = vld [vmem:[%s2177 + $0x24] sm:$0xf]
  %v2188 = vld [vmem:[%s2177 + $0x28] sm:$0xf]
  %v2189 = vld [vmem:[%s2177 + $0x2c] sm:$0xf]
  %v2190 = vld [vmem:[%s2177 + $0x30] sm:$0xf]
  %v2191 = vld [vmem:[%s2177 + $0x34] sm:$0xf]
  %v2192 = vld [vmem:[%s2177 + $0x38] sm:$0xf]
  %v2193 = vld [vmem:[%s2177 + $0x3c] sm:$0xf]
  %v2210 = vunpack.c.l.b16 %v2178
  %v2211 = vunpack.c.l.b16 %v2179
  %v2212 = vunpack.c.l.b16 %v2180
  %v2213 = vunpack.c.l.b16 %v2181
  %v2214 = vunpack.c.l.b16 %v2182
  %v2215 = vunpack.c.l.b16 %v2183
  %v2216 = vunpack.c.l.b16 %v2184
  %v2217 = vunpack.c.l.b16 %v2185
  %v2218 = vunpack.c.l.b16 %v2186
  %v2219 = vunpack.c.l.b16 %v2187
  %v2220 = vunpack.c.l.b16 %v2188
  %v2221 = vunpack.c.l.b16 %v2189
  %v2222 = vunpack.c.l.b16 %v2190
  %v2223 = vunpack.c.l.b16 %v2191
  %v2224 = vunpack.c.l.b16 %v2192
  %v2225 = vunpack.c.l.b16 %v2193
  %v2226 = vpack.c.b16 %v2211, %v2210
  %v2227 = vpack.c.b16 %v2213, %v2212
  %v2228 = vpack.c.b16 %v2215, %v2214
  %v2229 = vpack.c.b16 %v2217, %v2216
  %v2230 = vpack.c.b16 %v2219, %v2218
  %v2231 = vpack.c.b16 %v2221, %v2220
  %v2232 = vpack.c.b16 %v2223, %v2222
  %v2233 = vpack.c.b16 %v2225, %v2224
  %2242 = vmatpush.bf16.msra.mxu0 %v2233
  %2243 = vmatpush.bf16.msra.mxu0 %v2232
  %2244 = vmatpush.bf16.msra.mxu0 %v2231
  %2245 = vmatpush.bf16.msra.mxu0 %v2230
  %2246 = vmatpush.bf16.msra.mxu0 %v2229
  %2247 = vmatpush.bf16.msra.mxu0 %v2228
  %2248 = vmatpush.bf16.msra.mxu0 %v2227
  %2249 = vmatpush.bf16.msra.mxu0 %v2226
  %2250 = vmatmul.bf16.gmra.mxu0 %v2176
  %v2251 = vpop.f32.mrf.mxu0
  %v2252 = vadd.f32 0.0, %v2251
  %v2253 = vpop.f32.mrf.mxu0
  %v2254 = vadd.f32 0.0, %v2253
  %2255 = vdwg.mxu0
  %v2256 = vadd.f32 %v1909, %v2252
  %v2257 = vadd.f32 %v1910, %v2254
  %v2258 = vmax.f32 %v2256, 0.0
  %v2259 = vmax.f32 %v2257, 0.0
  %v2260 = vpack.c.bf16 %v2259, %v2258
  %v2261 = vld [vmem:[%s5] sm:$0xff]
  %v2262 = vld [vmem:[%s5 + $0x8] sm:$0xff]
  %v2263 = vld [vmem:[%s5 + $0x10] sm:$0xff]
  %v2264 = vld [vmem:[%s5 + $0x18] sm:$0xff]
  %v2265 = vld [vmem:[%s5 + $0x20] sm:$0xff]
  %v2266 = vld [vmem:[%s5 + $0x28] sm:$0xff]
  %v2267 = vld [vmem:[%s5 + $0x30] sm:$0xff]
  %v2268 = vld [vmem:[%s5 + $0x38] sm:$0xff]
  %v2269 = vld [vmem:[%s5 + $0x40] sm:$0xff]
  %v2270 = vld [vmem:[%s5 + $0x48] sm:$0xff]
  %v2271 = vld [vmem:[%s5 + $0x50] sm:$0xff]
  %v2272 = vld [vmem:[%s5 + $0x58] sm:$0xff]
  %v2273 = vld [vmem:[%s5 + $0x60] sm:$0xff]
  %v2274 = vld [vmem:[%s5 + $0x68] sm:$0xff]
  %v2275 = vld [vmem:[%s5 + $0x70] sm:$0xff]
  %v2276 = vld [vmem:[%s5 + $0x78] sm:$0xff]
  %v2277 = vld [vmem:[%s6] sm:$0x3]
  %v2279 = vperm.slane %v2277, 0
  %v2280 = vperm.slane %v2277, 1
  %v2299 = vunpack.c.l.b16 %v2261
  %v2300 = vunpack.c.h.b16 %v2261
  %v2301 = vunpack.c.l.b16 %v2262
  %v2302 = vunpack.c.h.b16 %v2262
  %v2303 = vunpack.c.l.b16 %v2263
  %v2304 = vunpack.c.h.b16 %v2263
  %v2305 = vunpack.c.l.b16 %v2264
  %v2306 = vunpack.c.h.b16 %v2264
  %v2307 = vunpack.c.l.b16 %v2265
  %v2308 = vunpack.c.h.b16 %v2265
  %v2309 = vunpack.c.l.b16 %v2266
  %v2310 = vunpack.c.h.b16 %v2266
  %v2311 = vunpack.c.l.b16 %v2267
  %v2312 = vunpack.c.h.b16 %v2267
  %v2313 = vunpack.c.l.b16 %v2268
  %v2314 = vunpack.c.h.b16 %v2268
  %v2315 = vunpack.c.l.b16 %v2269
  %v2316 = vunpack.c.h.b16 %v2269
  %v2317 = vunpack.c.l.b16 %v2270
  %v2318 = vunpack.c.h.b16 %v2270
  %v2319 = vunpack.c.l.b16 %v2271
  %v2320 = vunpack.c.h.b16 %v2271
  %v2321 = vunpack.c.l.b16 %v2272
  %v2322 = vunpack.c.h.b16 %v2272
  %v2323 = vunpack.c.l.b16 %v2273
  %v2324 = vunpack.c.h.b16 %v2273
  %v2325 = vunpack.c.l.b16 %v2274
  %v2326 = vunpack.c.h.b16 %v2274
  %v2327 = vunpack.c.l.b16 %v2275
  %v2328 = vunpack.c.h.b16 %v2275
  %v2329 = vunpack.c.l.b16 %v2276
  %v2330 = vunpack.c.h.b16 %v2276
  %v2331 = vpack.c.b16 %v2301, %v2299
  %v2332 = vpack.c.b16 %v2302, %v2300
  %v2333 = vpack.c.b16 %v2305, %v2303
  %v2334 = vpack.c.b16 %v2306, %v2304
  %v2335 = vpack.c.b16 %v2309, %v2307
  %v2336 = vpack.c.b16 %v2310, %v2308
  %v2337 = vpack.c.b16 %v2313, %v2311
  %v2338 = vpack.c.b16 %v2314, %v2312
  %v2339 = vpack.c.b16 %v2317, %v2315
  %v2340 = vpack.c.b16 %v2318, %v2316
  %v2341 = vpack.c.b16 %v2321, %v2319
  %v2342 = vpack.c.b16 %v2322, %v2320
  %v2343 = vpack.c.b16 %v2325, %v2323
  %v2344 = vpack.c.b16 %v2326, %v2324
  %v2345 = vpack.c.b16 %v2329, %v2327
  %v2346 = vpack.c.b16 %v2330, %v2328
  %2363 = vmatpush.bf16.msra.mxu0 %v2345
  %2364 = vmatpush.bf16.msra.mxu0 %v2343
  %2365 = vmatpush.bf16.msra.mxu0 %v2341
  %2366 = vmatpush.bf16.msra.mxu0 %v2339
  %2367 = vmatpush.bf16.msra.mxu0 %v2337
  %2368 = vmatpush.bf16.msra.mxu0 %v2335
  %2369 = vmatpush.bf16.msra.mxu0 %v2333
  %2370 = vmatpush.bf16.msra.mxu0 %v2331
  %2371 = vmatmul.bf16.gmra.mxu0 %v2260
  %v2372 = vpop.f32.mrf.mxu0
  %v2373 = vadd.f32 %v2279, %v2372
  %v2374 = vpop.f32.mrf.mxu0
  %v2375 = vadd.f32 %v2279, %v2374
  %2376 = vdwg.mxu0
  %2377 = vmatpush.bf16.msra.mxu0 %v2346
  %2378 = vmatpush.bf16.msra.mxu0 %v2344
  %2379 = vmatpush.bf16.msra.mxu0 %v2342
  %2380 = vmatpush.bf16.msra.mxu0 %v2340
  %2381 = vmatpush.bf16.msra.mxu0 %v2338
  %2382 = vmatpush.bf16.msra.mxu0 %v2336
  %2383 = vmatpush.bf16.msra.mxu0 %v2334
  %2384 = vmatpush.bf16.msra.mxu0 %v2332
  %2385 = vmatmul.bf16.gmra.mxu0 %v2260
  %v2386 = vpop.f32.mrf.mxu0
  %v2387 = vadd.f32 %v2280, %v2386
  %v2388 = vpop.f32.mrf.mxu0
  %v2389 = vadd.f32 %v2280, %v2388
  %2390 = vdwg.mxu0
  %v2391 = vmax.f32 %v2373, 0.0
  %v2392 = vmax.f32 %v2387, 0.0
  %v2393 = vmax.f32 %v2375, 0.0
  %v2394 = vmax.f32 %v2389, 0.0
  %v2395 = vpack.c.bf16 %v2393, %v2391
  %v2396 = vpack.c.bf16 %v2394, %v2392
  %v2397 = vld [vmem:[%s7] sm:$0xf]
  %v2398 = vld [vmem:[%s7 + $0x4] sm:$0xf]
  %v2399 = vld [vmem:[%s7 + $0x8] sm:$0xf]
  %v2400 = vld [vmem:[%s7 + $0xc] sm:$0xf]
  %v2401 = vld [vmem:[%s7 + $0x10] sm:$0xf]
  %v2402 = vld [vmem:[%s7 + $0x14] sm:$0xf]
  %v2403 = vld [vmem:[%s7 + $0x18] sm:$0xf]
  %v2404 = vld [vmem:[%s7 + $0x1c] sm:$0xf]
  %v2405 = vld [vmem:[%s7 + $0x20] sm:$0xf]
  %v2406 = vld [vmem:[%s7 + $0x24] sm:$0xf]
  %v2407 = vld [vmem:[%s7 + $0x28] sm:$0xf]
  %v2408 = vld [vmem:[%s7 + $0x2c] sm:$0xf]
  %v2409 = vld [vmem:[%s7 + $0x30] sm:$0xf]
  %v2410 = vld [vmem:[%s7 + $0x34] sm:$0xf]
  %v2411 = vld [vmem:[%s7 + $0x38] sm:$0xf]
  %v2412 = vld [vmem:[%s7 + $0x3c] sm:$0xf]
  %v2413 = vld [vmem:[%s7 + $0x40] sm:$0xf]
  %v2414 = vld [vmem:[%s7 + $0x44] sm:$0xf]
  %v2415 = vld [vmem:[%s7 + $0x48] sm:$0xf]
  %v2416 = vld [vmem:[%s7 + $0x4c] sm:$0xf]
  %v2417 = vld [vmem:[%s7 + $0x50] sm:$0xf]
  %v2418 = vld [vmem:[%s7 + $0x54] sm:$0xf]
  %v2419 = vld [vmem:[%s7 + $0x58] sm:$0xf]
  %v2420 = vld [vmem:[%s7 + $0x5c] sm:$0xf]
  %v2421 = vld [vmem:[%s7 + $0x60] sm:$0xf]
  %v2422 = vld [vmem:[%s7 + $0x64] sm:$0xf]
  %v2423 = vld [vmem:[%s7 + $0x68] sm:$0xf]
  %v2424 = vld [vmem:[%s7 + $0x6c] sm:$0xf]
  %v2425 = vld [vmem:[%s7 + $0x70] sm:$0xf]
  %v2426 = vld [vmem:[%s7 + $0x74] sm:$0xf]
  %v2427 = vld [vmem:[%s7 + $0x78] sm:$0xf]
  %v2428 = vld [vmem:[%s7 + $0x7c] sm:$0xf]
  %v2429 = vld [vmem:[%s8] sm:$0x1]
  %v2431 = vperm.slane %v2429, 0
  %v2465 = vunpack.c.l.b16 %v2397
  %v2466 = vunpack.c.l.b16 %v2398
  %v2467 = vunpack.c.l.b16 %v2399
  %v2468 = vunpack.c.l.b16 %v2400
  %v2469 = vunpack.c.l.b16 %v2401
  %v2470 = vunpack.c.l.b16 %v2402
  %v2471 = vunpack.c.l.b16 %v2403
  %v2472 = vunpack.c.l.b16 %v2404
  %v2473 = vunpack.c.l.b16 %v2405
  %v2474 = vunpack.c.l.b16 %v2406
  %v2475 = vunpack.c.l.b16 %v2407
  %v2476 = vunpack.c.l.b16 %v2408
  %v2477 = vunpack.c.l.b16 %v2409
  %v2478 = vunpack.c.l.b16 %v2410
  %v2479 = vunpack.c.l.b16 %v2411
  %v2480 = vunpack.c.l.b16 %v2412
  %v2481 = vunpack.c.l.b16 %v2413
  %v2482 = vunpack.c.l.b16 %v2414
  %v2483 = vunpack.c.l.b16 %v2415
  %v2484 = vunpack.c.l.b16 %v2416
  %v2485 = vunpack.c.l.b16 %v2417
  %v2486 = vunpack.c.l.b16 %v2418
  %v2487 = vunpack.c.l.b16 %v2419
  %v2488 = vunpack.c.l.b16 %v2420
  %v2489 = vunpack.c.l.b16 %v2421
  %v2490 = vunpack.c.l.b16 %v2422
  %v2491 = vunpack.c.l.b16 %v2423
  %v2492 = vunpack.c.l.b16 %v2424
  %v2493 = vunpack.c.l.b16 %v2425
  %v2494 = vunpack.c.l.b16 %v2426
  %v2495 = vunpack.c.l.b16 %v2427
  %v2496 = vunpack.c.l.b16 %v2428
  %v2497 = vpack.c.b16 %v2466, %v2465
  %v2498 = vpack.c.b16 %v2468, %v2467
  %v2499 = vpack.c.b16 %v2470, %v2469
  %v2500 = vpack.c.b16 %v2472, %v2471
  %v2501 = vpack.c.b16 %v2474, %v2473
  %v2502 = vpack.c.b16 %v2476, %v2475
  %v2503 = vpack.c.b16 %v2478, %v2477
  %v2504 = vpack.c.b16 %v2480, %v2479
  %v2505 = vpack.c.b16 %v2482, %v2481
  %v2506 = vpack.c.b16 %v2484, %v2483
  %v2507 = vpack.c.b16 %v2486, %v2485
  %v2508 = vpack.c.b16 %v2488, %v2487
  %v2509 = vpack.c.b16 %v2490, %v2489
  %v2510 = vpack.c.b16 %v2492, %v2491
  %v2511 = vpack.c.b16 %v2494, %v2493
  %v2512 = vpack.c.b16 %v2496, %v2495
  %2529 = vmatpush.bf16.msra.mxu0 %v2504
  %2530 = vmatpush.bf16.msra.mxu0 %v2503
  %2531 = vmatpush.bf16.msra.mxu0 %v2502
  %2532 = vmatpush.bf16.msra.mxu0 %v2501
  %2533 = vmatpush.bf16.msra.mxu0 %v2500
  %2534 = vmatpush.bf16.msra.mxu0 %v2499
  %2535 = vmatpush.bf16.msra.mxu0 %v2498
  %2536 = vmatpush.bf16.msra.mxu0 %v2497
  %2537 = vmatmul.bf16.gmra.mxu0 %v2395
  %v2538 = vpop.f32.mrf.mxu0
  %v2539 = vadd.f32 %v2431, %v2538
  %v2540 = vpop.f32.mrf.mxu0
  %v2541 = vadd.f32 %v2431, %v2540
  %2542 = vdwg.mxu0
  %2543 = vmatpush.bf16.msra.mxu0 %v2512
  %2544 = vmatpush.bf16.msra.mxu0 %v2511
  %2545 = vmatpush.bf16.msra.mxu0 %v2510
  %2546 = vmatpush.bf16.msra.mxu0 %v2509
  %2547 = vmatpush.bf16.msra.mxu0 %v2508
  %2548 = vmatpush.bf16.msra.mxu0 %v2507
  %2549 = vmatpush.bf16.msra.mxu0 %v2506
  %2550 = vmatpush.bf16.msra.mxu0 %v2505
  %2551 = vmatmul.bf16.gmra.mxu0 %v2396
  %v2552 = vpop.f32.mrf.mxu0
  %v2553 = vadd.f32 %v2539, %v2552
  %v2554 = vpop.f32.mrf.mxu0
  %v2555 = vadd.f32 %v2541, %v2554
  %2556 = vdwg.mxu0
  %2557 = vst [vmem:[%s9] sm:$0xff] %v2553
  %2558 = vst [vmem:[%s9 + $0x8] sm:$0xff] %v2555
  // Predicated region
  $region38: #{forward.5} parent=0 // pred_check
    _
  $region39: #{forward.5} parent=0 // pred_check_branch
    %2560 = sbr.rel (0) target = $region41
  $region40: #{forward.5} parent=0 // pred_region
    _
  $region41: #{forward.5} parent=0 // pred_fallthru
    _
  // Predicated region
  $region42: #{forward.5} parent=0 // pred_check
    _
  $region43: #{forward.5} parent=0 // pred_check_branch
    %2562 = sbr.rel (0) target = $region45
  $region44: #{forward.5} parent=0 // pred_region
    _
  $region45: #{forward.5} parent=0 // pred_fallthru
    _

</llo_original>
